<compile_context>
chip_gen: v7x
topology: tpu7x:2x2x1
jax: 0.10.0
libtpu: 0.0.40
codegen_flags: <defaults>
</compile_context>

<pallas_src>
import jax
import jax.numpy as jnp
from jax import lax
from jax.experimental import pallas as pl
from jax.experimental.pallas import tpu as pltpu

EPS = 1e-5


def _round_up(x, m):
    return (x + m - 1) // m * m


def _rows_per_chunk(H, W, target_rows=256):
    """Largest divisor of H such that one chunk is ~target_rows of (HW, Cp)."""
    limit = max(1, target_rows // max(W, 1))
    ch = 1
    for d in range(1, H + 1):
        if H % d == 0 and d <= limit:
            ch = d
    return ch


def _make_kernel(H, W, CH):
    """Build the fused conv + InstanceNorm + ReLU kernel for a given shape."""
    n_chunks = H // CH
    CHW = CH * W
    HW = H * W
    inv_hw = 1.0 / float(HW)

    def kernel(xp_ref, w_ref, o_ref):
        # xp_ref: (H+2, W+2, C_in) bf16 reflect-padded sample (VMEM resident)
        # w_ref : (9, C_in, Cp)    bf16, tap k = dy*3 + dx
        # o_ref : (H*W, Cp)        bf16 output block (conv, then normalized in place)
        C_in = xp_ref.shape[-1]
        Cp = o_ref.shape[-1]

        def conv_chunk(c, carry):
            s, ss = carry
            r0 = c * CH                          # first output image row of chunk
            acc = None                           # f32 value accumulator (no VMEM RMW)
            for dy in range(3):
                slab = xp_ref[pl.ds(r0 + dy, CH), :, :]      # (CH, W+2, C_in)
                for dx in range(3):
                    x_win = slab[:, dx:dx + W, :].reshape(CHW, C_in)
                    p = jnp.dot(x_win, w_ref[dy * 3 + dx],
                                preferred_element_type=jnp.float32)
                    acc = p if acc is None else acc + p
            # Per-channel partial stats in f32, taken before the bf16 cast.
            s = s + jnp.sum(acc, axis=0, keepdims=True)
            ss = ss + jnp.sum(acc * acc, axis=0, keepdims=True)
            row0 = pl.multiple_of(c * CHW, CHW)
            o_ref[pl.ds(row0, CHW), :] = acc.astype(o_ref.dtype)
            return s, ss

        zeros = jnp.zeros((1, Cp), jnp.float32)
        s, ss = lax.fori_loop(0, n_chunks, conv_chunk, (zeros, zeros))

        # InstanceNorm2d (affine=False): biased variance, f32 math.  The conv
        # bias is omitted on purpose -- it is cancelled by the mean subtraction.
        mean = s * inv_hw
        var = jnp.maximum(ss * inv_hw - mean * mean, 0.0)
        scale = lax.rsqrt(var + EPS)
        shift = mean * scale                     # (y - mean)*scale == y*scale - shift

        def norm_chunk(c, carry):
            row0 = pl.multiple_of(c * CHW, CHW)
            y = o_ref[pl.ds(row0, CHW), :].astype(jnp.float32)
            y = y * scale - shift
            o_ref[pl.ds(row0, CHW), :] = jnp.maximum(y, 0.0).astype(o_ref.dtype)
            return carry

        lax.fori_loop(0, n_chunks, norm_chunk, 0)

    return kernel


def conv_block_nhwc(x_nhwc, weight, bias=None):
    """NHWC ConvBlock: reflect-pad 3x3 conv -> InstanceNorm2d -> ReLU.

    x_nhwc: (N, H, W, C_in); weight: (C_out, C_in, 3, 3) OIHW.
    `bias` is accepted for interface parity but never computed: a conv bias
    is exactly cancelled by InstanceNorm2d(affine=False)'s mean subtraction.
    Returns (N, H, W, C_out) bfloat16.
    """
    del bias  # mathematically cancelled by the instance norm
    N, H, W, C_in = x_nhwc.shape
    C_out = weight.shape[0]
    assert weight.shape == (C_out, C_in, 3, 3)
    Hp, Wp = H + 2, W + 2
    HW = H * W
    Cp = _round_up(C_out, 128)       # lane-dense output slab / full MXU N tile

    # Reflect pad (padding_mode='reflect', padding=1); bf16 MXU operands.
    xp = jnp.pad(x_nhwc, ((0, 0), (1, 1), (1, 1), (0, 0)),
                 mode="reflect").astype(jnp.bfloat16)

    # (C_out, C_in, 3, 3) -> (3, 3, C_in, C_out) -> (9, C_in, Cp) bf16.
    w9 = jnp.transpose(weight, (2, 3, 1, 0)).reshape(9, C_in, C_out)
    w9 = jnp.pad(w9, ((0, 0), (0, 0), (0, Cp - C_out))).astype(jnp.bfloat16)

    CH = _rows_per_chunk(H, W)

    # Per-generation scoped-VMEM limit: ~7/8 of physical VMEM, but no more
    # than the resident blocks actually need (plus headroom).
    try:
        vmem_cap = int(pltpu.get_tpu_info().vmem_capacity_bytes)
    except Exception:
        vmem_cap = 64 * 1024 * 1024
    block_bytes = (2 * Hp * Wp * C_in * 2       # input sample bf16, double-buffered
                   + 2 * 9 * C_in * Cp * 2      # weights bf16 (grid-invariant)
                   + 2 * HW * Cp * 2            # output block bf16, double-buffered
                   + 2 * CH * W * Cp * 4)       # chunk accumulator / spill headroom
    vmem_limit = min((vmem_cap * 7) // 8,
                     max(32 * 1024 * 1024, block_bytes + (4 << 20)))

    out = pl.pallas_call(
        _make_kernel(H, W, CH),
        out_shape=jax.ShapeDtypeStruct((N, HW, Cp), jnp.bfloat16),
        grid_spec=pltpu.PrefetchScalarGridSpec(
            num_scalar_prefetch=0,
            grid=(N,),
            in_specs=[
                pl.BlockSpec((None, Hp, Wp, C_in), lambda n: (n, 0, 0, 0)),
                pl.BlockSpec((9, C_in, Cp), lambda n: (0, 0, 0)),
            ],
            out_specs=pl.BlockSpec((None, HW, Cp), lambda n: (n, 0, 0)),
        ),
        compiler_params=pltpu.CompilerParams(
            dimension_semantics=("parallel",),
            vmem_limit_bytes=int(vmem_limit)),
    )(xp, w9)

    # Drop the zero-padded channels.  In a full NHWC network, keep the padded
    # slab flowing into the next layer (zero-pad its C_in weight rows) so this
    # HBM re-copy disappears.
    return out.reshape(N, H, W, Cp)[..., :C_out]


def conv_block(x, weight, bias=None):
    """PyTorch-layout wrapper: x (N, C_in, H, W) -> (N, C_out, H, W) bf16.

    The NCHW<->NHWC transposes exist only for interface parity; a real conv
    pipeline should stay NHWC end-to-end and call conv_block_nhwc directly.
    """
    y = conv_block_nhwc(jnp.transpose(x, (0, 2, 3, 1)), weight, bias)
    return jnp.transpose(y, (0, 3, 1, 2))


def reference(x, weight, bias):
    """Pure-JAX f32 reference matching the PyTorch module (NCHW), incl. bias."""
    xp = jnp.pad(x, ((0, 0), (0, 0), (1, 1), (1, 1)), mode="reflect")
    y = lax.conv_general_dilated(
        xp, weight, window_strides=(1, 1), padding="VALID",
        dimension_numbers=("NCHW", "OIHW", "NCHW"))
    y = y + bias.reshape(1, -1, 1, 1)
    mean = y.mean(axis=(2, 3), keepdims=True)
    var = ((y - mean) ** 2).mean(axis=(2, 3), keepdims=True)
    y = (y - mean) * lax.rsqrt(var + EPS)
    return jnp.maximum(y, 0.0)


if __name__ == "__main__":
    key = jax.random.PRNGKey(0)
    k_x, k_w, k_b = jax.random.split(key, 3)

    N, C_in, C_out, H, W = 2, 4, 8, 16, 16
    x = jax.random.normal(k_x, (N, C_in, H, W), dtype=jnp.float32)
    fan_in = C_in * 3 * 3
    weight = jax.random.normal(k_w, (C_out, C_in, 3, 3), jnp.float32) / jnp.sqrt(fan_in)
    bias = jax.random.normal(k_b, (C_out,), jnp.float32) * 0.1

    y = conv_block(x, weight, bias)
    jax.block_until_ready(y)
    assert y.shape == (N, C_out, H, W)

    # Reference (with bias!) on bf16-rounded operands: the kernel feeds bf16 to
    # the MXU and stores bf16, with f32 accumulation and f32 norm math; the
    # conv bias is cancelled by InstanceNorm, which this comparison verifies.
    x_bf = x.astype(jnp.bfloat16).astype(jnp.float32)
    w_bf = weight.astype(jnp.bfloat16).astype(jnp.float32)
    y_ref = reference(x_bf, w_bf, bias)

    y32 = y.astype(jnp.float32)
    max_err = float(jnp.max(jnp.abs(y32 - y_ref)))
    assert jnp.allclose(y32, y_ref, atol=3e-2, rtol=3e-2), max_err

    print("KERNEL_OK")
</pallas_src>

<mosaic_0001>
module attributes {stable_mosaic.version = 11 : i64} {
  func.func @kernel(%arg0: i32, %arg1: memref<1x18x18x4xbf16, #tpu.memory_space<vmem>>, %arg2: memref<9x4x128xbf16, #tpu.memory_space<vmem>>, %arg3: memref<1x256x128xbf16, #tpu.memory_space<vmem>>) attributes {dimension_semantics = [#tpu.dimension_semantics<parallel>], iteration_bounds = array<i64: 2>, scalar_prefetch = 0 : i64, scratch_operands = 0 : i64, tpu.core_type = #tpu.core_type<tc>, window_params = [{transform_indices = @transform_0, window_bounds = array<i64: 1, 18, 18, 4>}, {pipeline_mode = #tpu.pipeline_mode<synchronous>, transform_indices = @transform_1, window_bounds = array<i64: 9, 4, 128>}, {transform_indices = @transform_2, window_bounds = array<i64: 1, 256, 128>}]} {
    %cst = arith.constant 0.000000e+00 : f32
    %0 = vector.broadcast %cst : f32 to vector<1x128xf32>
    %c0_i32 = arith.constant 0 : i32
    %c16_i32 = arith.constant 16 : i32
    %1 = arith.muli %c0_i32, %c16_i32 : i32
    %c0_i32_0 = arith.constant 0 : i32
    %2 = arith.addi %1, %c0_i32_0 : i32
    %c0 = arith.constant 0 : index
    %3 = arith.index_cast %2 : i32 to index
    %c0_1 = arith.constant 0 : index
    %c0_2 = arith.constant 0 : index
    %4 = vector.load %arg1[%c0, %3, %c0_1, %c0_2] : memref<1x18x18x4xbf16, #tpu.memory_space<vmem>>, vector<1x16x18x4xbf16>
    %5 = vector.shape_cast %4 : vector<1x16x18x4xbf16> to vector<16x18x4xbf16>
    %6 = vector.extract_strided_slice %5 {offsets = [0, 0, 0], sizes = [16, 16, 4], strides = [1, 1, 1]} : vector<16x18x4xbf16> to vector<16x16x4xbf16>
    %7 = vector.shape_cast %6 : vector<16x16x4xbf16> to vector<256x4xbf16>
    %c0_3 = arith.constant 0 : index
    %c0_4 = arith.constant 0 : index
    %c0_5 = arith.constant 0 : index
    %8 = vector.load %arg2[%c0_3, %c0_4, %c0_5] : memref<9x4x128xbf16, #tpu.memory_space<vmem>>, vector<1x4x128xbf16>
    %9 = vector.shape_cast %8 : vector<1x4x128xbf16> to vector<4x128xbf16>
    %cst_6 = arith.constant dense<0.000000e+00> : vector<256x128xf32>
    %10 = tpu.matmul %7, %9, %cst_6 {dimension_numbers = #tpu.dot_dimension_numbers<[1], [0], [0], [1], [0, 0, 1, 1], [], []>} : vector<256x4xbf16>, vector<4x128xbf16>, vector<256x128xf32> -> vector<256x128xf32>
    %11 = vector.extract_strided_slice %5 {offsets = [0, 1, 0], sizes = [16, 16, 4], strides = [1, 1, 1]} : vector<16x18x4xbf16> to vector<16x16x4xbf16>
    %12 = vector.shape_cast %11 : vector<16x16x4xbf16> to vector<256x4xbf16>
    %c1 = arith.constant 1 : index
    %c0_7 = arith.constant 0 : index
    %c0_8 = arith.constant 0 : index
    %13 = vector.load %arg2[%c1, %c0_7, %c0_8] : memref<9x4x128xbf16, #tpu.memory_space<vmem>>, vector<1x4x128xbf16>
    %14 = vector.shape_cast %13 : vector<1x4x128xbf16> to vector<4x128xbf16>
    %cst_9 = arith.constant dense<0.000000e+00> : vector<256x128xf32>
    %15 = tpu.matmul %12, %14, %cst_9 {dimension_numbers = #tpu.dot_dimension_numbers<[1], [0], [0], [1], [0, 0, 1, 1], [], []>} : vector<256x4xbf16>, vector<4x128xbf16>, vector<256x128xf32> -> vector<256x128xf32>
    %16 = arith.addf %10, %15 : vector<256x128xf32>
    %17 = vector.extract_strided_slice %5 {offsets = [0, 2, 0], sizes = [16, 16, 4], strides = [1, 1, 1]} : vector<16x18x4xbf16> to vector<16x16x4xbf16>
    %18 = vector.shape_cast %17 : vector<16x16x4xbf16> to vector<256x4xbf16>
    %c2 = arith.constant 2 : index
    %c0_10 = arith.constant 0 : index
    %c0_11 = arith.constant 0 : index
    %19 = vector.load %arg2[%c2, %c0_10, %c0_11] : memref<9x4x128xbf16, #tpu.memory_space<vmem>>, vector<1x4x128xbf16>
    %20 = vector.shape_cast %19 : vector<1x4x128xbf16> to vector<4x128xbf16>
    %cst_12 = arith.constant dense<0.000000e+00> : vector<256x128xf32>
    %21 = tpu.matmul %18, %20, %cst_12 {dimension_numbers = #tpu.dot_dimension_numbers<[1], [0], [0], [1], [0, 0, 1, 1], [], []>} : vector<256x4xbf16>, vector<4x128xbf16>, vector<256x128xf32> -> vector<256x128xf32>
    %22 = arith.addf %16, %21 : vector<256x128xf32>
    %c1_i32 = arith.constant 1 : i32
    %23 = arith.addi %1, %c1_i32 : i32
    %c0_13 = arith.constant 0 : index
    %24 = arith.index_cast %23 : i32 to index
    %c0_14 = arith.constant 0 : index
    %c0_15 = arith.constant 0 : index
    %25 = vector.load %arg1[%c0_13, %24, %c0_14, %c0_15] : memref<1x18x18x4xbf16, #tpu.memory_space<vmem>>, vector<1x16x18x4xbf16>
    %26 = vector.shape_cast %25 : vector<1x16x18x4xbf16> to vector<16x18x4xbf16>
    %27 = vector.extract_strided_slice %26 {offsets = [0, 0, 0], sizes = [16, 16, 4], strides = [1, 1, 1]} : vector<16x18x4xbf16> to vector<16x16x4xbf16>
    %28 = vector.shape_cast %27 : vector<16x16x4xbf16> to vector<256x4xbf16>
    %c3 = arith.constant 3 : index
    %c0_16 = arith.constant 0 : index
    %c0_17 = arith.constant 0 : index
    %29 = vector.load %arg2[%c3, %c0_16, %c0_17] : memref<9x4x128xbf16, #tpu.memory_space<vmem>>, vector<1x4x128xbf16>
    %30 = vector.shape_cast %29 : vector<1x4x128xbf16> to vector<4x128xbf16>
    %cst_18 = arith.constant dense<0.000000e+00> : vector<256x128xf32>
    %31 = tpu.matmul %28, %30, %cst_18 {dimension_numbers = #tpu.dot_dimension_numbers<[1], [0], [0], [1], [0, 0, 1, 1], [], []>} : vector<256x4xbf16>, vector<4x128xbf16>, vector<256x128xf32> -> vector<256x128xf32>
    %32 = arith.addf %22, %31 : vector<256x128xf32>
    %33 = vector.extract_strided_slice %26 {offsets = [0, 1, 0], sizes = [16, 16, 4], strides = [1, 1, 1]} : vector<16x18x4xbf16> to vector<16x16x4xbf16>
    %34 = vector.shape_cast %33 : vector<16x16x4xbf16> to vector<256x4xbf16>
    %c4 = arith.constant 4 : index
    %c0_19 = arith.constant 0 : index
    %c0_20 = arith.constant 0 : index
    %35 = vector.load %arg2[%c4, %c0_19, %c0_20] : memref<9x4x128xbf16, #tpu.memory_space<vmem>>, vector<1x4x128xbf16>
    %36 = vector.shape_cast %35 : vector<1x4x128xbf16> to vector<4x128xbf16>
    %cst_21 = arith.constant dense<0.000000e+00> : vector<256x128xf32>
    %37 = tpu.matmul %34, %36, %cst_21 {dimension_numbers = #tpu.dot_dimension_numbers<[1], [0], [0], [1], [0, 0, 1, 1], [], []>} : vector<256x4xbf16>, vector<4x128xbf16>, vector<256x128xf32> -> vector<256x128xf32>
    %38 = arith.addf %32, %37 : vector<256x128xf32>
    %39 = vector.extract_strided_slice %26 {offsets = [0, 2, 0], sizes = [16, 16, 4], strides = [1, 1, 1]} : vector<16x18x4xbf16> to vector<16x16x4xbf16>
    %40 = vector.shape_cast %39 : vector<16x16x4xbf16> to vector<256x4xbf16>
    %c5 = arith.constant 5 : index
    %c0_22 = arith.constant 0 : index
    %c0_23 = arith.constant 0 : index
    %41 = vector.load %arg2[%c5, %c0_22, %c0_23] : memref<9x4x128xbf16, #tpu.memory_space<vmem>>, vector<1x4x128xbf16>
    %42 = vector.shape_cast %41 : vector<1x4x128xbf16> to vector<4x128xbf16>
    %cst_24 = arith.constant dense<0.000000e+00> : vector<256x128xf32>
    %43 = tpu.matmul %40, %42, %cst_24 {dimension_numbers = #tpu.dot_dimension_numbers<[1], [0], [0], [1], [0, 0, 1, 1], [], []>} : vector<256x4xbf16>, vector<4x128xbf16>, vector<256x128xf32> -> vector<256x128xf32>
    %44 = arith.addf %38, %43 : vector<256x128xf32>
    %c2_i32 = arith.constant 2 : i32
    %45 = arith.addi %1, %c2_i32 : i32
    %c0_25 = arith.constant 0 : index
    %46 = arith.index_cast %45 : i32 to index
    %c0_26 = arith.constant 0 : index
    %c0_27 = arith.constant 0 : index
    %47 = vector.load %arg1[%c0_25, %46, %c0_26, %c0_27] : memref<1x18x18x4xbf16, #tpu.memory_space<vmem>>, vector<1x16x18x4xbf16>
    %48 = vector.shape_cast %47 : vector<1x16x18x4xbf16> to vector<16x18x4xbf16>
    %49 = vector.extract_strided_slice %48 {offsets = [0, 0, 0], sizes = [16, 16, 4], strides = [1, 1, 1]} : vector<16x18x4xbf16> to vector<16x16x4xbf16>
    %50 = vector.shape_cast %49 : vector<16x16x4xbf16> to vector<256x4xbf16>
    %c6 = arith.constant 6 : index
    %c0_28 = arith.constant 0 : index
    %c0_29 = arith.constant 0 : index
    %51 = vector.load %arg2[%c6, %c0_28, %c0_29] : memref<9x4x128xbf16, #tpu.memory_space<vmem>>, vector<1x4x128xbf16>
    %52 = vector.shape_cast %51 : vector<1x4x128xbf16> to vector<4x128xbf16>
    %cst_30 = arith.constant dense<0.000000e+00> : vector<256x128xf32>
    %53 = tpu.matmul %50, %52, %cst_30 {dimension_numbers = #tpu.dot_dimension_numbers<[1], [0], [0], [1], [0, 0, 1, 1], [], []>} : vector<256x4xbf16>, vector<4x128xbf16>, vector<256x128xf32> -> vector<256x128xf32>
    %54 = arith.addf %44, %53 : vector<256x128xf32>
    %55 = vector.extract_strided_slice %48 {offsets = [0, 1, 0], sizes = [16, 16, 4], strides = [1, 1, 1]} : vector<16x18x4xbf16> to vector<16x16x4xbf16>
    %56 = vector.shape_cast %55 : vector<16x16x4xbf16> to vector<256x4xbf16>
    %c7 = arith.constant 7 : index
    %c0_31 = arith.constant 0 : index
    %c0_32 = arith.constant 0 : index
    %57 = vector.load %arg2[%c7, %c0_31, %c0_32] : memref<9x4x128xbf16, #tpu.memory_space<vmem>>, vector<1x4x128xbf16>
    %58 = vector.shape_cast %57 : vector<1x4x128xbf16> to vector<4x128xbf16>
    %cst_33 = arith.constant dense<0.000000e+00> : vector<256x128xf32>
    %59 = tpu.matmul %56, %58, %cst_33 {dimension_numbers = #tpu.dot_dimension_numbers<[1], [0], [0], [1], [0, 0, 1, 1], [], []>} : vector<256x4xbf16>, vector<4x128xbf16>, vector<256x128xf32> -> vector<256x128xf32>
    %60 = arith.addf %54, %59 : vector<256x128xf32>
    %61 = vector.extract_strided_slice %48 {offsets = [0, 2, 0], sizes = [16, 16, 4], strides = [1, 1, 1]} : vector<16x18x4xbf16> to vector<16x16x4xbf16>
    %62 = vector.shape_cast %61 : vector<16x16x4xbf16> to vector<256x4xbf16>
    %c8 = arith.constant 8 : index
    %c0_34 = arith.constant 0 : index
    %c0_35 = arith.constant 0 : index
    %63 = vector.load %arg2[%c8, %c0_34, %c0_35] : memref<9x4x128xbf16, #tpu.memory_space<vmem>>, vector<1x4x128xbf16>
    %64 = vector.shape_cast %63 : vector<1x4x128xbf16> to vector<4x128xbf16>
    %cst_36 = arith.constant dense<0.000000e+00> : vector<256x128xf32>
    %65 = tpu.matmul %62, %64, %cst_36 {dimension_numbers = #tpu.dot_dimension_numbers<[1], [0], [0], [1], [0, 0, 1, 1], [], []>} : vector<256x4xbf16>, vector<4x128xbf16>, vector<256x128xf32> -> vector<256x128xf32>
    %66 = arith.addf %60, %65 : vector<256x128xf32>
    %cst_37 = arith.constant dense<0.000000e+00> : vector<128xf32>
    %67 = vector.multi_reduction <add>, %66, %cst_37 [0] : vector<256x128xf32> to vector<128xf32>
    %68 = vector.shape_cast %67 : vector<128xf32> to vector<1x128xf32>
    %69 = arith.addf %0, %68 : vector<1x128xf32>
    %70 = arith.mulf %66, %66 : vector<256x128xf32>
    %cst_38 = arith.constant dense<0.000000e+00> : vector<128xf32>
    %71 = vector.multi_reduction <add>, %70, %cst_38 [0] : vector<256x128xf32> to vector<128xf32>
    %72 = vector.shape_cast %71 : vector<128xf32> to vector<1x128xf32>
    %73 = arith.addf %0, %72 : vector<1x128xf32>
    %c256_i32 = arith.constant 256 : i32
    %74 = arith.muli %c0_i32, %c256_i32 : i32
    %75 = tpu.assume_multiple %74, 256 : i32
    %76 = arith.truncf %66 : vector<256x128xf32> to vector<256x128xbf16>
    %c0_39 = arith.constant 0 : index
    %77 = arith.index_cast %75 : i32 to index
    %c0_40 = arith.constant 0 : index
    %78 = vector.load %arg3[%c0_39, %77, %c0_40] : memref<1x256x128xbf16, #tpu.memory_space<vmem>>, vector<1x256x128xbf16>
    %79 = vector.shape_cast %78 : vector<1x256x128xbf16> to vector<256x128xbf16>
    %80 = vector.shape_cast %76 : vector<256x128xbf16> to vector<1x256x128xbf16>
    tpu.vector_store %arg3[%c0_39, %77, %c0_40], %80 {strides = array<i32>} : memref<1x256x128xbf16, #tpu.memory_space<vmem>>, vector<1x256x128xbf16>,
    %c1_i32_41 = arith.constant 1 : i32
    %cst_42 = arith.constant 3.906250e-03 : f32
    %81 = vector.broadcast %cst_42 : f32 to vector<1x128xf32>
    %82 = arith.mulf %69, %81 : vector<1x128xf32>
    %cst_43 = arith.constant 3.906250e-03 : f32
    %83 = vector.broadcast %cst_43 : f32 to vector<1x128xf32>
    %84 = arith.mulf %73, %83 : vector<1x128xf32>
    %85 = arith.mulf %82, %82 : vector<1x128xf32>
    %86 = arith.subf %84, %85 : vector<1x128xf32>
    %cst_44 = arith.constant 0.000000e+00 : f32
    %87 = vector.broadcast %cst_44 : f32 to vector<1x128xf32>
    %88 = arith.maximumf %86, %87 : vector<1x128xf32>
    %cst_45 = arith.constant 9.99999974E-6 : f32
    %89 = vector.broadcast %cst_45 : f32 to vector<1x128xf32>
    %90 = arith.addf %88, %89 : vector<1x128xf32>
    %91 = math.rsqrt %90 : vector<1x128xf32>
    %92 = arith.mulf %82, %91 : vector<1x128xf32>
    %c0_i32_46 = arith.constant 0 : i32
    %c256_i32_47 = arith.constant 256 : i32
    %93 = arith.muli %c0_i32_46, %c256_i32_47 : i32
    %94 = tpu.assume_multiple %93, 256 : i32
    %c0_48 = arith.constant 0 : index
    %95 = arith.index_cast %94 : i32 to index
    %c0_49 = arith.constant 0 : index
    %96 = vector.load %arg3[%c0_48, %95, %c0_49] : memref<1x256x128xbf16, #tpu.memory_space<vmem>>, vector<1x256x128xbf16>
    %97 = vector.shape_cast %96 : vector<1x256x128xbf16> to vector<256x128xbf16>
    %98 = arith.extf %97 : vector<256x128xbf16> to vector<256x128xf32>
    %99 = vector.broadcast %91 : vector<1x128xf32> to vector<256x128xf32>
    %100 = arith.mulf %98, %99 : vector<256x128xf32>
    %101 = vector.broadcast %92 : vector<1x128xf32> to vector<256x128xf32>
    %102 = arith.subf %100, %101 : vector<256x128xf32>
    %cst_50 = arith.constant 0.000000e+00 : f32
    %103 = vector.broadcast %cst_50 : f32 to vector<256x128xf32>
    %104 = arith.maximumf %102, %103 : vector<256x128xf32>
    %105 = arith.truncf %104 : vector<256x128xf32> to vector<256x128xbf16>
    %c0_51 = arith.constant 0 : index
    %106 = arith.index_cast %94 : i32 to index
    %c0_52 = arith.constant 0 : index
    %107 = vector.load %arg3[%c0_51, %106, %c0_52] : memref<1x256x128xbf16, #tpu.memory_space<vmem>>, vector<1x256x128xbf16>
    %108 = vector.shape_cast %107 : vector<1x256x128xbf16> to vector<256x128xbf16>
    %109 = vector.shape_cast %105 : vector<256x128xbf16> to vector<1x256x128xbf16>
    tpu.vector_store %arg3[%c0_51, %106, %c0_52], %109 {strides = array<i32>} : memref<1x256x128xbf16, #tpu.memory_space<vmem>>, vector<1x256x128xbf16>,
    %c1_i32_53 = arith.constant 1 : i32
    return
  }
  func.func @transform_0(%arg0: i32) -> (i32, i32, i32, i32) {
    %c0_i32 = arith.constant 0 : i32
    %c0_i32_0 = arith.constant 0 : i32
    %c0_i32_1 = arith.constant 0 : i32
    %c0_i32_2 = arith.constant 0 : i32
    return %arg0, %c0_i32, %c0_i32_0, %c0_i32_1 : i32, i32, i32, i32
  }
  func.func @transform_1(%arg0: i32) -> (i32, i32, i32) {
    %c0_i32 = arith.constant 0 : i32
    %c0_i32_0 = arith.constant 0 : i32
    %c0_i32_1 = arith.constant 0 : i32
    %c0_i32_2 = arith.constant 0 : i32
    return %c0_i32, %c0_i32_0, %c0_i32_1 : i32, i32, i32
  }
  func.func @transform_2(%arg0: i32) -> (i32, i32, i32) {
    %c0_i32 = arith.constant 0 : i32
    %c0_i32_0 = arith.constant 0 : i32
    %c0_i32_1 = arith.constant 0 : i32
    return %arg0, %c0_i32, %c0_i32_0 : i32, i32, i32
  }
}

</mosaic_0001>

<llo_original>
// kernel: tpu_custom_call.1
$region0: #{tpu_custom_call.1}
  #allocation0 [shape = 'u32[]', space=smem, size = 0x4, offset = 0x4, fixed_abs, tag = 'smem constant byte address 0x4 - core index']
  #allocation1 [shape = 'u32[144,128]{1,0:T(1,128)}', space=vmem, size = 0x12000, scoped, tag = 'internal scratch']
  %s0 = inlined_call_operand.vmem [shape: bf16[2,18,18,4], index: 0, kind: input, shape index: {}]
  %s1 = inlined_call_operand.vmem [shape: bf16[9,4,128], index: 1, kind: input, shape index: {}]
  %s2 = inlined_call_operand.hbm [shape: bf16[2,256,128], index: 2, kind: output, shape index: {}]
  %s3 = sld [smem:[#allocation0]]
  $region41: #{tpu_custom_call.1} parent=0
    _
  %s5 = ssub.s32 1, %s3
  %s6 = scalar_select 0, %s5, %s3
  $region1: #{tpu_custom_call.1} parent=0
    #allocation2 [shape = 'u8[131072]{0}', space=vmem, size = 0x20000, scoped, tag = 'output window, operand 0']
    #allocation3 [shape = 's32[2]{0}', space=sflag, size = 0x8, scoped, tag = 'scoped memory for tpu_custom_call.1']
    %7 = vsyncpa [#allocation3], 0
    %s8 = scalar_lea.sflag [#allocation3], 1
    %9 = vsyncpa %s8, 0
    loop: start=0, step=1, limit=4
    $region2: #{tpu_custom_call.1} parent=1 // loop_pre_header
      _
    $region3: #{tpu_custom_call.1} parent=1 // loop_header
      %s11 = sphi 0, %s15
      %p12 = scmp.ge.s32.totalorder %s11, 4
      %s21 = sphi 0, %s23
      %s24 = sphi 0, %s21
      %s25 = sphi 0, %s24
      %s41 = sphi 0, %s25
      %s45 = sphi 0, %s45
      %s47 = sphi 0, %s45
      %s48 = sphi 0, %s47
      %s62 = sphi 0, %s48
      %s68 = sphi 0, %s70
      %s71 = sphi 0, %s68
      %s72 = sphi 0, %s71
      %s88 = sphi 0, %s72
    $region4: #{tpu_custom_call.1} parent=1 // loop_header_branch
      %14 = sbr.rel (%p12) target = $region8
    $region5: #{tpu_custom_call.1} parent=1 // loop_body
      %s16 = ssub.s32 %s11, 1
      %s17 = ssub.s32 %s11, 2
      %s18 = sadd.s32 %s11, 1
      %s19 = ssub.s32 %s11, %s18
      %p20 = scmp.eq.s32.totalorder %s19, 0
      %s22 = sadd.s32 %s21, 1
      %s23 = scalar_select %p20, %s21, %s22
      %p26 = pneg %p20
      %p27 = scmp.eq.s32.totalorder %s11, 1
      %p28 = por %p26, %p27
      %p29 = scmp.ne.s32.totalorder %s21, %s24
      %p30 = scmp.eq.s32.totalorder %s11, 0
      %p31 = por %p29, %p30
      %p32 = scmp.ne.s32.totalorder %s21, %s24
      %p33 = scmp.eq.s32.totalorder %s16, 1
      %p34 = por %p32, %p33
      %p35 = scmp.ne.s32.totalorder %s24, %s25
      %p36 = scmp.eq.s32.totalorder %s16, 0
      %p37 = por %p35, %p36
      %p38 = scmp.ne.s32.totalorder %s24, %s25
      %p39 = scmp.eq.s32.totalorder %s17, 1
      %p40 = por %p38, %p39
      %p42 = scmp.ne.s32.totalorder %s25, %s41
      %p43 = scmp.eq.s32.totalorder %s17, 0
      %p44 = por %p42, %p43
      %s46 = sadd.s32 %s45, 1
      %p49 = scmp.eq.s32.totalorder %s11, 1
      %p50 = scmp.ne.s32.totalorder %s45, %s47
      %p51 = scmp.eq.s32.totalorder %s11, 0
      %p52 = por %p50, %p51
      %p53 = scmp.ne.s32.totalorder %s45, %s47
      %p54 = scmp.eq.s32.totalorder %s16, 1
      %p55 = por %p53, %p54
      %p56 = scmp.ne.s32.totalorder %s47, %s48
      %p57 = scmp.eq.s32.totalorder %s16, 0
      %p58 = por %p56, %p57
      %p59 = scmp.ne.s32.totalorder %s47, %s48
      %p60 = scmp.eq.s32.totalorder %s17, 1
      %p61 = por %p59, %p60
      %p63 = scmp.ne.s32.totalorder %s48, %s62
      %p64 = scmp.eq.s32.totalorder %s17, 0
      %p65 = por %p63, %p64
      %s66 = ssub.s32 %s11, %s18
      %p67 = scmp.eq.s32.totalorder %s66, 0
      %s69 = sadd.s32 %s68, 1
      %s70 = scalar_select %p67, %s68, %s69
      %p73 = pneg %p67
      %p74 = scmp.eq.s32.totalorder %s11, 1
      %p75 = por %p73, %p74
      %p76 = scmp.ne.s32.totalorder %s68, %s71
      %p77 = scmp.eq.s32.totalorder %s11, 0
      %p78 = por %p76, %p77
      %p79 = scmp.ne.s32.totalorder %s68, %s71
      %p80 = scmp.eq.s32.totalorder %s16, 1
      %p81 = por %p79, %p80
      %p82 = scmp.ne.s32.totalorder %s71, %s72
      %p83 = scmp.eq.s32.totalorder %s16, 0
      %p84 = por %p82, %p83
      %p85 = scmp.ne.s32.totalorder %s71, %s72
      %p86 = scmp.eq.s32.totalorder %s17, 1
      %p87 = por %p85, %p86
      %p89 = scmp.ne.s32.totalorder %s72, %s88
      %p90 = scmp.eq.s32.totalorder %s17, 0
      %p91 = por %p89, %p90
      %p92 = scmp.le.s32.totalorder 1, %s11
      %p93 = scmp.lt.s32.totalorder %s11, 3
      %p94 = pnand %p92, %p93
      %p95 = pneg %p94
      // Predicated region
      $region9: #{tpu_custom_call.1} parent=5 // pred_check
        _
      $region10: #{tpu_custom_call.1} parent=5 // pred_check_branch
        %97 = sbr.rel (%p94) target = $region12
      $region11: #{tpu_custom_call.1} parent=5 // pred_region
        %s98 = ssub.s32 %s11, 1
        // Predicated region
        $region13: #{tpu_custom_call.1} parent=11 // pred_check
          %p99 = pneg %p58
        $region14: #{tpu_custom_call.1} parent=11 // pred_check_branch
          %101 = sbr.rel (%p99) target = $region16
        $region15: #{tpu_custom_call.1} parent=11 // pred_region
          _
        $region16: #{tpu_custom_call.1} parent=11 // pred_fallthru
          _
      $region12: #{tpu_custom_call.1} parent=5 // pred_fallthru
        _
      %p102 = scmp.lt.s32.totalorder %s11, 2
      // Predicated region
      $region17: #{tpu_custom_call.1} parent=5 // pred_check
        %p103 = pneg %p102
      $region18: #{tpu_custom_call.1} parent=5 // pred_check_branch
        %105 = sbr.rel (%p103) target = $region20
      $region19: #{tpu_custom_call.1} parent=5 // pred_region
        // Predicated region
        $region21: #{tpu_custom_call.1} parent=19 // pred_check
          %p106 = pneg %p31
        $region22: #{tpu_custom_call.1} parent=19 // pred_check_branch
          %108 = sbr.rel (%p106) target = $region24
        $region23: #{tpu_custom_call.1} parent=19 // pred_region
          %p109 = scmp.lt.s32.totalorder %s11, 1
          %s110 = scalar_select %p109, %s11, 1
          %s111 = smul.addr %s110, 54
          %s112 = smul.addr %s111, 4
          %s113 = scalar_lea.vmem %s0, %s112
        $region24: #{tpu_custom_call.1} parent=19 // pred_fallthru
          _
      $region20: #{tpu_custom_call.1} parent=5 // pred_fallthru
        _
      %p114 = scmp.le.s32.totalorder 1, %s11
      %p115 = scmp.lt.s32.totalorder %s11, 3
      %p116 = pnand %p114, %p115
      %p117 = pneg %p116
      // Predicated region
      $region25: #{tpu_custom_call.1} parent=5 // pred_check
        _
      $region26: #{tpu_custom_call.1} parent=5 // pred_check_branch
        %119 = sbr.rel (%p116) target = $region28
      $region27: #{tpu_custom_call.1} parent=5 // pred_region
        %s120 = ssub.s32 %s11, 1
        %p121 = scmp.lt.s32.totalorder %s16, 1
        %s122 = scalar_select %p121, %s16, 1
        %s123 = smul.addr %s122, 54
        %s124 = smul.addr %s123, 4
        %s125 = scalar_lea.vmem %s0, %s124
        %p126 = pneg %p37
        %p127 = pneg %p34
        %p128 = pneg %p58
        %p129 = pneg %p55
        %p130 = pneg %p84
        %p131 = pneg %p81
        %s132 = sand.u32 %s71, 1
        %s133 = scalar_lea.sflag [#allocation3], %s132
        %s134 = sand.u32 %s71, 1
        %s135 = smul.addr %s134, 128
        %s136 = scalar_lea.vmem [#allocation2], %s135
        %p137 = scmp.lt.s32.totalorder %s16, 1
        %s138 = scalar_select %p137, %s16, 1
        %s139 = smul.addr %s138, 54
        %s140 = smul.addr %s139, 4
        %s141 = scalar_lea.vmem %s0, %s140
        %v143 = vld [vmem:[%s141] sm:$0xf]
        %v144 = vld [vmem:[%s141 + $0x4] sm:$0xf]
        %v145 = vld [vmem:[%s141 + $0x8] sm:$0x1]
        %v146 = vld [vmem:[%s141 + $0xc] sm:$0xf]
        %v147 = vld [vmem:[%s141 + $0x10] sm:$0xf]
        %v148 = vld [vmem:[%s141 + $0x14] sm:$0x1]
        %v149 = vld [vmem:[%s141 + $0x18] sm:$0xf]
        %v150 = vld [vmem:[%s141 + $0x1c] sm:$0xf]
        %v151 = vld [vmem:[%s141 + $0x20] sm:$0x1]
        %v152 = vld [vmem:[%s141 + $0x24] sm:$0xf]
        %v153 = vld [vmem:[%s141 + $0x28] sm:$0xf]
        %v154 = vld [vmem:[%s141 + $0x2c] sm:$0x1]
        %v155 = vld [vmem:[%s141 + $0x30] sm:$0xf]
        %v156 = vld [vmem:[%s141 + $0x34] sm:$0xf]
        %v157 = vld [vmem:[%s141 + $0x38] sm:$0x1]
        %v158 = vld [vmem:[%s141 + $0x3c] sm:$0xf]
        %v159 = vld [vmem:[%s141 + $0x40] sm:$0xf]
        %v160 = vld [vmem:[%s141 + $0x44] sm:$0x1]
        %v161 = vld [vmem:[%s141 + $0x48] sm:$0xf]
        %v162 = vld [vmem:[%s141 + $0x4c] sm:$0xf]
        %v163 = vld [vmem:[%s141 + $0x50] sm:$0x1]
        %v164 = vld [vmem:[%s141 + $0x54] sm:$0xf]
        %v165 = vld [vmem:[%s141 + $0x58] sm:$0xf]
        %v166 = vld [vmem:[%s141 + $0x5c] sm:$0x1]
        %v167 = vld [vmem:[%s141 + $0x60] sm:$0xf]
        %v168 = vld [vmem:[%s141 + $0x64] sm:$0xf]
        %v169 = vld [vmem:[%s141 + $0x68] sm:$0x1]
        %v170 = vld [vmem:[%s141 + $0x6c] sm:$0xf]
        %v171 = vld [vmem:[%s141 + $0x70] sm:$0xf]
        %v172 = vld [vmem:[%s141 + $0x74] sm:$0x1]
        %v173 = vld [vmem:[%s141 + $0x78] sm:$0xf]
        %v174 = vld [vmem:[%s141 + $0x7c] sm:$0xf]
        %v175 = vld [vmem:[%s141 + $0x80] sm:$0x1]
        %v176 = vld [vmem:[%s141 + $0x84] sm:$0xf]
        %v177 = vld [vmem:[%s141 + $0x88] sm:$0xf]
        %v178 = vld [vmem:[%s141 + $0x8c] sm:$0x1]
        %v179 = vld [vmem:[%s141 + $0x90] sm:$0xf]
        %v180 = vld [vmem:[%s141 + $0x94] sm:$0xf]
        %v181 = vld [vmem:[%s141 + $0x98] sm:$0x1]
        %v182 = vld [vmem:[%s141 + $0x9c] sm:$0xf]
        %v183 = vld [vmem:[%s141 + $0xa0] sm:$0xf]
        %v184 = vld [vmem:[%s141 + $0xa4] sm:$0x1]
        %v185 = vld [vmem:[%s141 + $0xa8] sm:$0xf]
        %v186 = vld [vmem:[%s141 + $0xac] sm:$0xf]
        %v187 = vld [vmem:[%s141 + $0xb0] sm:$0x1]
        %v188 = vld [vmem:[%s141 + $0xb4] sm:$0xf]
        %v189 = vld [vmem:[%s141 + $0xb8] sm:$0xf]
        %v190 = vld [vmem:[%s141 + $0xbc] sm:$0x1]
        %v191 = vld [vmem:[%s1] sm:$0x3]
        %vm192 = vsmask.f32 3328
        %vm193 = vsmask.f32 7440
        %vm194 = vmor %vm192, %vm193
        %v196 = vshrl.u32 %v143, 16
        %v198 = vrot.slane %v196, 4
        %v199 = vshll.u32 %v143, 16
        %v201 = vrot.slane %v199, 5
        %v202 = vor.u32 %v198, %v201
        %v203 = vrot.slane %v202, 4
        %v205 = vshll.u32 %v144, 16
        %v207 = vrot.slane %v205, 5
        %v208 = vsel %vm194, %v203, %v207
        %v209 = vshrl.u32 %v144, 16
        %v211 = vrot.slane %v209, 4
        %v212 = vor.u32 %v211, %v207
        %v213 = vrot.slane %v212, 4
        %v215 = vshll.u32 %v145, 16
        %v217 = vrot.slane %v215, 5
        %v218 = vsel %vm194, %v213, %v217
        %v220 = vshrl.u32 %v146, 16
        %v222 = vrot.slane %v220, 4
        %v223 = vshll.u32 %v146, 16
        %v225 = vrot.slane %v223, 5
        %v226 = vor.u32 %v222, %v225
        %v227 = vrot.slane %v226, 4
        %v229 = vshll.u32 %v147, 16
        %v231 = vrot.slane %v229, 5
        %v232 = vsel %vm194, %v227, %v231
        %v233 = vshrl.u32 %v147, 16
        %v235 = vrot.slane %v233, 4
        %v236 = vor.u32 %v235, %v231
        %v237 = vrot.slane %v236, 4
        %v239 = vshll.u32 %v148, 16
        %v241 = vrot.slane %v239, 5
        %v242 = vsel %vm194, %v237, %v241
        %v244 = vshrl.u32 %v149, 16
        %v246 = vrot.slane %v244, 4
        %v247 = vshll.u32 %v149, 16
        %v249 = vrot.slane %v247, 5
        %v250 = vor.u32 %v246, %v249
        %v251 = vrot.slane %v250, 4
        %v253 = vshll.u32 %v150, 16
        %v255 = vrot.slane %v253, 5
        %v256 = vsel %vm194, %v251, %v255
        %v257 = vshrl.u32 %v150, 16
        %v259 = vrot.slane %v257, 4
        %v260 = vor.u32 %v259, %v255
        %v261 = vrot.slane %v260, 4
        %v263 = vshll.u32 %v151, 16
        %v265 = vrot.slane %v263, 5
        %v266 = vsel %vm194, %v261, %v265
        %v268 = vshrl.u32 %v152, 16
        %v270 = vrot.slane %v268, 4
        %v271 = vshll.u32 %v152, 16
        %v273 = vrot.slane %v271, 5
        %v274 = vor.u32 %v270, %v273
        %v275 = vrot.slane %v274, 4
        %v277 = vshll.u32 %v153, 16
        %v279 = vrot.slane %v277, 5
        %v280 = vsel %vm194, %v275, %v279
        %v281 = vshrl.u32 %v153, 16
        %v283 = vrot.slane %v281, 4
        %v284 = vor.u32 %v283, %v279
        %v285 = vrot.slane %v284, 4
        %v287 = vshll.u32 %v154, 16
        %v289 = vrot.slane %v287, 5
        %v290 = vsel %vm194, %v285, %v289
        %v292 = vshrl.u32 %v155, 16
        %v294 = vrot.slane %v292, 4
        %v295 = vshll.u32 %v155, 16
        %v297 = vrot.slane %v295, 5
        %v298 = vor.u32 %v294, %v297
        %v299 = vrot.slane %v298, 4
        %v301 = vshll.u32 %v156, 16
        %v303 = vrot.slane %v301, 5
        %v304 = vsel %vm194, %v299, %v303
        %v305 = vshrl.u32 %v156, 16
        %v307 = vrot.slane %v305, 4
        %v308 = vor.u32 %v307, %v303
        %v309 = vrot.slane %v308, 4
        %v311 = vshll.u32 %v157, 16
        %v313 = vrot.slane %v311, 5
        %v314 = vsel %vm194, %v309, %v313
        %v316 = vshrl.u32 %v158, 16
        %v318 = vrot.slane %v316, 4
        %v319 = vshll.u32 %v158, 16
        %v321 = vrot.slane %v319, 5
        %v322 = vor.u32 %v318, %v321
        %v323 = vrot.slane %v322, 4
        %v325 = vshll.u32 %v159, 16
        %v327 = vrot.slane %v325, 5
        %v328 = vsel %vm194, %v323, %v327
        %v329 = vshrl.u32 %v159, 16
        %v331 = vrot.slane %v329, 4
        %v332 = vor.u32 %v331, %v327
        %v333 = vrot.slane %v332, 4
        %v335 = vshll.u32 %v160, 16
        %v337 = vrot.slane %v335, 5
        %v338 = vsel %vm194, %v333, %v337
        %v340 = vshrl.u32 %v161, 16
        %v342 = vrot.slane %v340, 4
        %v343 = vshll.u32 %v161, 16
        %v345 = vrot.slane %v343, 5
        %v346 = vor.u32 %v342, %v345
        %v347 = vrot.slane %v346, 4
        %v349 = vshll.u32 %v162, 16
        %v351 = vrot.slane %v349, 5
        %v352 = vsel %vm194, %v347, %v351
        %v353 = vshrl.u32 %v162, 16
        %v355 = vrot.slane %v353, 4
        %v356 = vor.u32 %v355, %v351
        %v357 = vrot.slane %v356, 4
        %v359 = vshll.u32 %v163, 16
        %v361 = vrot.slane %v359, 5
        %v362 = vsel %vm194, %v357, %v361
        %v364 = vshrl.u32 %v164, 16
        %v366 = vrot.slane %v364, 4
        %v367 = vshll.u32 %v164, 16
        %v369 = vrot.slane %v367, 5
        %v370 = vor.u32 %v366, %v369
        %v371 = vrot.slane %v370, 4
        %v373 = vshll.u32 %v165, 16
        %v375 = vrot.slane %v373, 5
        %v376 = vsel %vm194, %v371, %v375
        %v377 = vshrl.u32 %v165, 16
        %v379 = vrot.slane %v377, 4
        %v380 = vor.u32 %v379, %v375
        %v381 = vrot.slane %v380, 4
        %v383 = vshll.u32 %v166, 16
        %v385 = vrot.slane %v383, 5
        %v386 = vsel %vm194, %v381, %v385
        %v388 = vshrl.u32 %v167, 16
        %v390 = vrot.slane %v388, 4
        %v391 = vshll.u32 %v167, 16
        %v393 = vrot.slane %v391, 5
        %v394 = vor.u32 %v390, %v393
        %v395 = vrot.slane %v394, 4
        %v397 = vshll.u32 %v168, 16
        %v399 = vrot.slane %v397, 5
        %v400 = vsel %vm194, %v395, %v399
        %v401 = vshrl.u32 %v168, 16
        %v403 = vrot.slane %v401, 4
        %v404 = vor.u32 %v403, %v399
        %v405 = vrot.slane %v404, 4
        %v407 = vshll.u32 %v169, 16
        %v409 = vrot.slane %v407, 5
        %v410 = vsel %vm194, %v405, %v409
        %v412 = vshrl.u32 %v170, 16
        %v414 = vrot.slane %v412, 4
        %v415 = vshll.u32 %v170, 16
        %v417 = vrot.slane %v415, 5
        %v418 = vor.u32 %v414, %v417
        %v419 = vrot.slane %v418, 4
        %v421 = vshll.u32 %v171, 16
        %v423 = vrot.slane %v421, 5
        %v424 = vsel %vm194, %v419, %v423
        %v425 = vshrl.u32 %v171, 16
        %v427 = vrot.slane %v425, 4
        %v428 = vor.u32 %v427, %v423
        %v429 = vrot.slane %v428, 4
        %v431 = vshll.u32 %v172, 16
        %v433 = vrot.slane %v431, 5
        %v434 = vsel %vm194, %v429, %v433
        %v436 = vshrl.u32 %v173, 16
        %v438 = vrot.slane %v436, 4
        %v439 = vshll.u32 %v173, 16
        %v441 = vrot.slane %v439, 5
        %v442 = vor.u32 %v438, %v441
        %v443 = vrot.slane %v442, 4
        %v445 = vshll.u32 %v174, 16
        %v447 = vrot.slane %v445, 5
        %v448 = vsel %vm194, %v443, %v447
        %v449 = vshrl.u32 %v174, 16
        %v451 = vrot.slane %v449, 4
        %v452 = vor.u32 %v451, %v447
        %v453 = vrot.slane %v452, 4
        %v455 = vshll.u32 %v175, 16
        %v457 = vrot.slane %v455, 5
        %v458 = vsel %vm194, %v453, %v457
        %v460 = vshrl.u32 %v176, 16
        %v462 = vrot.slane %v460, 4
        %v463 = vshll.u32 %v176, 16
        %v465 = vrot.slane %v463, 5
        %v466 = vor.u32 %v462, %v465
        %v467 = vrot.slane %v466, 4
        %v469 = vshll.u32 %v177, 16
        %v471 = vrot.slane %v469, 5
        %v472 = vsel %vm194, %v467, %v471
        %v473 = vshrl.u32 %v177, 16
        %v475 = vrot.slane %v473, 4
        %v476 = vor.u32 %v475, %v471
        %v477 = vrot.slane %v476, 4
        %v479 = vshll.u32 %v178, 16
        %v481 = vrot.slane %v479, 5
        %v482 = vsel %vm194, %v477, %v481
        %v484 = vshrl.u32 %v179, 16
        %v486 = vrot.slane %v484, 4
        %v487 = vshll.u32 %v179, 16
        %v489 = vrot.slane %v487, 5
        %v490 = vor.u32 %v486, %v489
        %v491 = vrot.slane %v490, 4
        %v493 = vshll.u32 %v180, 16
        %v495 = vrot.slane %v493, 5
        %v496 = vsel %vm194, %v491, %v495
        %v497 = vshrl.u32 %v180, 16
        %v499 = vrot.slane %v497, 4
        %v500 = vor.u32 %v499, %v495
        %v501 = vrot.slane %v500, 4
        %v503 = vshll.u32 %v181, 16
        %v505 = vrot.slane %v503, 5
        %v506 = vsel %vm194, %v501, %v505
        %v508 = vshrl.u32 %v182, 16
        %v510 = vrot.slane %v508, 4
        %v511 = vshll.u32 %v182, 16
        %v513 = vrot.slane %v511, 5
        %v514 = vor.u32 %v510, %v513
        %v515 = vrot.slane %v514, 4
        %v517 = vshll.u32 %v183, 16
        %v519 = vrot.slane %v517, 5
        %v520 = vsel %vm194, %v515, %v519
        %v521 = vshrl.u32 %v183, 16
        %v523 = vrot.slane %v521, 4
        %v524 = vor.u32 %v523, %v519
        %v525 = vrot.slane %v524, 4
        %v527 = vshll.u32 %v184, 16
        %v529 = vrot.slane %v527, 5
        %v530 = vsel %vm194, %v525, %v529
        %v532 = vshrl.u32 %v185, 16
        %v534 = vrot.slane %v532, 4
        %v535 = vshll.u32 %v185, 16
        %v537 = vrot.slane %v535, 5
        %v538 = vor.u32 %v534, %v537
        %v539 = vrot.slane %v538, 4
        %v541 = vshll.u32 %v186, 16
        %v543 = vrot.slane %v541, 5
        %v544 = vsel %vm194, %v539, %v543
        %v545 = vshrl.u32 %v186, 16
        %v547 = vrot.slane %v545, 4
        %v548 = vor.u32 %v547, %v543
        %v549 = vrot.slane %v548, 4
        %v551 = vshll.u32 %v187, 16
        %v553 = vrot.slane %v551, 5
        %v554 = vsel %vm194, %v549, %v553
        %v556 = vshrl.u32 %v188, 16
        %v558 = vrot.slane %v556, 4
        %v559 = vshll.u32 %v188, 16
        %v561 = vrot.slane %v559, 5
        %v562 = vor.u32 %v558, %v561
        %v563 = vrot.slane %v562, 4
        %v565 = vshll.u32 %v189, 16
        %v567 = vrot.slane %v565, 5
        %v568 = vsel %vm194, %v563, %v567
        %v569 = vshrl.u32 %v189, 16
        %v571 = vrot.slane %v569, 4
        %v572 = vor.u32 %v571, %v567
        %v573 = vrot.slane %v572, 4
        %v575 = vshll.u32 %v190, 16
        %v577 = vrot.slane %v575, 5
        %v578 = vsel %vm194, %v573, %v577
        %s579 = scalar_lea.vmem %s1, 2
        %v580 = vld [vmem:[%s579] sm:$0x3]
        %v581 = vunpack.c.l.b16 %v208
        %v582 = vunpack.c.l.b16 %v218
        %v583 = vunpack.c.l.b16 %v232
        %v584 = vunpack.c.l.b16 %v242
        %v585 = vunpack.c.l.b16 %v256
        %v586 = vunpack.c.l.b16 %v266
        %v587 = vunpack.c.l.b16 %v280
        %v588 = vunpack.c.l.b16 %v290
        %v589 = vunpack.c.l.b16 %v304
        %v590 = vunpack.c.l.b16 %v314
        %v591 = vunpack.c.l.b16 %v328
        %v592 = vunpack.c.l.b16 %v338
        %v593 = vunpack.c.l.b16 %v352
        %v594 = vunpack.c.l.b16 %v362
        %v595 = vunpack.c.l.b16 %v376
        %v596 = vunpack.c.l.b16 %v386
        %v597 = vunpack.c.l.b16 %v400
        %v598 = vunpack.c.l.b16 %v410
        %v599 = vunpack.c.l.b16 %v424
        %v600 = vunpack.c.l.b16 %v434
        %v601 = vunpack.c.l.b16 %v448
        %v602 = vunpack.c.l.b16 %v458
        %v603 = vunpack.c.l.b16 %v472
        %v604 = vunpack.c.l.b16 %v482
        %v605 = vunpack.c.l.b16 %v496
        %v606 = vunpack.c.l.b16 %v506
        %v607 = vunpack.c.l.b16 %v520
        %v608 = vunpack.c.l.b16 %v530
        %v609 = vunpack.c.l.b16 %v544
        %v610 = vunpack.c.l.b16 %v554
        %v611 = vunpack.c.l.b16 %v568
        %v612 = vunpack.c.l.b16 %v578
        %v613 = vpack.c.b16 %v582, %v581
        %v614 = vpack.c.b16 %v584, %v583
        %v615 = vpack.c.b16 %v586, %v585
        %v616 = vpack.c.b16 %v588, %v587
        %v617 = vpack.c.b16 %v590, %v589
        %v618 = vpack.c.b16 %v592, %v591
        %v619 = vpack.c.b16 %v594, %v593
        %v620 = vpack.c.b16 %v596, %v595
        %v621 = vpack.c.b16 %v598, %v597
        %v622 = vpack.c.b16 %v600, %v599
        %v623 = vpack.c.b16 %v602, %v601
        %v624 = vpack.c.b16 %v604, %v603
        %v625 = vpack.c.b16 %v606, %v605
        %v626 = vpack.c.b16 %v608, %v607
        %v627 = vpack.c.b16 %v610, %v609
        %v628 = vpack.c.b16 %v612, %v611
        %vm629 = vcmask 31744
        %v631 = vsel %vm629, %v613, 0
        %v634 = vsel %vm629, %v614, 0
        %v637 = vsel %vm629, %v615, 0
        %v640 = vsel %vm629, %v616, 0
        %v643 = vsel %vm629, %v617, 0
        %v646 = vsel %vm629, %v618, 0
        %v649 = vsel %vm629, %v619, 0
        %v652 = vsel %vm629, %v620, 0
        %v655 = vsel %vm629, %v621, 0
        %v658 = vsel %vm629, %v622, 0
        %v661 = vsel %vm629, %v623, 0
        %v664 = vsel %vm629, %v624, 0
        %v667 = vsel %vm629, %v625, 0
        %v670 = vsel %vm629, %v626, 0
        %v673 = vsel %vm629, %v627, 0
        %v676 = vsel %vm629, %v628, 0
        %vm678 = vcmask 1041408
        %v680 = vsel %vm678, %v580, 0
        %682 = vmatprep.subr.bf16.mxu0 0
        %683 = vmatpush1.bf16.msra.mxu0 %v680
        %684 = vmatprep.subr.bf16.mxu0 0
        %685 = vmatpush1.bf16.msra.mxu0 0
        %686 = vmatprep.subr.bf16.mxu0 0
        %687 = vmatpush1.bf16.msra.mxu0 0
        %688 = vmatprep.subr.bf16.mxu0 0
        %689 = vmatpush1.bf16.msra.mxu0 0
        %690 = vmatprep.subr.bf16.mxu0 0
        %691 = vmatpush1.bf16.msra.mxu0 0
        %692 = vmatprep.subr.bf16.mxu0 0
        %693 = vmatpush1.bf16.msra.mxu0 0
        %694 = vmatprep.subr.bf16.mxu0 0
        %695 = vmatpush1.bf16.msra.mxu0 0
        %696 = vmatprep.subr.bf16.mxu0 0
        %697 = vmatpush1.bf16.msra.mxu0 0
        %698 = vmatprep.subr.bf16.mxu0 0
        %699 = vmatpush1.bf16.msra.mxu0 0
        %700 = vmatprep.subr.bf16.mxu0 0
        %701 = vmatpush1.bf16.msra.mxu0 0
        %702 = vmatprep.subr.bf16.mxu0 0
        %703 = vmatpush1.bf16.msra.mxu0 0
        %704 = vmatprep.subr.bf16.mxu0 0
        %705 = vmatpush1.bf16.msra.mxu0 0
        %706 = vmatprep.subr.bf16.mxu0 0
        %707 = vmatpush1.bf16.msra.mxu0 0
        %708 = vmatprep.subr.bf16.mxu0 0
        %709 = vmatpush1.bf16.msra.mxu0 0
        %710 = vmatprep.subr.bf16.mxu0 0
        %711 = vmatpush1.bf16.msra.mxu0 0
        %712 = vmatprep.subr.bf16.mxu0 0
        %713 = vmatpush1.bf16.msra.mxu0 0
        %714 = vmatprep.mubr.bf16.mxu0 0
        %715 = vmatmul.mubr.bf16.gmra.mrb[0].mxu0 %v631
        %v716 = vpop.f32.mrb[0].mxu0
        %v717 = vadd.f32 0.0, %v716
        %v718 = vpop.f32.mrb[0].mxu0
        %v719 = vpop.f32.mrb[0].mxu0
        %v720 = vadd.f32 0.0, %v719
        %v721 = vpop.f32.mrb[0].mxu0
        %722 = vmatprep.mubr.bf16.mxu0 0
        %723 = vmatmul.mubr.bf16.gmra.mrb[0].mxu0 %v634
        %v724 = vpop.f32.mrb[0].mxu0
        %v725 = vadd.f32 0.0, %v724
        %v726 = vpop.f32.mrb[0].mxu0
        %v727 = vpop.f32.mrb[0].mxu0
        %v728 = vadd.f32 0.0, %v727
        %v729 = vpop.f32.mrb[0].mxu0
        %730 = vmatprep.mubr.bf16.mxu0 0
        %731 = vmatmul.mubr.bf16.gmra.mrb[0].mxu0 %v637
        %v732 = vpop.f32.mrb[0].mxu0
        %v733 = vadd.f32 0.0, %v732
        %v734 = vpop.f32.mrb[0].mxu0
        %v735 = vpop.f32.mrb[0].mxu0
        %v736 = vadd.f32 0.0, %v735
        %v737 = vpop.f32.mrb[0].mxu0
        %738 = vmatprep.mubr.bf16.mxu0 0
        %739 = vmatmul.mubr.bf16.gmra.mrb[0].mxu0 %v640
        %v740 = vpop.f32.mrb[0].mxu0
        %v741 = vadd.f32 0.0, %v740
        %v742 = vpop.f32.mrb[0].mxu0
        %v743 = vpop.f32.mrb[0].mxu0
        %v744 = vadd.f32 0.0, %v743
        %v745 = vpop.f32.mrb[0].mxu0
        %746 = vmatprep.mubr.bf16.mxu0 0
        %747 = vmatmul.mubr.bf16.gmra.mrb[0].mxu0 %v643
        %v748 = vpop.f32.mrb[0].mxu0
        %v749 = vadd.f32 0.0, %v748
        %v750 = vpop.f32.mrb[0].mxu0
        %v751 = vpop.f32.mrb[0].mxu0
        %v752 = vadd.f32 0.0, %v751
        %v753 = vpop.f32.mrb[0].mxu0
        %754 = vmatprep.mubr.bf16.mxu0 0
        %755 = vmatmul.mubr.bf16.gmra.mrb[0].mxu0 %v646
        %v756 = vpop.f32.mrb[0].mxu0
        %v757 = vadd.f32 0.0, %v756
        %v758 = vpop.f32.mrb[0].mxu0
        %v759 = vpop.f32.mrb[0].mxu0
        %v760 = vadd.f32 0.0, %v759
        %v761 = vpop.f32.mrb[0].mxu0
        %762 = vmatprep.mubr.bf16.mxu0 0
        %763 = vmatmul.mubr.bf16.gmra.mrb[0].mxu0 %v649
        %v764 = vpop.f32.mrb[0].mxu0
        %v765 = vadd.f32 0.0, %v764
        %v766 = vpop.f32.mrb[0].mxu0
        %v767 = vpop.f32.mrb[0].mxu0
        %v768 = vadd.f32 0.0, %v767
        %v769 = vpop.f32.mrb[0].mxu0
        %770 = vmatprep.mubr.bf16.mxu0 0
        %771 = vmatmul.mubr.bf16.gmra.mrb[0].mxu0 %v652
        %v772 = vpop.f32.mrb[0].mxu0
        %v773 = vadd.f32 0.0, %v772
        %v774 = vpop.f32.mrb[0].mxu0
        %v775 = vpop.f32.mrb[0].mxu0
        %v776 = vadd.f32 0.0, %v775
        %v777 = vpop.f32.mrb[0].mxu0
        %778 = vmatprep.mubr.bf16.mxu0 0
        %779 = vmatmul.mubr.bf16.gmra.mrb[0].mxu0 %v655
        %v780 = vpop.f32.mrb[0].mxu0
        %v781 = vadd.f32 0.0, %v780
        %v782 = vpop.f32.mrb[0].mxu0
        %v783 = vpop.f32.mrb[0].mxu0
        %v784 = vadd.f32 0.0, %v783
        %v785 = vpop.f32.mrb[0].mxu0
        %786 = vmatprep.mubr.bf16.mxu0 0
        %787 = vmatmul.mubr.bf16.gmra.mrb[0].mxu0 %v658
        %v788 = vpop.f32.mrb[0].mxu0
        %v789 = vadd.f32 0.0, %v788
        %v790 = vpop.f32.mrb[0].mxu0
        %v791 = vpop.f32.mrb[0].mxu0
        %v792 = vadd.f32 0.0, %v791
        %v793 = vpop.f32.mrb[0].mxu0
        %794 = vmatprep.mubr.bf16.mxu0 0
        %795 = vmatmul.mubr.bf16.gmra.mrb[0].mxu0 %v661
        %v796 = vpop.f32.mrb[0].mxu0
        %v797 = vadd.f32 0.0, %v796
        %v798 = vpop.f32.mrb[0].mxu0
        %v799 = vpop.f32.mrb[0].mxu0
        %v800 = vadd.f32 0.0, %v799
        %v801 = vpop.f32.mrb[0].mxu0
        %802 = vmatprep.mubr.bf16.mxu0 0
        %803 = vmatmul.mubr.bf16.gmra.mrb[0].mxu0 %v664
        %v804 = vpop.f32.mrb[0].mxu0
        %v805 = vadd.f32 0.0, %v804
        %v806 = vpop.f32.mrb[0].mxu0
        %v807 = vpop.f32.mrb[0].mxu0
        %v808 = vadd.f32 0.0, %v807
        %v809 = vpop.f32.mrb[0].mxu0
        %810 = vmatprep.mubr.bf16.mxu0 0
        %811 = vmatmul.mubr.bf16.gmra.mrb[0].mxu0 %v667
        %v812 = vpop.f32.mrb[0].mxu0
        %v813 = vadd.f32 0.0, %v812
        %v814 = vpop.f32.mrb[0].mxu0
        %v815 = vpop.f32.mrb[0].mxu0
        %v816 = vadd.f32 0.0, %v815
        %v817 = vpop.f32.mrb[0].mxu0
        %818 = vmatprep.mubr.bf16.mxu0 0
        %819 = vmatmul.mubr.bf16.gmra.mrb[0].mxu0 %v670
        %v820 = vpop.f32.mrb[0].mxu0
        %v821 = vadd.f32 0.0, %v820
        %v822 = vpop.f32.mrb[0].mxu0
        %v823 = vpop.f32.mrb[0].mxu0
        %v824 = vadd.f32 0.0, %v823
        %v825 = vpop.f32.mrb[0].mxu0
        %826 = vmatprep.mubr.bf16.mxu0 0
        %827 = vmatmul.mubr.bf16.gmra.mrb[0].mxu0 %v673
        %v828 = vpop.f32.mrb[0].mxu0
        %v829 = vadd.f32 0.0, %v828
        %v830 = vpop.f32.mrb[0].mxu0
        %v831 = vpop.f32.mrb[0].mxu0
        %v832 = vadd.f32 0.0, %v831
        %v833 = vpop.f32.mrb[0].mxu0
        %834 = vmatprep.mubr.bf16.mxu0 0
        %835 = vmatmul.mubr.bf16.gmra.mrb[0].mxu0 %v676
        %v836 = vpop.f32.mrb[0].mxu0
        %v837 = vadd.f32 0.0, %v836
        %v838 = vpop.f32.mrb[0].mxu0
        %v839 = vpop.f32.mrb[0].mxu0
        %v840 = vadd.f32 0.0, %v839
        %v841 = vpop.f32.mrb[0].mxu0
        %842 = vdwg.mxu0
        %v875 = vunpack.c.l.b16 %v143
        %v876 = vunpack.c.l.b16 %v144
        %v877 = vunpack.c.l.b16 %v146
        %v878 = vunpack.c.l.b16 %v147
        %v879 = vunpack.c.l.b16 %v149
        %v880 = vunpack.c.l.b16 %v150
        %v881 = vunpack.c.l.b16 %v152
        %v882 = vunpack.c.l.b16 %v153
        %v883 = vunpack.c.l.b16 %v155
        %v884 = vunpack.c.l.b16 %v156
        %v885 = vunpack.c.l.b16 %v158
        %v886 = vunpack.c.l.b16 %v159
        %v887 = vunpack.c.l.b16 %v161
        %v888 = vunpack.c.l.b16 %v162
        %v889 = vunpack.c.l.b16 %v164
        %v890 = vunpack.c.l.b16 %v165
        %v891 = vunpack.c.l.b16 %v167
        %v892 = vunpack.c.l.b16 %v168
        %v893 = vunpack.c.l.b16 %v170
        %v894 = vunpack.c.l.b16 %v171
        %v895 = vunpack.c.l.b16 %v173
        %v896 = vunpack.c.l.b16 %v174
        %v897 = vunpack.c.l.b16 %v176
        %v898 = vunpack.c.l.b16 %v177
        %v899 = vunpack.c.l.b16 %v179
        %v900 = vunpack.c.l.b16 %v180
        %v901 = vunpack.c.l.b16 %v182
        %v902 = vunpack.c.l.b16 %v183
        %v903 = vunpack.c.l.b16 %v185
        %v904 = vunpack.c.l.b16 %v186
        %v905 = vunpack.c.l.b16 %v188
        %v906 = vunpack.c.l.b16 %v189
        %v907 = vpack.c.b16 %v876, %v875
        %v908 = vpack.c.b16 %v878, %v877
        %v909 = vpack.c.b16 %v880, %v879
        %v910 = vpack.c.b16 %v882, %v881
        %v911 = vpack.c.b16 %v884, %v883
        %v912 = vpack.c.b16 %v886, %v885
        %v913 = vpack.c.b16 %v888, %v887
        %v914 = vpack.c.b16 %v890, %v889
        %v915 = vpack.c.b16 %v892, %v891
        %v916 = vpack.c.b16 %v894, %v893
        %v917 = vpack.c.b16 %v896, %v895
        %v918 = vpack.c.b16 %v898, %v897
        %v919 = vpack.c.b16 %v900, %v899
        %v920 = vpack.c.b16 %v902, %v901
        %v921 = vpack.c.b16 %v904, %v903
        %v922 = vpack.c.b16 %v906, %v905
        %v924 = vsel %vm629, %v907, 0
        %v927 = vsel %vm629, %v908, 0
        %v930 = vsel %vm629, %v909, 0
        %v933 = vsel %vm629, %v910, 0
        %v936 = vsel %vm629, %v911, 0
        %v939 = vsel %vm629, %v912, 0
        %v942 = vsel %vm629, %v913, 0
        %v945 = vsel %vm629, %v914, 0
        %v948 = vsel %vm629, %v915, 0
        %v951 = vsel %vm629, %v916, 0
        %v954 = vsel %vm629, %v917, 0
        %v957 = vsel %vm629, %v918, 0
        %v960 = vsel %vm629, %v919, 0
        %v963 = vsel %vm629, %v920, 0
        %v966 = vsel %vm629, %v921, 0
        %v969 = vsel %vm629, %v922, 0
        %v972 = vsel %vm678, %v191, 0
        %974 = vmatprep.subr.bf16.mxu0 0
        %975 = vmatpush1.bf16.msra.mxu0 %v972
        %976 = vmatprep.subr.bf16.mxu0 0
        %977 = vmatpush1.bf16.msra.mxu0 0
        %978 = vmatprep.subr.bf16.mxu0 0
        %979 = vmatpush1.bf16.msra.mxu0 0
        %980 = vmatprep.subr.bf16.mxu0 0
        %981 = vmatpush1.bf16.msra.mxu0 0
        %982 = vmatprep.subr.bf16.mxu0 0
        %983 = vmatpush1.bf16.msra.mxu0 0
        %984 = vmatprep.subr.bf16.mxu0 0
        %985 = vmatpush1.bf16.msra.mxu0 0
        %986 = vmatprep.subr.bf16.mxu0 0
        %987 = vmatpush1.bf16.msra.mxu0 0
        %988 = vmatprep.subr.bf16.mxu0 0
        %989 = vmatpush1.bf16.msra.mxu0 0
        %990 = vmatprep.subr.bf16.mxu0 0
        %991 = vmatpush1.bf16.msra.mxu0 0
        %992 = vmatprep.subr.bf16.mxu0 0
        %993 = vmatpush1.bf16.msra.mxu0 0
        %994 = vmatprep.subr.bf16.mxu0 0
        %995 = vmatpush1.bf16.msra.mxu0 0
        %996 = vmatprep.subr.bf16.mxu0 0
        %997 = vmatpush1.bf16.msra.mxu0 0
        %998 = vmatprep.subr.bf16.mxu0 0
        %999 = vmatpush1.bf16.msra.mxu0 0
        %1000 = vmatprep.subr.bf16.mxu0 0
        %1001 = vmatpush1.bf16.msra.mxu0 0
        %1002 = vmatprep.subr.bf16.mxu0 0
        %1003 = vmatpush1.bf16.msra.mxu0 0
        %1004 = vmatprep.subr.bf16.mxu0 0
        %1005 = vmatpush1.bf16.msra.mxu0 0
        %1006 = vmatprep.mubr.bf16.mxu0 0
        %1007 = vmatmul.mubr.bf16.gmra.mrb[0].mxu0 %v924
        %v1008 = vpop.f32.mrb[0].mxu0
        %v1009 = vadd.f32 %v717, %v1008
        %v1010 = vpop.f32.mrb[0].mxu0
        %v1011 = vpop.f32.mrb[0].mxu0
        %v1012 = vadd.f32 %v720, %v1011
        %v1013 = vpop.f32.mrb[0].mxu0
        %1014 = vmatprep.mubr.bf16.mxu0 0
        %1015 = vmatmul.mubr.bf16.gmra.mrb[0].mxu0 %v927
        %v1016 = vpop.f32.mrb[0].mxu0
        %v1017 = vadd.f32 %v725, %v1016
        %v1018 = vpop.f32.mrb[0].mxu0
        %v1019 = vpop.f32.mrb[0].mxu0
        %v1020 = vadd.f32 %v728, %v1019
        %v1021 = vpop.f32.mrb[0].mxu0
        %1022 = vmatprep.mubr.bf16.mxu0 0
        %1023 = vmatmul.mubr.bf16.gmra.mrb[0].mxu0 %v930
        %v1024 = vpop.f32.mrb[0].mxu0
        %v1025 = vadd.f32 %v733, %v1024
        %v1026 = vpop.f32.mrb[0].mxu0
        %v1027 = vpop.f32.mrb[0].mxu0
        %v1028 = vadd.f32 %v736, %v1027
        %v1029 = vpop.f32.mrb[0].mxu0
        %1030 = vmatprep.mubr.bf16.mxu0 0
        %1031 = vmatmul.mubr.bf16.gmra.mrb[0].mxu0 %v933
        %v1032 = vpop.f32.mrb[0].mxu0
        %v1033 = vadd.f32 %v741, %v1032
        %v1034 = vpop.f32.mrb[0].mxu0
        %v1035 = vpop.f32.mrb[0].mxu0
        %v1036 = vadd.f32 %v744, %v1035
        %v1037 = vpop.f32.mrb[0].mxu0
        %1038 = vmatprep.mubr.bf16.mxu0 0
        %1039 = vmatmul.mubr.bf16.gmra.mrb[0].mxu0 %v936
        %v1040 = vpop.f32.mrb[0].mxu0
        %v1041 = vadd.f32 %v749, %v1040
        %v1042 = vpop.f32.mrb[0].mxu0
        %v1043 = vpop.f32.mrb[0].mxu0
        %v1044 = vadd.f32 %v752, %v1043
        %v1045 = vpop.f32.mrb[0].mxu0
        %1046 = vmatprep.mubr.bf16.mxu0 0
        %1047 = vmatmul.mubr.bf16.gmra.mrb[0].mxu0 %v939
        %v1048 = vpop.f32.mrb[0].mxu0
        %v1049 = vadd.f32 %v757, %v1048
        %v1050 = vpop.f32.mrb[0].mxu0
        %v1051 = vpop.f32.mrb[0].mxu0
        %v1052 = vadd.f32 %v760, %v1051
        %v1053 = vpop.f32.mrb[0].mxu0
        %1054 = vmatprep.mubr.bf16.mxu0 0
        %1055 = vmatmul.mubr.bf16.gmra.mrb[0].mxu0 %v942
        %v1056 = vpop.f32.mrb[0].mxu0
        %v1057 = vadd.f32 %v765, %v1056
        %v1058 = vpop.f32.mrb[0].mxu0
        %v1059 = vpop.f32.mrb[0].mxu0
        %v1060 = vadd.f32 %v768, %v1059
        %v1061 = vpop.f32.mrb[0].mxu0
        %1062 = vmatprep.mubr.bf16.mxu0 0
        %1063 = vmatmul.mubr.bf16.gmra.mrb[0].mxu0 %v945
        %v1064 = vpop.f32.mrb[0].mxu0
        %v1065 = vadd.f32 %v773, %v1064
        %v1066 = vpop.f32.mrb[0].mxu0
        %v1067 = vpop.f32.mrb[0].mxu0
        %v1068 = vadd.f32 %v776, %v1067
        %v1069 = vpop.f32.mrb[0].mxu0
        %1070 = vmatprep.mubr.bf16.mxu0 0
        %1071 = vmatmul.mubr.bf16.gmra.mrb[0].mxu0 %v948
        %v1072 = vpop.f32.mrb[0].mxu0
        %v1073 = vadd.f32 %v781, %v1072
        %v1074 = vpop.f32.mrb[0].mxu0
        %v1075 = vpop.f32.mrb[0].mxu0
        %v1076 = vadd.f32 %v784, %v1075
        %v1077 = vpop.f32.mrb[0].mxu0
        %1078 = vmatprep.mubr.bf16.mxu0 0
        %1079 = vmatmul.mubr.bf16.gmra.mrb[0].mxu0 %v951
        %v1080 = vpop.f32.mrb[0].mxu0
        %v1081 = vadd.f32 %v789, %v1080
        %v1082 = vpop.f32.mrb[0].mxu0
        %v1083 = vpop.f32.mrb[0].mxu0
        %v1084 = vadd.f32 %v792, %v1083
        %v1085 = vpop.f32.mrb[0].mxu0
        %1086 = vmatprep.mubr.bf16.mxu0 0
        %1087 = vmatmul.mubr.bf16.gmra.mrb[0].mxu0 %v954
        %v1088 = vpop.f32.mrb[0].mxu0
        %v1089 = vadd.f32 %v797, %v1088
        %v1090 = vpop.f32.mrb[0].mxu0
        %v1091 = vpop.f32.mrb[0].mxu0
        %v1092 = vadd.f32 %v800, %v1091
        %v1093 = vpop.f32.mrb[0].mxu0
        %1094 = vmatprep.mubr.bf16.mxu0 0
        %1095 = vmatmul.mubr.bf16.gmra.mrb[0].mxu0 %v957
        %v1096 = vpop.f32.mrb[0].mxu0
        %v1097 = vadd.f32 %v805, %v1096
        %v1098 = vpop.f32.mrb[0].mxu0
        %v1099 = vpop.f32.mrb[0].mxu0
        %v1100 = vadd.f32 %v808, %v1099
        %v1101 = vpop.f32.mrb[0].mxu0
        %1102 = vmatprep.mubr.bf16.mxu0 0
        %1103 = vmatmul.mubr.bf16.gmra.mrb[0].mxu0 %v960
        %v1104 = vpop.f32.mrb[0].mxu0
        %v1105 = vadd.f32 %v813, %v1104
        %v1106 = vpop.f32.mrb[0].mxu0
        %v1107 = vpop.f32.mrb[0].mxu0
        %v1108 = vadd.f32 %v816, %v1107
        %v1109 = vpop.f32.mrb[0].mxu0
        %1110 = vmatprep.mubr.bf16.mxu0 0
        %1111 = vmatmul.mubr.bf16.gmra.mrb[0].mxu0 %v963
        %v1112 = vpop.f32.mrb[0].mxu0
        %v1113 = vadd.f32 %v821, %v1112
        %v1114 = vpop.f32.mrb[0].mxu0
        %v1115 = vpop.f32.mrb[0].mxu0
        %v1116 = vadd.f32 %v824, %v1115
        %v1117 = vpop.f32.mrb[0].mxu0
        %1118 = vmatprep.mubr.bf16.mxu0 0
        %1119 = vmatmul.mubr.bf16.gmra.mrb[0].mxu0 %v966
        %v1120 = vpop.f32.mrb[0].mxu0
        %v1121 = vadd.f32 %v829, %v1120
        %v1122 = vpop.f32.mrb[0].mxu0
        %v1123 = vpop.f32.mrb[0].mxu0
        %v1124 = vadd.f32 %v832, %v1123
        %v1125 = vpop.f32.mrb[0].mxu0
        %1126 = vmatprep.mubr.bf16.mxu0 0
        %1127 = vmatmul.mubr.bf16.gmra.mrb[0].mxu0 %v969
        %v1128 = vpop.f32.mrb[0].mxu0
        %v1129 = vadd.f32 %v837, %v1128
        %v1130 = vpop.f32.mrb[0].mxu0
        %v1131 = vpop.f32.mrb[0].mxu0
        %v1132 = vadd.f32 %v840, %v1131
        %v1133 = vpop.f32.mrb[0].mxu0
        %1134 = vdwg.mxu0
        %vm1151 = vcmask 1042432
        %vm1152 = vcmask 1046532
        %vm1153 = vmor %vm1151, %vm1152
        %v1154 = vrot.slane %v143, 5
        %v1155 = vrot.slane %v1154, 4
        %v1156 = vrot.slane %v144, 5
        %v1157 = vsel %vm1153, %v1155, %v1156
        %v1158 = vrot.slane %v1156, 4
        %v1159 = vrot.slane %v145, 5
        %v1160 = vsel %vm1153, %v1158, %v1159
        %v1161 = vrot.slane %v146, 5
        %v1162 = vrot.slane %v1161, 4
        %v1163 = vrot.slane %v147, 5
        %v1164 = vsel %vm1153, %v1162, %v1163
        %v1165 = vrot.slane %v1163, 4
        %v1166 = vrot.slane %v148, 5
        %v1167 = vsel %vm1153, %v1165, %v1166
        %v1168 = vrot.slane %v149, 5
        %v1169 = vrot.slane %v1168, 4
        %v1170 = vrot.slane %v150, 5
        %v1171 = vsel %vm1153, %v1169, %v1170
        %v1172 = vrot.slane %v1170, 4
        %v1173 = vrot.slane %v151, 5
        %v1174 = vsel %vm1153, %v1172, %v1173
        %v1175 = vrot.slane %v152, 5
        %v1176 = vrot.slane %v1175, 4
        %v1177 = vrot.slane %v153, 5
        %v1178 = vsel %vm1153, %v1176, %v1177
        %v1179 = vrot.slane %v1177, 4
        %v1180 = vrot.slane %v154, 5
        %v1181 = vsel %vm1153, %v1179, %v1180
        %v1182 = vrot.slane %v155, 5
        %v1183 = vrot.slane %v1182, 4
        %v1184 = vrot.slane %v156, 5
        %v1185 = vsel %vm1153, %v1183, %v1184
        %v1186 = vrot.slane %v1184, 4
        %v1187 = vrot.slane %v157, 5
        %v1188 = vsel %vm1153, %v1186, %v1187
        %v1189 = vrot.slane %v158, 5
        %v1190 = vrot.slane %v1189, 4
        %v1191 = vrot.slane %v159, 5
        %v1192 = vsel %vm1153, %v1190, %v1191
        %v1193 = vrot.slane %v1191, 4
        %v1194 = vrot.slane %v160, 5
        %v1195 = vsel %vm1153, %v1193, %v1194
        %v1196 = vrot.slane %v161, 5
        %v1197 = vrot.slane %v1196, 4
        %v1198 = vrot.slane %v162, 5
        %v1199 = vsel %vm1153, %v1197, %v1198
        %v1200 = vrot.slane %v1198, 4
        %v1201 = vrot.slane %v163, 5
        %v1202 = vsel %vm1153, %v1200, %v1201
        %v1203 = vrot.slane %v164, 5
        %v1204 = vrot.slane %v1203, 4
        %v1205 = vrot.slane %v165, 5
        %v1206 = vsel %vm1153, %v1204, %v1205
        %v1207 = vrot.slane %v1205, 4
        %v1208 = vrot.slane %v166, 5
        %v1209 = vsel %vm1153, %v1207, %v1208
        %v1210 = vrot.slane %v167, 5
        %v1211 = vrot.slane %v1210, 4
        %v1212 = vrot.slane %v168, 5
        %v1213 = vsel %vm1153, %v1211, %v1212
        %v1214 = vrot.slane %v1212, 4
        %v1215 = vrot.slane %v169, 5
        %v1216 = vsel %vm1153, %v1214, %v1215
        %v1217 = vrot.slane %v170, 5
        %v1218 = vrot.slane %v1217, 4
        %v1219 = vrot.slane %v171, 5
        %v1220 = vsel %vm1153, %v1218, %v1219
        %v1221 = vrot.slane %v1219, 4
        %v1222 = vrot.slane %v172, 5
        %v1223 = vsel %vm1153, %v1221, %v1222
        %v1224 = vrot.slane %v173, 5
        %v1225 = vrot.slane %v1224, 4
        %v1226 = vrot.slane %v174, 5
        %v1227 = vsel %vm1153, %v1225, %v1226
        %v1228 = vrot.slane %v1226, 4
        %v1229 = vrot.slane %v175, 5
        %v1230 = vsel %vm1153, %v1228, %v1229
        %v1231 = vrot.slane %v176, 5
        %v1232 = vrot.slane %v1231, 4
        %v1233 = vrot.slane %v177, 5
        %v1234 = vsel %vm1153, %v1232, %v1233
        %v1235 = vrot.slane %v1233, 4
        %v1236 = vrot.slane %v178, 5
        %v1237 = vsel %vm1153, %v1235, %v1236
        %v1238 = vrot.slane %v179, 5
        %v1239 = vrot.slane %v1238, 4
        %v1240 = vrot.slane %v180, 5
        %v1241 = vsel %vm1153, %v1239, %v1240
        %v1242 = vrot.slane %v1240, 4
        %v1243 = vrot.slane %v181, 5
        %v1244 = vsel %vm1153, %v1242, %v1243
        %v1245 = vrot.slane %v182, 5
        %v1246 = vrot.slane %v1245, 4
        %v1247 = vrot.slane %v183, 5
        %v1248 = vsel %vm1153, %v1246, %v1247
        %v1249 = vrot.slane %v1247, 4
        %v1250 = vrot.slane %v184, 5
        %v1251 = vsel %vm1153, %v1249, %v1250
        %v1252 = vrot.slane %v185, 5
        %v1253 = vrot.slane %v1252, 4
        %v1254 = vrot.slane %v186, 5
        %v1255 = vsel %vm1153, %v1253, %v1254
        %v1256 = vrot.slane %v1254, 4
        %v1257 = vrot.slane %v187, 5
        %v1258 = vsel %vm1153, %v1256, %v1257
        %v1259 = vrot.slane %v188, 5
        %v1260 = vrot.slane %v1259, 4
        %v1261 = vrot.slane %v189, 5
        %v1262 = vsel %vm1153, %v1260, %v1261
        %v1263 = vrot.slane %v1261, 4
        %v1264 = vrot.slane %v190, 5
        %v1265 = vsel %vm1153, %v1263, %v1264
        %s1266 = scalar_lea.vmem %s1, 4
        %v1267 = vld [vmem:[%s1266] sm:$0x3]
        %v1268 = vunpack.c.l.b16 %v1157
        %v1269 = vunpack.c.l.b16 %v1160
        %v1270 = vunpack.c.l.b16 %v1164
        %v1271 = vunpack.c.l.b16 %v1167
        %v1272 = vunpack.c.l.b16 %v1171
        %v1273 = vunpack.c.l.b16 %v1174
        %v1274 = vunpack.c.l.b16 %v1178
        %v1275 = vunpack.c.l.b16 %v1181
        %v1276 = vunpack.c.l.b16 %v1185
        %v1277 = vunpack.c.l.b16 %v1188
        %v1278 = vunpack.c.l.b16 %v1192
        %v1279 = vunpack.c.l.b16 %v1195
        %v1280 = vunpack.c.l.b16 %v1199
        %v1281 = vunpack.c.l.b16 %v1202
        %v1282 = vunpack.c.l.b16 %v1206
        %v1283 = vunpack.c.l.b16 %v1209
        %v1284 = vunpack.c.l.b16 %v1213
        %v1285 = vunpack.c.l.b16 %v1216
        %v1286 = vunpack.c.l.b16 %v1220
        %v1287 = vunpack.c.l.b16 %v1223
        %v1288 = vunpack.c.l.b16 %v1227
        %v1289 = vunpack.c.l.b16 %v1230
        %v1290 = vunpack.c.l.b16 %v1234
        %v1291 = vunpack.c.l.b16 %v1237
        %v1292 = vunpack.c.l.b16 %v1241
        %v1293 = vunpack.c.l.b16 %v1244
        %v1294 = vunpack.c.l.b16 %v1248
        %v1295 = vunpack.c.l.b16 %v1251
        %v1296 = vunpack.c.l.b16 %v1255
        %v1297 = vunpack.c.l.b16 %v1258
        %v1298 = vunpack.c.l.b16 %v1262
        %v1299 = vunpack.c.l.b16 %v1265
        %v1300 = vpack.c.b16 %v1269, %v1268
        %v1301 = vpack.c.b16 %v1271, %v1270
        %v1302 = vpack.c.b16 %v1273, %v1272
        %v1303 = vpack.c.b16 %v1275, %v1274
        %v1304 = vpack.c.b16 %v1277, %v1276
        %v1305 = vpack.c.b16 %v1279, %v1278
        %v1306 = vpack.c.b16 %v1281, %v1280
        %v1307 = vpack.c.b16 %v1283, %v1282
        %v1308 = vpack.c.b16 %v1285, %v1284
        %v1309 = vpack.c.b16 %v1287, %v1286
        %v1310 = vpack.c.b16 %v1289, %v1288
        %v1311 = vpack.c.b16 %v1291, %v1290
        %v1312 = vpack.c.b16 %v1293, %v1292
        %v1313 = vpack.c.b16 %v1295, %v1294
        %v1314 = vpack.c.b16 %v1297, %v1296
        %v1315 = vpack.c.b16 %v1299, %v1298
        %v1317 = vsel %vm629, %v1300, 0
        %v1320 = vsel %vm629, %v1301, 0
        %v1323 = vsel %vm629, %v1302, 0
        %v1326 = vsel %vm629, %v1303, 0
        %v1329 = vsel %vm629, %v1304, 0
        %v1332 = vsel %vm629, %v1305, 0
        %v1335 = vsel %vm629, %v1306, 0
        %v1338 = vsel %vm629, %v1307, 0
        %v1341 = vsel %vm629, %v1308, 0
        %v1344 = vsel %vm629, %v1309, 0
        %v1347 = vsel %vm629, %v1310, 0
        %v1350 = vsel %vm629, %v1311, 0
        %v1353 = vsel %vm629, %v1312, 0
        %v1356 = vsel %vm629, %v1313, 0
        %v1359 = vsel %vm629, %v1314, 0
        %v1362 = vsel %vm629, %v1315, 0
        %v1365 = vsel %vm678, %v1267, 0
        %1367 = vmatprep.subr.bf16.mxu0 0
        %1368 = vmatpush1.bf16.msra.mxu0 %v1365
        %1369 = vmatprep.subr.bf16.mxu0 0
        %1370 = vmatpush1.bf16.msra.mxu0 0
        %1371 = vmatprep.subr.bf16.mxu0 0
        %1372 = vmatpush1.bf16.msra.mxu0 0
        %1373 = vmatprep.subr.bf16.mxu0 0
        %1374 = vmatpush1.bf16.msra.mxu0 0
        %1375 = vmatprep.subr.bf16.mxu0 0
        %1376 = vmatpush1.bf16.msra.mxu0 0
        %1377 = vmatprep.subr.bf16.mxu0 0
        %1378 = vmatpush1.bf16.msra.mxu0 0
        %1379 = vmatprep.subr.bf16.mxu0 0
        %1380 = vmatpush1.bf16.msra.mxu0 0
        %1381 = vmatprep.subr.bf16.mxu0 0
        %1382 = vmatpush1.bf16.msra.mxu0 0
        %1383 = vmatprep.subr.bf16.mxu0 0
        %1384 = vmatpush1.bf16.msra.mxu0 0
        %1385 = vmatprep.subr.bf16.mxu0 0
        %1386 = vmatpush1.bf16.msra.mxu0 0
        %1387 = vmatprep.subr.bf16.mxu0 0
        %1388 = vmatpush1.bf16.msra.mxu0 0
        %1389 = vmatprep.subr.bf16.mxu0 0
        %1390 = vmatpush1.bf16.msra.mxu0 0
        %1391 = vmatprep.subr.bf16.mxu0 0
        %1392 = vmatpush1.bf16.msra.mxu0 0
        %1393 = vmatprep.subr.bf16.mxu0 0
        %1394 = vmatpush1.bf16.msra.mxu0 0
        %1395 = vmatprep.subr.bf16.mxu0 0
        %1396 = vmatpush1.bf16.msra.mxu0 0
        %1397 = vmatprep.subr.bf16.mxu0 0
        %1398 = vmatpush1.bf16.msra.mxu0 0
        %1399 = vmatprep.mubr.bf16.mxu0 0
        %1400 = vmatmul.mubr.bf16.gmra.mrb[0].mxu0 %v1317
        %v1401 = vpop.f32.mrb[0].mxu0
        %v1402 = vadd.f32 0.0, %v1401
        %v1403 = vpop.f32.mrb[0].mxu0
        %v1404 = vpop.f32.mrb[0].mxu0
        %v1405 = vadd.f32 0.0, %v1404
        %v1406 = vpop.f32.mrb[0].mxu0
        %1407 = vmatprep.mubr.bf16.mxu0 0
        %1408 = vmatmul.mubr.bf16.gmra.mrb[0].mxu0 %v1320
        %v1409 = vpop.f32.mrb[0].mxu0
        %v1410 = vadd.f32 0.0, %v1409
        %v1411 = vpop.f32.mrb[0].mxu0
        %v1412 = vpop.f32.mrb[0].mxu0
        %v1413 = vadd.f32 0.0, %v1412
        %v1414 = vpop.f32.mrb[0].mxu0
        %1415 = vmatprep.mubr.bf16.mxu0 0
        %1416 = vmatmul.mubr.bf16.gmra.mrb[0].mxu0 %v1323
        %v1417 = vpop.f32.mrb[0].mxu0
        %v1418 = vadd.f32 0.0, %v1417
        %v1419 = vpop.f32.mrb[0].mxu0
        %v1420 = vpop.f32.mrb[0].mxu0
        %v1421 = vadd.f32 0.0, %v1420
        %v1422 = vpop.f32.mrb[0].mxu0
        %1423 = vmatprep.mubr.bf16.mxu0 0
        %1424 = vmatmul.mubr.bf16.gmra.mrb[0].mxu0 %v1326
        %v1425 = vpop.f32.mrb[0].mxu0
        %v1426 = vadd.f32 0.0, %v1425
        %v1427 = vpop.f32.mrb[0].mxu0
        %v1428 = vpop.f32.mrb[0].mxu0
        %v1429 = vadd.f32 0.0, %v1428
        %v1430 = vpop.f32.mrb[0].mxu0
        %1431 = vmatprep.mubr.bf16.mxu0 0
        %1432 = vmatmul.mubr.bf16.gmra.mrb[0].mxu0 %v1329
        %v1433 = vpop.f32.mrb[0].mxu0
        %v1434 = vadd.f32 0.0, %v1433
        %v1435 = vpop.f32.mrb[0].mxu0
        %v1436 = vpop.f32.mrb[0].mxu0
        %v1437 = vadd.f32 0.0, %v1436
        %v1438 = vpop.f32.mrb[0].mxu0
        %1439 = vmatprep.mubr.bf16.mxu0 0
        %1440 = vmatmul.mubr.bf16.gmra.mrb[0].mxu0 %v1332
        %v1441 = vpop.f32.mrb[0].mxu0
        %v1442 = vadd.f32 0.0, %v1441
        %v1443 = vpop.f32.mrb[0].mxu0
        %v1444 = vpop.f32.mrb[0].mxu0
        %v1445 = vadd.f32 0.0, %v1444
        %v1446 = vpop.f32.mrb[0].mxu0
        %1447 = vmatprep.mubr.bf16.mxu0 0
        %1448 = vmatmul.mubr.bf16.gmra.mrb[0].mxu0 %v1335
        %v1449 = vpop.f32.mrb[0].mxu0
        %v1450 = vadd.f32 0.0, %v1449
        %v1451 = vpop.f32.mrb[0].mxu0
        %v1452 = vpop.f32.mrb[0].mxu0
        %v1453 = vadd.f32 0.0, %v1452
        %v1454 = vpop.f32.mrb[0].mxu0
        %1455 = vmatprep.mubr.bf16.mxu0 0
        %1456 = vmatmul.mubr.bf16.gmra.mrb[0].mxu0 %v1338
        %v1457 = vpop.f32.mrb[0].mxu0
        %v1458 = vadd.f32 0.0, %v1457
        %v1459 = vpop.f32.mrb[0].mxu0
        %v1460 = vpop.f32.mrb[0].mxu0
        %v1461 = vadd.f32 0.0, %v1460
        %v1462 = vpop.f32.mrb[0].mxu0
        %1463 = vmatprep.mubr.bf16.mxu0 0
        %1464 = vmatmul.mubr.bf16.gmra.mrb[0].mxu0 %v1341
        %v1465 = vpop.f32.mrb[0].mxu0
        %v1466 = vadd.f32 0.0, %v1465
        %v1467 = vpop.f32.mrb[0].mxu0
        %v1468 = vpop.f32.mrb[0].mxu0
        %v1469 = vadd.f32 0.0, %v1468
        %v1470 = vpop.f32.mrb[0].mxu0
        %1471 = vmatprep.mubr.bf16.mxu0 0
        %1472 = vmatmul.mubr.bf16.gmra.mrb[0].mxu0 %v1344
        %v1473 = vpop.f32.mrb[0].mxu0
        %v1474 = vadd.f32 0.0, %v1473
        %v1475 = vpop.f32.mrb[0].mxu0
        %v1476 = vpop.f32.mrb[0].mxu0
        %v1477 = vadd.f32 0.0, %v1476
        %v1478 = vpop.f32.mrb[0].mxu0
        %1479 = vmatprep.mubr.bf16.mxu0 0
        %1480 = vmatmul.mubr.bf16.gmra.mrb[0].mxu0 %v1347
        %v1481 = vpop.f32.mrb[0].mxu0
        %v1482 = vadd.f32 0.0, %v1481
        %v1483 = vpop.f32.mrb[0].mxu0
        %v1484 = vpop.f32.mrb[0].mxu0
        %v1485 = vadd.f32 0.0, %v1484
        %v1486 = vpop.f32.mrb[0].mxu0
        %1487 = vmatprep.mubr.bf16.mxu0 0
        %1488 = vmatmul.mubr.bf16.gmra.mrb[0].mxu0 %v1350
        %v1489 = vpop.f32.mrb[0].mxu0
        %v1490 = vadd.f32 0.0, %v1489
        %v1491 = vpop.f32.mrb[0].mxu0
        %v1492 = vpop.f32.mrb[0].mxu0
        %v1493 = vadd.f32 0.0, %v1492
        %v1494 = vpop.f32.mrb[0].mxu0
        %1495 = vmatprep.mubr.bf16.mxu0 0
        %1496 = vmatmul.mubr.bf16.gmra.mrb[0].mxu0 %v1353
        %v1497 = vpop.f32.mrb[0].mxu0
        %v1498 = vadd.f32 0.0, %v1497
        %v1499 = vpop.f32.mrb[0].mxu0
        %v1500 = vpop.f32.mrb[0].mxu0
        %v1501 = vadd.f32 0.0, %v1500
        %v1502 = vpop.f32.mrb[0].mxu0
        %1503 = vmatprep.mubr.bf16.mxu0 0
        %1504 = vmatmul.mubr.bf16.gmra.mrb[0].mxu0 %v1356
        %v1505 = vpop.f32.mrb[0].mxu0
        %v1506 = vadd.f32 0.0, %v1505
        %v1507 = vpop.f32.mrb[0].mxu0
        %v1508 = vpop.f32.mrb[0].mxu0
        %v1509 = vadd.f32 0.0, %v1508
        %v1510 = vpop.f32.mrb[0].mxu0
        %1511 = vmatprep.mubr.bf16.mxu0 0
        %1512 = vmatmul.mubr.bf16.gmra.mrb[0].mxu0 %v1359
        %v1513 = vpop.f32.mrb[0].mxu0
        %v1514 = vadd.f32 0.0, %v1513
        %v1515 = vpop.f32.mrb[0].mxu0
        %v1516 = vpop.f32.mrb[0].mxu0
        %v1517 = vadd.f32 0.0, %v1516
        %v1518 = vpop.f32.mrb[0].mxu0
        %1519 = vmatprep.mubr.bf16.mxu0 0
        %1520 = vmatmul.mubr.bf16.gmra.mrb[0].mxu0 %v1362
        %v1521 = vpop.f32.mrb[0].mxu0
        %v1522 = vadd.f32 0.0, %v1521
        %v1523 = vpop.f32.mrb[0].mxu0
        %v1524 = vpop.f32.mrb[0].mxu0
        %v1525 = vadd.f32 0.0, %v1524
        %v1526 = vpop.f32.mrb[0].mxu0
        %1527 = vdwg.mxu0
        %v1528 = vadd.f32 %v1009, %v1402
        %v1529 = vadd.f32 %v1012, %v1405
        %v1530 = vadd.f32 %v1017, %v1410
        %v1531 = vadd.f32 %v1020, %v1413
        %v1532 = vadd.f32 %v1025, %v1418
        %v1533 = vadd.f32 %v1028, %v1421
        %v1534 = vadd.f32 %v1033, %v1426
        %v1535 = vadd.f32 %v1036, %v1429
        %v1536 = vadd.f32 %v1041, %v1434
        %v1537 = vadd.f32 %v1044, %v1437
        %v1538 = vadd.f32 %v1049, %v1442
        %v1539 = vadd.f32 %v1052, %v1445
        %v1540 = vadd.f32 %v1057, %v1450
        %v1541 = vadd.f32 %v1060, %v1453
        %v1542 = vadd.f32 %v1065, %v1458
        %v1543 = vadd.f32 %v1068, %v1461
        %v1544 = vadd.f32 %v1073, %v1466
        %v1545 = vadd.f32 %v1076, %v1469
        %v1546 = vadd.f32 %v1081, %v1474
        %v1547 = vadd.f32 %v1084, %v1477
        %v1548 = vadd.f32 %v1089, %v1482
        %v1549 = vadd.f32 %v1092, %v1485
        %v1550 = vadd.f32 %v1097, %v1490
        %v1551 = vadd.f32 %v1100, %v1493
        %v1552 = vadd.f32 %v1105, %v1498
        %v1553 = vadd.f32 %v1108, %v1501
        %v1554 = vadd.f32 %v1113, %v1506
        %v1555 = vadd.f32 %v1116, %v1509
        %v1556 = vadd.f32 %v1121, %v1514
        %v1557 = vadd.f32 %v1124, %v1517
        %v1558 = vadd.f32 %v1129, %v1522
        %v1559 = vadd.f32 %v1132, %v1525
        %s1560 = scalar_lea.vmem %s141, 12
        %v1561 = vld [vmem:[%s1560] sm:$0xf]
        %v1562 = vld [vmem:[%s1560 + $0x4] sm:$0xf]
        %v1563 = vld [vmem:[%s1560 + $0x8] sm:$0x1]
        %v1564 = vld [vmem:[%s1560 + $0xc] sm:$0xf]
        %v1565 = vld [vmem:[%s1560 + $0x10] sm:$0xf]
        %v1566 = vld [vmem:[%s1560 + $0x14] sm:$0x1]
        %v1567 = vld [vmem:[%s1560 + $0x18] sm:$0xf]
        %v1568 = vld [vmem:[%s1560 + $0x1c] sm:$0xf]
        %v1569 = vld [vmem:[%s1560 + $0x20] sm:$0x1]
        %v1570 = vld [vmem:[%s1560 + $0x24] sm:$0xf]
        %v1571 = vld [vmem:[%s1560 + $0x28] sm:$0xf]
        %v1572 = vld [vmem:[%s1560 + $0x2c] sm:$0x1]
        %v1573 = vld [vmem:[%s1560 + $0x30] sm:$0xf]
        %v1574 = vld [vmem:[%s1560 + $0x34] sm:$0xf]
        %v1575 = vld [vmem:[%s1560 + $0x38] sm:$0x1]
        %v1576 = vld [vmem:[%s1560 + $0x3c] sm:$0xf]
        %v1577 = vld [vmem:[%s1560 + $0x40] sm:$0xf]
        %v1578 = vld [vmem:[%s1560 + $0x44] sm:$0x1]
        %v1579 = vld [vmem:[%s1560 + $0x48] sm:$0xf]
        %v1580 = vld [vmem:[%s1560 + $0x4c] sm:$0xf]
        %v1581 = vld [vmem:[%s1560 + $0x50] sm:$0x1]
        %v1582 = vld [vmem:[%s1560 + $0x54] sm:$0xf]
        %v1583 = vld [vmem:[%s1560 + $0x58] sm:$0xf]
        %v1584 = vld [vmem:[%s1560 + $0x5c] sm:$0x1]
        %v1585 = vld [vmem:[%s1560 + $0x60] sm:$0xf]
        %v1586 = vld [vmem:[%s1560 + $0x64] sm:$0xf]
        %v1587 = vld [vmem:[%s1560 + $0x68] sm:$0x1]
        %v1588 = vld [vmem:[%s1560 + $0x6c] sm:$0xf]
        %v1589 = vld [vmem:[%s1560 + $0x70] sm:$0xf]
        %v1590 = vld [vmem:[%s1560 + $0x74] sm:$0x1]
        %v1591 = vld [vmem:[%s1560 + $0x78] sm:$0xf]
        %v1592 = vld [vmem:[%s1560 + $0x7c] sm:$0xf]
        %v1593 = vld [vmem:[%s1560 + $0x80] sm:$0x1]
        %v1594 = vld [vmem:[%s1560 + $0x84] sm:$0xf]
        %v1595 = vld [vmem:[%s1560 + $0x88] sm:$0xf]
        %v1596 = vld [vmem:[%s1560 + $0x8c] sm:$0x1]
        %v1597 = vld [vmem:[%s1560 + $0x90] sm:$0xf]
        %v1598 = vld [vmem:[%s1560 + $0x94] sm:$0xf]
        %v1599 = vld [vmem:[%s1560 + $0x98] sm:$0x1]
        %v1600 = vld [vmem:[%s1560 + $0x9c] sm:$0xf]
        %v1601 = vld [vmem:[%s1560 + $0xa0] sm:$0xf]
        %v1602 = vld [vmem:[%s1560 + $0xa4] sm:$0x1]
        %v1603 = vld [vmem:[%s1560 + $0xa8] sm:$0xf]
        %v1604 = vld [vmem:[%s1560 + $0xac] sm:$0xf]
        %v1605 = vld [vmem:[%s1560 + $0xb0] sm:$0x1]
        %v1606 = vld [vmem:[%s1560 + $0xb4] sm:$0xf]
        %v1607 = vld [vmem:[%s1560 + $0xb8] sm:$0xf]
        %v1608 = vld [vmem:[%s1560 + $0xbc] sm:$0x1]
        %s1609 = scalar_lea.vmem %s1, 6
        %v1610 = vld [vmem:[%s1609] sm:$0x3]
        %v1643 = vunpack.c.l.b16 %v1561
        %v1644 = vunpack.c.l.b16 %v1562
        %v1645 = vunpack.c.l.b16 %v1564
        %v1646 = vunpack.c.l.b16 %v1565
        %v1647 = vunpack.c.l.b16 %v1567
        %v1648 = vunpack.c.l.b16 %v1568
        %v1649 = vunpack.c.l.b16 %v1570
        %v1650 = vunpack.c.l.b16 %v1571
        %v1651 = vunpack.c.l.b16 %v1573
        %v1652 = vunpack.c.l.b16 %v1574
        %v1653 = vunpack.c.l.b16 %v1576
        %v1654 = vunpack.c.l.b16 %v1577
        %v1655 = vunpack.c.l.b16 %v1579
        %v1656 = vunpack.c.l.b16 %v1580
        %v1657 = vunpack.c.l.b16 %v1582
        %v1658 = vunpack.c.l.b16 %v1583
        %v1659 = vunpack.c.l.b16 %v1585
        %v1660 = vunpack.c.l.b16 %v1586
        %v1661 = vunpack.c.l.b16 %v1588
        %v1662 = vunpack.c.l.b16 %v1589
        %v1663 = vunpack.c.l.b16 %v1591
        %v1664 = vunpack.c.l.b16 %v1592
        %v1665 = vunpack.c.l.b16 %v1594
        %v1666 = vunpack.c.l.b16 %v1595
        %v1667 = vunpack.c.l.b16 %v1597
        %v1668 = vunpack.c.l.b16 %v1598
        %v1669 = vunpack.c.l.b16 %v1600
        %v1670 = vunpack.c.l.b16 %v1601
        %v1671 = vunpack.c.l.b16 %v1603
        %v1672 = vunpack.c.l.b16 %v1604
        %v1673 = vunpack.c.l.b16 %v1606
        %v1674 = vunpack.c.l.b16 %v1607
        %v1675 = vpack.c.b16 %v1644, %v1643
        %v1676 = vpack.c.b16 %v1646, %v1645
        %v1677 = vpack.c.b16 %v1648, %v1647
        %v1678 = vpack.c.b16 %v1650, %v1649
        %v1679 = vpack.c.b16 %v1652, %v1651
        %v1680 = vpack.c.b16 %v1654, %v1653
        %v1681 = vpack.c.b16 %v1656, %v1655
        %v1682 = vpack.c.b16 %v1658, %v1657
        %v1683 = vpack.c.b16 %v1660, %v1659
        %v1684 = vpack.c.b16 %v1662, %v1661
        %v1685 = vpack.c.b16 %v1664, %v1663
        %v1686 = vpack.c.b16 %v1666, %v1665
        %v1687 = vpack.c.b16 %v1668, %v1667
        %v1688 = vpack.c.b16 %v1670, %v1669
        %v1689 = vpack.c.b16 %v1672, %v1671
        %v1690 = vpack.c.b16 %v1674, %v1673
        %v1692 = vsel %vm629, %v1675, 0
        %v1695 = vsel %vm629, %v1676, 0
        %v1698 = vsel %vm629, %v1677, 0
        %v1701 = vsel %vm629, %v1678, 0
        %v1704 = vsel %vm629, %v1679, 0
        %v1707 = vsel %vm629, %v1680, 0
        %v1710 = vsel %vm629, %v1681, 0
        %v1713 = vsel %vm629, %v1682, 0
        %v1716 = vsel %vm629, %v1683, 0
        %v1719 = vsel %vm629, %v1684, 0
        %v1722 = vsel %vm629, %v1685, 0
        %v1725 = vsel %vm629, %v1686, 0
        %v1728 = vsel %vm629, %v1687, 0
        %v1731 = vsel %vm629, %v1688, 0
        %v1734 = vsel %vm629, %v1689, 0
        %v1737 = vsel %vm629, %v1690, 0
        %v1740 = vsel %vm678, %v1610, 0
        %1742 = vmatprep.subr.bf16.mxu0 0
        %1743 = vmatpush1.bf16.msra.mxu0 %v1740
        %1744 = vmatprep.subr.bf16.mxu0 0
        %1745 = vmatpush1.bf16.msra.mxu0 0
        %1746 = vmatprep.subr.bf16.mxu0 0
        %1747 = vmatpush1.bf16.msra.mxu0 0
        %1748 = vmatprep.subr.bf16.mxu0 0
        %1749 = vmatpush1.bf16.msra.mxu0 0
        %1750 = vmatprep.subr.bf16.mxu0 0
        %1751 = vmatpush1.bf16.msra.mxu0 0
        %1752 = vmatprep.subr.bf16.mxu0 0
        %1753 = vmatpush1.bf16.msra.mxu0 0
        %1754 = vmatprep.subr.bf16.mxu0 0
        %1755 = vmatpush1.bf16.msra.mxu0 0
        %1756 = vmatprep.subr.bf16.mxu0 0
        %1757 = vmatpush1.bf16.msra.mxu0 0
        %1758 = vmatprep.subr.bf16.mxu0 0
        %1759 = vmatpush1.bf16.msra.mxu0 0
        %1760 = vmatprep.subr.bf16.mxu0 0
        %1761 = vmatpush1.bf16.msra.mxu0 0
        %1762 = vmatprep.subr.bf16.mxu0 0
        %1763 = vmatpush1.bf16.msra.mxu0 0
        %1764 = vmatprep.subr.bf16.mxu0 0
        %1765 = vmatpush1.bf16.msra.mxu0 0
        %1766 = vmatprep.subr.bf16.mxu0 0
        %1767 = vmatpush1.bf16.msra.mxu0 0
        %1768 = vmatprep.subr.bf16.mxu0 0
        %1769 = vmatpush1.bf16.msra.mxu0 0
        %1770 = vmatprep.subr.bf16.mxu0 0
        %1771 = vmatpush1.bf16.msra.mxu0 0
        %1772 = vmatprep.subr.bf16.mxu0 0
        %1773 = vmatpush1.bf16.msra.mxu0 0
        %1774 = vmatprep.mubr.bf16.mxu0 0
        %1775 = vmatmul.mubr.bf16.gmra.mrb[0].mxu0 %v1692
        %v1776 = vpop.f32.mrb[0].mxu0
        %v1777 = vadd.f32 0.0, %v1776
        %v1778 = vpop.f32.mrb[0].mxu0
        %v1779 = vpop.f32.mrb[0].mxu0
        %v1780 = vadd.f32 0.0, %v1779
        %v1781 = vpop.f32.mrb[0].mxu0
        %1782 = vmatprep.mubr.bf16.mxu0 0
        %1783 = vmatmul.mubr.bf16.gmra.mrb[0].mxu0 %v1695
        %v1784 = vpop.f32.mrb[0].mxu0
        %v1785 = vadd.f32 0.0, %v1784
        %v1786 = vpop.f32.mrb[0].mxu0
        %v1787 = vpop.f32.mrb[0].mxu0
        %v1788 = vadd.f32 0.0, %v1787
        %v1789 = vpop.f32.mrb[0].mxu0
        %1790 = vmatprep.mubr.bf16.mxu0 0
        %1791 = vmatmul.mubr.bf16.gmra.mrb[0].mxu0 %v1698
        %v1792 = vpop.f32.mrb[0].mxu0
        %v1793 = vadd.f32 0.0, %v1792
        %v1794 = vpop.f32.mrb[0].mxu0
        %v1795 = vpop.f32.mrb[0].mxu0
        %v1796 = vadd.f32 0.0, %v1795
        %v1797 = vpop.f32.mrb[0].mxu0
        %1798 = vmatprep.mubr.bf16.mxu0 0
        %1799 = vmatmul.mubr.bf16.gmra.mrb[0].mxu0 %v1701
        %v1800 = vpop.f32.mrb[0].mxu0
        %v1801 = vadd.f32 0.0, %v1800
        %v1802 = vpop.f32.mrb[0].mxu0
        %v1803 = vpop.f32.mrb[0].mxu0
        %v1804 = vadd.f32 0.0, %v1803
        %v1805 = vpop.f32.mrb[0].mxu0
        %1806 = vmatprep.mubr.bf16.mxu0 0
        %1807 = vmatmul.mubr.bf16.gmra.mrb[0].mxu0 %v1704
        %v1808 = vpop.f32.mrb[0].mxu0
        %v1809 = vadd.f32 0.0, %v1808
        %v1810 = vpop.f32.mrb[0].mxu0
        %v1811 = vpop.f32.mrb[0].mxu0
        %v1812 = vadd.f32 0.0, %v1811
        %v1813 = vpop.f32.mrb[0].mxu0
        %1814 = vmatprep.mubr.bf16.mxu0 0
        %1815 = vmatmul.mubr.bf16.gmra.mrb[0].mxu0 %v1707
        %v1816 = vpop.f32.mrb[0].mxu0
        %v1817 = vadd.f32 0.0, %v1816
        %v1818 = vpop.f32.mrb[0].mxu0
        %v1819 = vpop.f32.mrb[0].mxu0
        %v1820 = vadd.f32 0.0, %v1819
        %v1821 = vpop.f32.mrb[0].mxu0
        %1822 = vmatprep.mubr.bf16.mxu0 0
        %1823 = vmatmul.mubr.bf16.gmra.mrb[0].mxu0 %v1710
        %v1824 = vpop.f32.mrb[0].mxu0
        %v1825 = vadd.f32 0.0, %v1824
        %v1826 = vpop.f32.mrb[0].mxu0
        %v1827 = vpop.f32.mrb[0].mxu0
        %v1828 = vadd.f32 0.0, %v1827
        %v1829 = vpop.f32.mrb[0].mxu0
        %1830 = vmatprep.mubr.bf16.mxu0 0
        %1831 = vmatmul.mubr.bf16.gmra.mrb[0].mxu0 %v1713
        %v1832 = vpop.f32.mrb[0].mxu0
        %v1833 = vadd.f32 0.0, %v1832
        %v1834 = vpop.f32.mrb[0].mxu0
        %v1835 = vpop.f32.mrb[0].mxu0
        %v1836 = vadd.f32 0.0, %v1835
        %v1837 = vpop.f32.mrb[0].mxu0
        %1838 = vmatprep.mubr.bf16.mxu0 0
        %1839 = vmatmul.mubr.bf16.gmra.mrb[0].mxu0 %v1716
        %v1840 = vpop.f32.mrb[0].mxu0
        %v1841 = vadd.f32 0.0, %v1840
        %v1842 = vpop.f32.mrb[0].mxu0
        %v1843 = vpop.f32.mrb[0].mxu0
        %v1844 = vadd.f32 0.0, %v1843
        %v1845 = vpop.f32.mrb[0].mxu0
        %1846 = vmatprep.mubr.bf16.mxu0 0
        %1847 = vmatmul.mubr.bf16.gmra.mrb[0].mxu0 %v1719
        %v1848 = vpop.f32.mrb[0].mxu0
        %v1849 = vadd.f32 0.0, %v1848
        %v1850 = vpop.f32.mrb[0].mxu0
        %v1851 = vpop.f32.mrb[0].mxu0
        %v1852 = vadd.f32 0.0, %v1851
        %v1853 = vpop.f32.mrb[0].mxu0
        %1854 = vmatprep.mubr.bf16.mxu0 0
        %1855 = vmatmul.mubr.bf16.gmra.mrb[0].mxu0 %v1722
        %v1856 = vpop.f32.mrb[0].mxu0
        %v1857 = vadd.f32 0.0, %v1856
        %v1858 = vpop.f32.mrb[0].mxu0
        %v1859 = vpop.f32.mrb[0].mxu0
        %v1860 = vadd.f32 0.0, %v1859
        %v1861 = vpop.f32.mrb[0].mxu0
        %1862 = vmatprep.mubr.bf16.mxu0 0
        %1863 = vmatmul.mubr.bf16.gmra.mrb[0].mxu0 %v1725
        %v1864 = vpop.f32.mrb[0].mxu0
        %v1865 = vadd.f32 0.0, %v1864
        %v1866 = vpop.f32.mrb[0].mxu0
        %v1867 = vpop.f32.mrb[0].mxu0
        %v1868 = vadd.f32 0.0, %v1867
        %v1869 = vpop.f32.mrb[0].mxu0
        %1870 = vmatprep.mubr.bf16.mxu0 0
        %1871 = vmatmul.mubr.bf16.gmra.mrb[0].mxu0 %v1728
        %v1872 = vpop.f32.mrb[0].mxu0
        %v1873 = vadd.f32 0.0, %v1872
        %v1874 = vpop.f32.mrb[0].mxu0
        %v1875 = vpop.f32.mrb[0].mxu0
        %v1876 = vadd.f32 0.0, %v1875
        %v1877 = vpop.f32.mrb[0].mxu0
        %1878 = vmatprep.mubr.bf16.mxu0 0
        %1879 = vmatmul.mubr.bf16.gmra.mrb[0].mxu0 %v1731
        %v1880 = vpop.f32.mrb[0].mxu0
        %v1881 = vadd.f32 0.0, %v1880
        %v1882 = vpop.f32.mrb[0].mxu0
        %v1883 = vpop.f32.mrb[0].mxu0
        %v1884 = vadd.f32 0.0, %v1883
        %v1885 = vpop.f32.mrb[0].mxu0
        %1886 = vmatprep.mubr.bf16.mxu0 0
        %1887 = vmatmul.mubr.bf16.gmra.mrb[0].mxu0 %v1734
        %v1888 = vpop.f32.mrb[0].mxu0
        %v1889 = vadd.f32 0.0, %v1888
        %v1890 = vpop.f32.mrb[0].mxu0
        %v1891 = vpop.f32.mrb[0].mxu0
        %v1892 = vadd.f32 0.0, %v1891
        %v1893 = vpop.f32.mrb[0].mxu0
        %1894 = vmatprep.mubr.bf16.mxu0 0
        %1895 = vmatmul.mubr.bf16.gmra.mrb[0].mxu0 %v1737
        %v1896 = vpop.f32.mrb[0].mxu0
        %v1897 = vadd.f32 0.0, %v1896
        %v1898 = vpop.f32.mrb[0].mxu0
        %v1899 = vpop.f32.mrb[0].mxu0
        %v1900 = vadd.f32 0.0, %v1899
        %v1901 = vpop.f32.mrb[0].mxu0
        %1902 = vdwg.mxu0
        %v1903 = vadd.f32 %v1528, %v1777
        %v1904 = vadd.f32 %v1529, %v1780
        %v1905 = vadd.f32 %v1530, %v1785
        %v1906 = vadd.f32 %v1531, %v1788
        %v1907 = vadd.f32 %v1532, %v1793
        %v1908 = vadd.f32 %v1533, %v1796
        %v1909 = vadd.f32 %v1534, %v1801
        %v1910 = vadd.f32 %v1535, %v1804
        %v1911 = vadd.f32 %v1536, %v1809
        %v1912 = vadd.f32 %v1537, %v1812
        %v1913 = vadd.f32 %v1538, %v1817
        %v1914 = vadd.f32 %v1539, %v1820
        %v1915 = vadd.f32 %v1540, %v1825
        %v1916 = vadd.f32 %v1541, %v1828
        %v1917 = vadd.f32 %v1542, %v1833
        %v1918 = vadd.f32 %v1543, %v1836
        %v1919 = vadd.f32 %v1544, %v1841
        %v1920 = vadd.f32 %v1545, %v1844
        %v1921 = vadd.f32 %v1546, %v1849
        %v1922 = vadd.f32 %v1547, %v1852
        %v1923 = vadd.f32 %v1548, %v1857
        %v1924 = vadd.f32 %v1549, %v1860
        %v1925 = vadd.f32 %v1550, %v1865
        %v1926 = vadd.f32 %v1551, %v1868
        %v1927 = vadd.f32 %v1552, %v1873
        %v1928 = vadd.f32 %v1553, %v1876
        %v1929 = vadd.f32 %v1554, %v1881
        %v1930 = vadd.f32 %v1555, %v1884
        %v1931 = vadd.f32 %v1556, %v1889
        %v1932 = vadd.f32 %v1557, %v1892
        %v1933 = vadd.f32 %v1558, %v1897
        %v1934 = vadd.f32 %v1559, %v1900
        %v1936 = vshrl.u32 %v1561, 16
        %v1938 = vrot.slane %v1936, 4
        %v1939 = vshll.u32 %v1561, 16
        %v1941 = vrot.slane %v1939, 5
        %v1942 = vor.u32 %v1938, %v1941
        %v1943 = vrot.slane %v1942, 4
        %v1945 = vshll.u32 %v1562, 16
        %v1947 = vrot.slane %v1945, 5
        %v1948 = vsel %vm194, %v1943, %v1947
        %v1949 = vshrl.u32 %v1562, 16
        %v1951 = vrot.slane %v1949, 4
        %v1952 = vor.u32 %v1951, %v1947
        %v1953 = vrot.slane %v1952, 4
        %v1955 = vshll.u32 %v1563, 16
        %v1957 = vrot.slane %v1955, 5
        %v1958 = vsel %vm194, %v1953, %v1957
        %v1960 = vshrl.u32 %v1564, 16
        %v1962 = vrot.slane %v1960, 4
        %v1963 = vshll.u32 %v1564, 16
        %v1965 = vrot.slane %v1963, 5
        %v1966 = vor.u32 %v1962, %v1965
        %v1967 = vrot.slane %v1966, 4
        %v1969 = vshll.u32 %v1565, 16
        %v1971 = vrot.slane %v1969, 5
        %v1972 = vsel %vm194, %v1967, %v1971
        %v1973 = vshrl.u32 %v1565, 16
        %v1975 = vrot.slane %v1973, 4
        %v1976 = vor.u32 %v1975, %v1971
        %v1977 = vrot.slane %v1976, 4
        %v1979 = vshll.u32 %v1566, 16
        %v1981 = vrot.slane %v1979, 5
        %v1982 = vsel %vm194, %v1977, %v1981
        %v1984 = vshrl.u32 %v1567, 16
        %v1986 = vrot.slane %v1984, 4
        %v1987 = vshll.u32 %v1567, 16
        %v1989 = vrot.slane %v1987, 5
        %v1990 = vor.u32 %v1986, %v1989
        %v1991 = vrot.slane %v1990, 4
        %v1993 = vshll.u32 %v1568, 16
        %v1995 = vrot.slane %v1993, 5
        %v1996 = vsel %vm194, %v1991, %v1995
        %v1997 = vshrl.u32 %v1568, 16
        %v1999 = vrot.slane %v1997, 4
        %v2000 = vor.u32 %v1999, %v1995
        %v2001 = vrot.slane %v2000, 4
        %v2003 = vshll.u32 %v1569, 16
        %v2005 = vrot.slane %v2003, 5
        %v2006 = vsel %vm194, %v2001, %v2005
        %v2008 = vshrl.u32 %v1570, 16
        %v2010 = vrot.slane %v2008, 4
        %v2011 = vshll.u32 %v1570, 16
        %v2013 = vrot.slane %v2011, 5
        %v2014 = vor.u32 %v2010, %v2013
        %v2015 = vrot.slane %v2014, 4
        %v2017 = vshll.u32 %v1571, 16
        %v2019 = vrot.slane %v2017, 5
        %v2020 = vsel %vm194, %v2015, %v2019
        %v2021 = vshrl.u32 %v1571, 16
        %v2023 = vrot.slane %v2021, 4
        %v2024 = vor.u32 %v2023, %v2019
        %v2025 = vrot.slane %v2024, 4
        %v2027 = vshll.u32 %v1572, 16
        %v2029 = vrot.slane %v2027, 5
        %v2030 = vsel %vm194, %v2025, %v2029
        %v2032 = vshrl.u32 %v1573, 16
        %v2034 = vrot.slane %v2032, 4
        %v2035 = vshll.u32 %v1573, 16
        %v2037 = vrot.slane %v2035, 5
        %v2038 = vor.u32 %v2034, %v2037
        %v2039 = vrot.slane %v2038, 4
        %v2041 = vshll.u32 %v1574, 16
        %v2043 = vrot.slane %v2041, 5
        %v2044 = vsel %vm194, %v2039, %v2043
        %v2045 = vshrl.u32 %v1574, 16
        %v2047 = vrot.slane %v2045, 4
        %v2048 = vor.u32 %v2047, %v2043
        %v2049 = vrot.slane %v2048, 4
        %v2051 = vshll.u32 %v1575, 16
        %v2053 = vrot.slane %v2051, 5
        %v2054 = vsel %vm194, %v2049, %v2053
        %v2056 = vshrl.u32 %v1576, 16
        %v2058 = vrot.slane %v2056, 4
        %v2059 = vshll.u32 %v1576, 16
        %v2061 = vrot.slane %v2059, 5
        %v2062 = vor.u32 %v2058, %v2061
        %v2063 = vrot.slane %v2062, 4
        %v2065 = vshll.u32 %v1577, 16
        %v2067 = vrot.slane %v2065, 5
        %v2068 = vsel %vm194, %v2063, %v2067
        %v2069 = vshrl.u32 %v1577, 16
        %v2071 = vrot.slane %v2069, 4
        %v2072 = vor.u32 %v2071, %v2067
        %v2073 = vrot.slane %v2072, 4
        %v2075 = vshll.u32 %v1578, 16
        %v2077 = vrot.slane %v2075, 5
        %v2078 = vsel %vm194, %v2073, %v2077
        %v2080 = vshrl.u32 %v1579, 16
        %v2082 = vrot.slane %v2080, 4
        %v2083 = vshll.u32 %v1579, 16
        %v2085 = vrot.slane %v2083, 5
        %v2086 = vor.u32 %v2082, %v2085
        %v2087 = vrot.slane %v2086, 4
        %v2089 = vshll.u32 %v1580, 16
        %v2091 = vrot.slane %v2089, 5
        %v2092 = vsel %vm194, %v2087, %v2091
        %v2093 = vshrl.u32 %v1580, 16
        %v2095 = vrot.slane %v2093, 4
        %v2096 = vor.u32 %v2095, %v2091
        %v2097 = vrot.slane %v2096, 4
        %v2099 = vshll.u32 %v1581, 16
        %v2101 = vrot.slane %v2099, 5
        %v2102 = vsel %vm194, %v2097, %v2101
        %v2104 = vshrl.u32 %v1582, 16
        %v2106 = vrot.slane %v2104, 4
        %v2107 = vshll.u32 %v1582, 16
        %v2109 = vrot.slane %v2107, 5
        %v2110 = vor.u32 %v2106, %v2109
        %v2111 = vrot.slane %v2110, 4
        %v2113 = vshll.u32 %v1583, 16
        %v2115 = vrot.slane %v2113, 5
        %v2116 = vsel %vm194, %v2111, %v2115
        %v2117 = vshrl.u32 %v1583, 16
        %v2119 = vrot.slane %v2117, 4
        %v2120 = vor.u32 %v2119, %v2115
        %v2121 = vrot.slane %v2120, 4
        %v2123 = vshll.u32 %v1584, 16
        %v2125 = vrot.slane %v2123, 5
        %v2126 = vsel %vm194, %v2121, %v2125
        %v2128 = vshrl.u32 %v1585, 16
        %v2130 = vrot.slane %v2128, 4
        %v2131 = vshll.u32 %v1585, 16
        %v2133 = vrot.slane %v2131, 5
        %v2134 = vor.u32 %v2130, %v2133
        %v2135 = vrot.slane %v2134, 4
        %v2137 = vshll.u32 %v1586, 16
        %v2139 = vrot.slane %v2137, 5
        %v2140 = vsel %vm194, %v2135, %v2139
        %v2141 = vshrl.u32 %v1586, 16
        %v2143 = vrot.slane %v2141, 4
        %v2144 = vor.u32 %v2143, %v2139
        %v2145 = vrot.slane %v2144, 4
        %v2147 = vshll.u32 %v1587, 16
        %v2149 = vrot.slane %v2147, 5
        %v2150 = vsel %vm194, %v2145, %v2149
        %v2152 = vshrl.u32 %v1588, 16
        %v2154 = vrot.slane %v2152, 4
        %v2155 = vshll.u32 %v1588, 16
        %v2157 = vrot.slane %v2155, 5
        %v2158 = vor.u32 %v2154, %v2157
        %v2159 = vrot.slane %v2158, 4
        %v2161 = vshll.u32 %v1589, 16
        %v2163 = vrot.slane %v2161, 5
        %v2164 = vsel %vm194, %v2159, %v2163
        %v2165 = vshrl.u32 %v1589, 16
        %v2167 = vrot.slane %v2165, 4
        %v2168 = vor.u32 %v2167, %v2163
        %v2169 = vrot.slane %v2168, 4
        %v2171 = vshll.u32 %v1590, 16
        %v2173 = vrot.slane %v2171, 5
        %v2174 = vsel %vm194, %v2169, %v2173
        %v2176 = vshrl.u32 %v1591, 16
        %v2178 = vrot.slane %v2176, 4
        %v2179 = vshll.u32 %v1591, 16
        %v2181 = vrot.slane %v2179, 5
        %v2182 = vor.u32 %v2178, %v2181
        %v2183 = vrot.slane %v2182, 4
        %v2185 = vshll.u32 %v1592, 16
        %v2187 = vrot.slane %v2185, 5
        %v2188 = vsel %vm194, %v2183, %v2187
        %v2189 = vshrl.u32 %v1592, 16
        %v2191 = vrot.slane %v2189, 4
        %v2192 = vor.u32 %v2191, %v2187
        %v2193 = vrot.slane %v2192, 4
        %v2195 = vshll.u32 %v1593, 16
        %v2197 = vrot.slane %v2195, 5
        %v2198 = vsel %vm194, %v2193, %v2197
        %v2200 = vshrl.u32 %v1594, 16
        %v2202 = vrot.slane %v2200, 4
        %v2203 = vshll.u32 %v1594, 16
        %v2205 = vrot.slane %v2203, 5
        %v2206 = vor.u32 %v2202, %v2205
        %v2207 = vrot.slane %v2206, 4
        %v2209 = vshll.u32 %v1595, 16
        %v2211 = vrot.slane %v2209, 5
        %v2212 = vsel %vm194, %v2207, %v2211
        %v2213 = vshrl.u32 %v1595, 16
        %v2215 = vrot.slane %v2213, 4
        %v2216 = vor.u32 %v2215, %v2211
        %v2217 = vrot.slane %v2216, 4
        %v2219 = vshll.u32 %v1596, 16
        %v2221 = vrot.slane %v2219, 5
        %v2222 = vsel %vm194, %v2217, %v2221
        %v2224 = vshrl.u32 %v1597, 16
        %v2226 = vrot.slane %v2224, 4
        %v2227 = vshll.u32 %v1597, 16
        %v2229 = vrot.slane %v2227, 5
        %v2230 = vor.u32 %v2226, %v2229
        %v2231 = vrot.slane %v2230, 4
        %v2233 = vshll.u32 %v1598, 16
        %v2235 = vrot.slane %v2233, 5
        %v2236 = vsel %vm194, %v2231, %v2235
        %v2237 = vshrl.u32 %v1598, 16
        %v2239 = vrot.slane %v2237, 4
        %v2240 = vor.u32 %v2239, %v2235
        %v2241 = vrot.slane %v2240, 4
        %v2243 = vshll.u32 %v1599, 16
        %v2245 = vrot.slane %v2243, 5
        %v2246 = vsel %vm194, %v2241, %v2245
        %v2248 = vshrl.u32 %v1600, 16
        %v2250 = vrot.slane %v2248, 4
        %v2251 = vshll.u32 %v1600, 16
        %v2253 = vrot.slane %v2251, 5
        %v2254 = vor.u32 %v2250, %v2253
        %v2255 = vrot.slane %v2254, 4
        %v2257 = vshll.u32 %v1601, 16
        %v2259 = vrot.slane %v2257, 5
        %v2260 = vsel %vm194, %v2255, %v2259
        %v2261 = vshrl.u32 %v1601, 16
        %v2263 = vrot.slane %v2261, 4
        %v2264 = vor.u32 %v2263, %v2259
        %v2265 = vrot.slane %v2264, 4
        %v2267 = vshll.u32 %v1602, 16
        %v2269 = vrot.slane %v2267, 5
        %v2270 = vsel %vm194, %v2265, %v2269
        %v2272 = vshrl.u32 %v1603, 16
        %v2274 = vrot.slane %v2272, 4
        %v2275 = vshll.u32 %v1603, 16
        %v2277 = vrot.slane %v2275, 5
        %v2278 = vor.u32 %v2274, %v2277
        %v2279 = vrot.slane %v2278, 4
        %v2281 = vshll.u32 %v1604, 16
        %v2283 = vrot.slane %v2281, 5
        %v2284 = vsel %vm194, %v2279, %v2283
        %v2285 = vshrl.u32 %v1604, 16
        %v2287 = vrot.slane %v2285, 4
        %v2288 = vor.u32 %v2287, %v2283
        %v2289 = vrot.slane %v2288, 4
        %v2291 = vshll.u32 %v1605, 16
        %v2293 = vrot.slane %v2291, 5
        %v2294 = vsel %vm194, %v2289, %v2293
        %v2296 = vshrl.u32 %v1606, 16
        %v2298 = vrot.slane %v2296, 4
        %v2299 = vshll.u32 %v1606, 16
        %v2301 = vrot.slane %v2299, 5
        %v2302 = vor.u32 %v2298, %v2301
        %v2303 = vrot.slane %v2302, 4
        %v2305 = vshll.u32 %v1607, 16
        %v2307 = vrot.slane %v2305, 5
        %v2308 = vsel %vm194, %v2303, %v2307
        %v2309 = vshrl.u32 %v1607, 16
        %v2311 = vrot.slane %v2309, 4
        %v2312 = vor.u32 %v2311, %v2307
        %v2313 = vrot.slane %v2312, 4
        %v2315 = vshll.u32 %v1608, 16
        %v2317 = vrot.slane %v2315, 5
        %v2318 = vsel %vm194, %v2313, %v2317
        %s2319 = scalar_lea.vmem %s1, 8
        %v2320 = vld [vmem:[%s2319] sm:$0x3]
        %v2321 = vunpack.c.l.b16 %v1948
        %v2322 = vunpack.c.l.b16 %v1958
        %v2323 = vunpack.c.l.b16 %v1972
        %v2324 = vunpack.c.l.b16 %v1982
        %v2325 = vunpack.c.l.b16 %v1996
        %v2326 = vunpack.c.l.b16 %v2006
        %v2327 = vunpack.c.l.b16 %v2020
        %v2328 = vunpack.c.l.b16 %v2030
        %v2329 = vunpack.c.l.b16 %v2044
        %v2330 = vunpack.c.l.b16 %v2054
        %v2331 = vunpack.c.l.b16 %v2068
        %v2332 = vunpack.c.l.b16 %v2078
        %v2333 = vunpack.c.l.b16 %v2092
        %v2334 = vunpack.c.l.b16 %v2102
        %v2335 = vunpack.c.l.b16 %v2116
        %v2336 = vunpack.c.l.b16 %v2126
        %v2337 = vunpack.c.l.b16 %v2140
        %v2338 = vunpack.c.l.b16 %v2150
        %v2339 = vunpack.c.l.b16 %v2164
        %v2340 = vunpack.c.l.b16 %v2174
        %v2341 = vunpack.c.l.b16 %v2188
        %v2342 = vunpack.c.l.b16 %v2198
        %v2343 = vunpack.c.l.b16 %v2212
        %v2344 = vunpack.c.l.b16 %v2222
        %v2345 = vunpack.c.l.b16 %v2236
        %v2346 = vunpack.c.l.b16 %v2246
        %v2347 = vunpack.c.l.b16 %v2260
        %v2348 = vunpack.c.l.b16 %v2270
        %v2349 = vunpack.c.l.b16 %v2284
        %v2350 = vunpack.c.l.b16 %v2294
        %v2351 = vunpack.c.l.b16 %v2308
        %v2352 = vunpack.c.l.b16 %v2318
        %v2353 = vpack.c.b16 %v2322, %v2321
        %v2354 = vpack.c.b16 %v2324, %v2323
        %v2355 = vpack.c.b16 %v2326, %v2325
        %v2356 = vpack.c.b16 %v2328, %v2327
        %v2357 = vpack.c.b16 %v2330, %v2329
        %v2358 = vpack.c.b16 %v2332, %v2331
        %v2359 = vpack.c.b16 %v2334, %v2333
        %v2360 = vpack.c.b16 %v2336, %v2335
        %v2361 = vpack.c.b16 %v2338, %v2337
        %v2362 = vpack.c.b16 %v2340, %v2339
        %v2363 = vpack.c.b16 %v2342, %v2341
        %v2364 = vpack.c.b16 %v2344, %v2343
        %v2365 = vpack.c.b16 %v2346, %v2345
        %v2366 = vpack.c.b16 %v2348, %v2347
        %v2367 = vpack.c.b16 %v2350, %v2349
        %v2368 = vpack.c.b16 %v2352, %v2351
        %v2370 = vsel %vm629, %v2353, 0
        %v2373 = vsel %vm629, %v2354, 0
        %v2376 = vsel %vm629, %v2355, 0
        %v2379 = vsel %vm629, %v2356, 0
        %v2382 = vsel %vm629, %v2357, 0
        %v2385 = vsel %vm629, %v2358, 0
        %v2388 = vsel %vm629, %v2359, 0
        %v2391 = vsel %vm629, %v2360, 0
        %v2394 = vsel %vm629, %v2361, 0
        %v2397 = vsel %vm629, %v2362, 0
        %v2400 = vsel %vm629, %v2363, 0
        %v2403 = vsel %vm629, %v2364, 0
        %v2406 = vsel %vm629, %v2365, 0
        %v2409 = vsel %vm629, %v2366, 0
        %v2412 = vsel %vm629, %v2367, 0
        %v2415 = vsel %vm629, %v2368, 0
        %v2418 = vsel %vm678, %v2320, 0
        %2420 = vmatprep.subr.bf16.mxu0 0
        %2421 = vmatpush1.bf16.msra.mxu0 %v2418
        %2422 = vmatprep.subr.bf16.mxu0 0
        %2423 = vmatpush1.bf16.msra.mxu0 0
        %2424 = vmatprep.subr.bf16.mxu0 0
        %2425 = vmatpush1.bf16.msra.mxu0 0
        %2426 = vmatprep.subr.bf16.mxu0 0
        %2427 = vmatpush1.bf16.msra.mxu0 0
        %2428 = vmatprep.subr.bf16.mxu0 0
        %2429 = vmatpush1.bf16.msra.mxu0 0
        %2430 = vmatprep.subr.bf16.mxu0 0
        %2431 = vmatpush1.bf16.msra.mxu0 0
        %2432 = vmatprep.subr.bf16.mxu0 0
        %2433 = vmatpush1.bf16.msra.mxu0 0
        %2434 = vmatprep.subr.bf16.mxu0 0
        %2435 = vmatpush1.bf16.msra.mxu0 0
        %2436 = vmatprep.subr.bf16.mxu0 0
        %2437 = vmatpush1.bf16.msra.mxu0 0
        %2438 = vmatprep.subr.bf16.mxu0 0
        %2439 = vmatpush1.bf16.msra.mxu0 0
        %2440 = vmatprep.subr.bf16.mxu0 0
        %2441 = vmatpush1.bf16.msra.mxu0 0
        %2442 = vmatprep.subr.bf16.mxu0 0
        %2443 = vmatpush1.bf16.msra.mxu0 0
        %2444 = vmatprep.subr.bf16.mxu0 0
        %2445 = vmatpush1.bf16.msra.mxu0 0
        %2446 = vmatprep.subr.bf16.mxu0 0
        %2447 = vmatpush1.bf16.msra.mxu0 0
        %2448 = vmatprep.subr.bf16.mxu0 0
        %2449 = vmatpush1.bf16.msra.mxu0 0
        %2450 = vmatprep.subr.bf16.mxu0 0
        %2451 = vmatpush1.bf16.msra.mxu0 0
        %2452 = vmatprep.mubr.bf16.mxu0 0
        %2453 = vmatmul.mubr.bf16.gmra.mrb[0].mxu0 %v2370
        %v2454 = vpop.f32.mrb[0].mxu0
        %v2455 = vadd.f32 0.0, %v2454
        %v2456 = vpop.f32.mrb[0].mxu0
        %v2457 = vpop.f32.mrb[0].mxu0
        %v2458 = vadd.f32 0.0, %v2457
        %v2459 = vpop.f32.mrb[0].mxu0
        %2460 = vmatprep.mubr.bf16.mxu0 0
        %2461 = vmatmul.mubr.bf16.gmra.mrb[0].mxu0 %v2373
        %v2462 = vpop.f32.mrb[0].mxu0
        %v2463 = vadd.f32 0.0, %v2462
        %v2464 = vpop.f32.mrb[0].mxu0
        %v2465 = vpop.f32.mrb[0].mxu0
        %v2466 = vadd.f32 0.0, %v2465
        %v2467 = vpop.f32.mrb[0].mxu0
        %2468 = vmatprep.mubr.bf16.mxu0 0
        %2469 = vmatmul.mubr.bf16.gmra.mrb[0].mxu0 %v2376
        %v2470 = vpop.f32.mrb[0].mxu0
        %v2471 = vadd.f32 0.0, %v2470
        %v2472 = vpop.f32.mrb[0].mxu0
        %v2473 = vpop.f32.mrb[0].mxu0
        %v2474 = vadd.f32 0.0, %v2473
        %v2475 = vpop.f32.mrb[0].mxu0
        %2476 = vmatprep.mubr.bf16.mxu0 0
        %2477 = vmatmul.mubr.bf16.gmra.mrb[0].mxu0 %v2379
        %v2478 = vpop.f32.mrb[0].mxu0
        %v2479 = vadd.f32 0.0, %v2478
        %v2480 = vpop.f32.mrb[0].mxu0
        %v2481 = vpop.f32.mrb[0].mxu0
        %v2482 = vadd.f32 0.0, %v2481
        %v2483 = vpop.f32.mrb[0].mxu0
        %2484 = vmatprep.mubr.bf16.mxu0 0
        %2485 = vmatmul.mubr.bf16.gmra.mrb[0].mxu0 %v2382
        %v2486 = vpop.f32.mrb[0].mxu0
        %v2487 = vadd.f32 0.0, %v2486
        %v2488 = vpop.f32.mrb[0].mxu0
        %v2489 = vpop.f32.mrb[0].mxu0
        %v2490 = vadd.f32 0.0, %v2489
        %v2491 = vpop.f32.mrb[0].mxu0
        %2492 = vmatprep.mubr.bf16.mxu0 0
        %2493 = vmatmul.mubr.bf16.gmra.mrb[0].mxu0 %v2385
        %v2494 = vpop.f32.mrb[0].mxu0
        %v2495 = vadd.f32 0.0, %v2494
        %v2496 = vpop.f32.mrb[0].mxu0
        %v2497 = vpop.f32.mrb[0].mxu0
        %v2498 = vadd.f32 0.0, %v2497
        %v2499 = vpop.f32.mrb[0].mxu0
        %2500 = vmatprep.mubr.bf16.mxu0 0
        %2501 = vmatmul.mubr.bf16.gmra.mrb[0].mxu0 %v2388
        %v2502 = vpop.f32.mrb[0].mxu0
        %v2503 = vadd.f32 0.0, %v2502
        %v2504 = vpop.f32.mrb[0].mxu0
        %v2505 = vpop.f32.mrb[0].mxu0
        %v2506 = vadd.f32 0.0, %v2505
        %v2507 = vpop.f32.mrb[0].mxu0
        %2508 = vmatprep.mubr.bf16.mxu0 0
        %2509 = vmatmul.mubr.bf16.gmra.mrb[0].mxu0 %v2391
        %v2510 = vpop.f32.mrb[0].mxu0
        %v2511 = vadd.f32 0.0, %v2510
        %v2512 = vpop.f32.mrb[0].mxu0
        %v2513 = vpop.f32.mrb[0].mxu0
        %v2514 = vadd.f32 0.0, %v2513
        %v2515 = vpop.f32.mrb[0].mxu0
        %2516 = vmatprep.mubr.bf16.mxu0 0
        %2517 = vmatmul.mubr.bf16.gmra.mrb[0].mxu0 %v2394
        %v2518 = vpop.f32.mrb[0].mxu0
        %v2519 = vadd.f32 0.0, %v2518
        %v2520 = vpop.f32.mrb[0].mxu0
        %v2521 = vpop.f32.mrb[0].mxu0
        %v2522 = vadd.f32 0.0, %v2521
        %v2523 = vpop.f32.mrb[0].mxu0
        %2524 = vmatprep.mubr.bf16.mxu0 0
        %2525 = vmatmul.mubr.bf16.gmra.mrb[0].mxu0 %v2397
        %v2526 = vpop.f32.mrb[0].mxu0
        %v2527 = vadd.f32 0.0, %v2526
        %v2528 = vpop.f32.mrb[0].mxu0
        %v2529 = vpop.f32.mrb[0].mxu0
        %v2530 = vadd.f32 0.0, %v2529
        %v2531 = vpop.f32.mrb[0].mxu0
        %2532 = vmatprep.mubr.bf16.mxu0 0
        %2533 = vmatmul.mubr.bf16.gmra.mrb[0].mxu0 %v2400
        %v2534 = vpop.f32.mrb[0].mxu0
        %v2535 = vadd.f32 0.0, %v2534
        %v2536 = vpop.f32.mrb[0].mxu0
        %v2537 = vpop.f32.mrb[0].mxu0
        %v2538 = vadd.f32 0.0, %v2537
        %v2539 = vpop.f32.mrb[0].mxu0
        %2540 = vmatprep.mubr.bf16.mxu0 0
        %2541 = vmatmul.mubr.bf16.gmra.mrb[0].mxu0 %v2403
        %v2542 = vpop.f32.mrb[0].mxu0
        %v2543 = vadd.f32 0.0, %v2542
        %v2544 = vpop.f32.mrb[0].mxu0
        %v2545 = vpop.f32.mrb[0].mxu0
        %v2546 = vadd.f32 0.0, %v2545
        %v2547 = vpop.f32.mrb[0].mxu0
        %2548 = vmatprep.mubr.bf16.mxu0 0
        %2549 = vmatmul.mubr.bf16.gmra.mrb[0].mxu0 %v2406
        %v2550 = vpop.f32.mrb[0].mxu0
        %v2551 = vadd.f32 0.0, %v2550
        %v2552 = vpop.f32.mrb[0].mxu0
        %v2553 = vpop.f32.mrb[0].mxu0
        %v2554 = vadd.f32 0.0, %v2553
        %v2555 = vpop.f32.mrb[0].mxu0
        %2556 = vmatprep.mubr.bf16.mxu0 0
        %2557 = vmatmul.mubr.bf16.gmra.mrb[0].mxu0 %v2409
        %v2558 = vpop.f32.mrb[0].mxu0
        %v2559 = vadd.f32 0.0, %v2558
        %v2560 = vpop.f32.mrb[0].mxu0
        %v2561 = vpop.f32.mrb[0].mxu0
        %v2562 = vadd.f32 0.0, %v2561
        %v2563 = vpop.f32.mrb[0].mxu0
        %2564 = vmatprep.mubr.bf16.mxu0 0
        %2565 = vmatmul.mubr.bf16.gmra.mrb[0].mxu0 %v2412
        %v2566 = vpop.f32.mrb[0].mxu0
        %v2567 = vadd.f32 0.0, %v2566
        %v2568 = vpop.f32.mrb[0].mxu0
        %v2569 = vpop.f32.mrb[0].mxu0
        %v2570 = vadd.f32 0.0, %v2569
        %v2571 = vpop.f32.mrb[0].mxu0
        %2572 = vmatprep.mubr.bf16.mxu0 0
        %2573 = vmatmul.mubr.bf16.gmra.mrb[0].mxu0 %v2415
        %v2574 = vpop.f32.mrb[0].mxu0
        %v2575 = vadd.f32 0.0, %v2574
        %v2576 = vpop.f32.mrb[0].mxu0
        %v2577 = vpop.f32.mrb[0].mxu0
        %v2578 = vadd.f32 0.0, %v2577
        %v2579 = vpop.f32.mrb[0].mxu0
        %2580 = vdwg.mxu0
        %v2581 = vadd.f32 %v1903, %v2455
        %v2582 = vadd.f32 %v1904, %v2458
        %v2583 = vadd.f32 %v1905, %v2463
        %v2584 = vadd.f32 %v1906, %v2466
        %v2585 = vadd.f32 %v1907, %v2471
        %v2586 = vadd.f32 %v1908, %v2474
        %v2587 = vadd.f32 %v1909, %v2479
        %v2588 = vadd.f32 %v1910, %v2482
        %v2589 = vadd.f32 %v1911, %v2487
        %v2590 = vadd.f32 %v1912, %v2490
        %v2591 = vadd.f32 %v1913, %v2495
        %v2592 = vadd.f32 %v1914, %v2498
        %v2593 = vadd.f32 %v1915, %v2503
        %v2594 = vadd.f32 %v1916, %v2506
        %v2595 = vadd.f32 %v1917, %v2511
        %v2596 = vadd.f32 %v1918, %v2514
        %v2597 = vadd.f32 %v1919, %v2519
        %v2598 = vadd.f32 %v1920, %v2522
        %v2599 = vadd.f32 %v1921, %v2527
        %v2600 = vadd.f32 %v1922, %v2530
        %v2601 = vadd.f32 %v1923, %v2535
        %v2602 = vadd.f32 %v1924, %v2538
        %v2603 = vadd.f32 %v1925, %v2543
        %v2604 = vadd.f32 %v1926, %v2546
        %v2605 = vadd.f32 %v1927, %v2551
        %v2606 = vadd.f32 %v1928, %v2554
        %v2607 = vadd.f32 %v1929, %v2559
        %v2608 = vadd.f32 %v1930, %v2562
        %v2609 = vadd.f32 %v1931, %v2567
        %v2610 = vadd.f32 %v1932, %v2570
        %v2611 = vadd.f32 %v1933, %v2575
        %v2612 = vadd.f32 %v1934, %v2578
        %v2629 = vrot.slane %v1561, 5
        %v2630 = vrot.slane %v2629, 4
        %v2631 = vrot.slane %v1562, 5
        %v2632 = vsel %vm1153, %v2630, %v2631
        %v2633 = vrot.slane %v2631, 4
        %v2634 = vrot.slane %v1563, 5
        %v2635 = vsel %vm1153, %v2633, %v2634
        %v2636 = vrot.slane %v1564, 5
        %v2637 = vrot.slane %v2636, 4
        %v2638 = vrot.slane %v1565, 5
        %v2639 = vsel %vm1153, %v2637, %v2638
        %v2640 = vrot.slane %v2638, 4
        %v2641 = vrot.slane %v1566, 5
        %v2642 = vsel %vm1153, %v2640, %v2641
        %v2643 = vrot.slane %v1567, 5
        %v2644 = vrot.slane %v2643, 4
        %v2645 = vrot.slane %v1568, 5
        %v2646 = vsel %vm1153, %v2644, %v2645
        %v2647 = vrot.slane %v2645, 4
        %v2648 = vrot.slane %v1569, 5
        %v2649 = vsel %vm1153, %v2647, %v2648
        %v2650 = vrot.slane %v1570, 5
        %v2651 = vrot.slane %v2650, 4
        %v2652 = vrot.slane %v1571, 5
        %v2653 = vsel %vm1153, %v2651, %v2652
        %v2654 = vrot.slane %v2652, 4
        %v2655 = vrot.slane %v1572, 5
        %v2656 = vsel %vm1153, %v2654, %v2655
        %v2657 = vrot.slane %v1573, 5
        %v2658 = vrot.slane %v2657, 4
        %v2659 = vrot.slane %v1574, 5
        %v2660 = vsel %vm1153, %v2658, %v2659
        %v2661 = vrot.slane %v2659, 4
        %v2662 = vrot.slane %v1575, 5
        %v2663 = vsel %vm1153, %v2661, %v2662
        %v2664 = vrot.slane %v1576, 5
        %v2665 = vrot.slane %v2664, 4
        %v2666 = vrot.slane %v1577, 5
        %v2667 = vsel %vm1153, %v2665, %v2666
        %v2668 = vrot.slane %v2666, 4
        %v2669 = vrot.slane %v1578, 5
        %v2670 = vsel %vm1153, %v2668, %v2669
        %v2671 = vrot.slane %v1579, 5
        %v2672 = vrot.slane %v2671, 4
        %v2673 = vrot.slane %v1580, 5
        %v2674 = vsel %vm1153, %v2672, %v2673
        %v2675 = vrot.slane %v2673, 4
        %v2676 = vrot.slane %v1581, 5
        %v2677 = vsel %vm1153, %v2675, %v2676
        %v2678 = vrot.slane %v1582, 5
        %v2679 = vrot.slane %v2678, 4
        %v2680 = vrot.slane %v1583, 5
        %v2681 = vsel %vm1153, %v2679, %v2680
        %v2682 = vrot.slane %v2680, 4
        %v2683 = vrot.slane %v1584, 5
        %v2684 = vsel %vm1153, %v2682, %v2683
        %v2685 = vrot.slane %v1585, 5
        %v2686 = vrot.slane %v2685, 4
        %v2687 = vrot.slane %v1586, 5
        %v2688 = vsel %vm1153, %v2686, %v2687
        %v2689 = vrot.slane %v2687, 4
        %v2690 = vrot.slane %v1587, 5
        %v2691 = vsel %vm1153, %v2689, %v2690
        %v2692 = vrot.slane %v1588, 5
        %v2693 = vrot.slane %v2692, 4
        %v2694 = vrot.slane %v1589, 5
        %v2695 = vsel %vm1153, %v2693, %v2694
        %v2696 = vrot.slane %v2694, 4
        %v2697 = vrot.slane %v1590, 5
        %v2698 = vsel %vm1153, %v2696, %v2697
        %v2699 = vrot.slane %v1591, 5
        %v2700 = vrot.slane %v2699, 4
        %v2701 = vrot.slane %v1592, 5
        %v2702 = vsel %vm1153, %v2700, %v2701
        %v2703 = vrot.slane %v2701, 4
        %v2704 = vrot.slane %v1593, 5
        %v2705 = vsel %vm1153, %v2703, %v2704
        %v2706 = vrot.slane %v1594, 5
        %v2707 = vrot.slane %v2706, 4
        %v2708 = vrot.slane %v1595, 5
        %v2709 = vsel %vm1153, %v2707, %v2708
        %v2710 = vrot.slane %v2708, 4
        %v2711 = vrot.slane %v1596, 5
        %v2712 = vsel %vm1153, %v2710, %v2711
        %v2713 = vrot.slane %v1597, 5
        %v2714 = vrot.slane %v2713, 4
        %v2715 = vrot.slane %v1598, 5
        %v2716 = vsel %vm1153, %v2714, %v2715
        %v2717 = vrot.slane %v2715, 4
        %v2718 = vrot.slane %v1599, 5
        %v2719 = vsel %vm1153, %v2717, %v2718
        %v2720 = vrot.slane %v1600, 5
        %v2721 = vrot.slane %v2720, 4
        %v2722 = vrot.slane %v1601, 5
        %v2723 = vsel %vm1153, %v2721, %v2722
        %v2724 = vrot.slane %v2722, 4
        %v2725 = vrot.slane %v1602, 5
        %v2726 = vsel %vm1153, %v2724, %v2725
        %v2727 = vrot.slane %v1603, 5
        %v2728 = vrot.slane %v2727, 4
        %v2729 = vrot.slane %v1604, 5
        %v2730 = vsel %vm1153, %v2728, %v2729
        %v2731 = vrot.slane %v2729, 4
        %v2732 = vrot.slane %v1605, 5
        %v2733 = vsel %vm1153, %v2731, %v2732
        %v2734 = vrot.slane %v1606, 5
        %v2735 = vrot.slane %v2734, 4
        %v2736 = vrot.slane %v1607, 5
        %v2737 = vsel %vm1153, %v2735, %v2736
        %v2738 = vrot.slane %v2736, 4
        %v2739 = vrot.slane %v1608, 5
        %v2740 = vsel %vm1153, %v2738, %v2739
        %s2741 = scalar_lea.vmem %s1, 10
        %v2742 = vld [vmem:[%s2741] sm:$0x3]
        %v2743 = vunpack.c.l.b16 %v2632
        %v2744 = vunpack.c.l.b16 %v2635
        %v2745 = vunpack.c.l.b16 %v2639
        %v2746 = vunpack.c.l.b16 %v2642
        %v2747 = vunpack.c.l.b16 %v2646
        %v2748 = vunpack.c.l.b16 %v2649
        %v2749 = vunpack.c.l.b16 %v2653
        %v2750 = vunpack.c.l.b16 %v2656
        %v2751 = vunpack.c.l.b16 %v2660
        %v2752 = vunpack.c.l.b16 %v2663
        %v2753 = vunpack.c.l.b16 %v2667
        %v2754 = vunpack.c.l.b16 %v2670
        %v2755 = vunpack.c.l.b16 %v2674
        %v2756 = vunpack.c.l.b16 %v2677
        %v2757 = vunpack.c.l.b16 %v2681
        %v2758 = vunpack.c.l.b16 %v2684
        %v2759 = vunpack.c.l.b16 %v2688
        %v2760 = vunpack.c.l.b16 %v2691
        %v2761 = vunpack.c.l.b16 %v2695
        %v2762 = vunpack.c.l.b16 %v2698
        %v2763 = vunpack.c.l.b16 %v2702
        %v2764 = vunpack.c.l.b16 %v2705
        %v2765 = vunpack.c.l.b16 %v2709
        %v2766 = vunpack.c.l.b16 %v2712
        %v2767 = vunpack.c.l.b16 %v2716
        %v2768 = vunpack.c.l.b16 %v2719
        %v2769 = vunpack.c.l.b16 %v2723
        %v2770 = vunpack.c.l.b16 %v2726
        %v2771 = vunpack.c.l.b16 %v2730
        %v2772 = vunpack.c.l.b16 %v2733
        %v2773 = vunpack.c.l.b16 %v2737
        %v2774 = vunpack.c.l.b16 %v2740
        %v2775 = vpack.c.b16 %v2744, %v2743
        %v2776 = vpack.c.b16 %v2746, %v2745
        %v2777 = vpack.c.b16 %v2748, %v2747
        %v2778 = vpack.c.b16 %v2750, %v2749
        %v2779 = vpack.c.b16 %v2752, %v2751
        %v2780 = vpack.c.b16 %v2754, %v2753
        %v2781 = vpack.c.b16 %v2756, %v2755
        %v2782 = vpack.c.b16 %v2758, %v2757
        %v2783 = vpack.c.b16 %v2760, %v2759
        %v2784 = vpack.c.b16 %v2762, %v2761
        %v2785 = vpack.c.b16 %v2764, %v2763
        %v2786 = vpack.c.b16 %v2766, %v2765
        %v2787 = vpack.c.b16 %v2768, %v2767
        %v2788 = vpack.c.b16 %v2770, %v2769
        %v2789 = vpack.c.b16 %v2772, %v2771
        %v2790 = vpack.c.b16 %v2774, %v2773
        %v2792 = vsel %vm629, %v2775, 0
        %v2795 = vsel %vm629, %v2776, 0
        %v2798 = vsel %vm629, %v2777, 0
        %v2801 = vsel %vm629, %v2778, 0
        %v2804 = vsel %vm629, %v2779, 0
        %v2807 = vsel %vm629, %v2780, 0
        %v2810 = vsel %vm629, %v2781, 0
        %v2813 = vsel %vm629, %v2782, 0
        %v2816 = vsel %vm629, %v2783, 0
        %v2819 = vsel %vm629, %v2784, 0
        %v2822 = vsel %vm629, %v2785, 0
        %v2825 = vsel %vm629, %v2786, 0
        %v2828 = vsel %vm629, %v2787, 0
        %v2831 = vsel %vm629, %v2788, 0
        %v2834 = vsel %vm629, %v2789, 0
        %v2837 = vsel %vm629, %v2790, 0
        %v2840 = vsel %vm678, %v2742, 0
        %2842 = vmatprep.subr.bf16.mxu0 0
        %2843 = vmatpush1.bf16.msra.mxu0 %v2840
        %2844 = vmatprep.subr.bf16.mxu0 0
        %2845 = vmatpush1.bf16.msra.mxu0 0
        %2846 = vmatprep.subr.bf16.mxu0 0
        %2847 = vmatpush1.bf16.msra.mxu0 0
        %2848 = vmatprep.subr.bf16.mxu0 0
        %2849 = vmatpush1.bf16.msra.mxu0 0
        %2850 = vmatprep.subr.bf16.mxu0 0
        %2851 = vmatpush1.bf16.msra.mxu0 0
        %2852 = vmatprep.subr.bf16.mxu0 0
        %2853 = vmatpush1.bf16.msra.mxu0 0
        %2854 = vmatprep.subr.bf16.mxu0 0
        %2855 = vmatpush1.bf16.msra.mxu0 0
        %2856 = vmatprep.subr.bf16.mxu0 0
        %2857 = vmatpush1.bf16.msra.mxu0 0
        %2858 = vmatprep.subr.bf16.mxu0 0
        %2859 = vmatpush1.bf16.msra.mxu0 0
        %2860 = vmatprep.subr.bf16.mxu0 0
        %2861 = vmatpush1.bf16.msra.mxu0 0
        %2862 = vmatprep.subr.bf16.mxu0 0
        %2863 = vmatpush1.bf16.msra.mxu0 0
        %2864 = vmatprep.subr.bf16.mxu0 0
        %2865 = vmatpush1.bf16.msra.mxu0 0
        %2866 = vmatprep.subr.bf16.mxu0 0
        %2867 = vmatpush1.bf16.msra.mxu0 0
        %2868 = vmatprep.subr.bf16.mxu0 0
        %2869 = vmatpush1.bf16.msra.mxu0 0
        %2870 = vmatprep.subr.bf16.mxu0 0
        %2871 = vmatpush1.bf16.msra.mxu0 0
        %2872 = vmatprep.subr.bf16.mxu0 0
        %2873 = vmatpush1.bf16.msra.mxu0 0
        %2874 = vmatprep.mubr.bf16.mxu0 0
        %2875 = vmatmul.mubr.bf16.gmra.mrb[0].mxu0 %v2792
        %v2876 = vpop.f32.mrb[0].mxu0
        %v2877 = vadd.f32 0.0, %v2876
        %v2878 = vpop.f32.mrb[0].mxu0
        %v2879 = vpop.f32.mrb[0].mxu0
        %v2880 = vadd.f32 0.0, %v2879
        %v2881 = vpop.f32.mrb[0].mxu0
        %2882 = vmatprep.mubr.bf16.mxu0 0
        %2883 = vmatmul.mubr.bf16.gmra.mrb[0].mxu0 %v2795
        %v2884 = vpop.f32.mrb[0].mxu0
        %v2885 = vadd.f32 0.0, %v2884
        %v2886 = vpop.f32.mrb[0].mxu0
        %v2887 = vpop.f32.mrb[0].mxu0
        %v2888 = vadd.f32 0.0, %v2887
        %v2889 = vpop.f32.mrb[0].mxu0
        %2890 = vmatprep.mubr.bf16.mxu0 0
        %2891 = vmatmul.mubr.bf16.gmra.mrb[0].mxu0 %v2798
        %v2892 = vpop.f32.mrb[0].mxu0
        %v2893 = vadd.f32 0.0, %v2892
        %v2894 = vpop.f32.mrb[0].mxu0
        %v2895 = vpop.f32.mrb[0].mxu0
        %v2896 = vadd.f32 0.0, %v2895
        %v2897 = vpop.f32.mrb[0].mxu0
        %2898 = vmatprep.mubr.bf16.mxu0 0
        %2899 = vmatmul.mubr.bf16.gmra.mrb[0].mxu0 %v2801
        %v2900 = vpop.f32.mrb[0].mxu0
        %v2901 = vadd.f32 0.0, %v2900
        %v2902 = vpop.f32.mrb[0].mxu0
        %v2903 = vpop.f32.mrb[0].mxu0
        %v2904 = vadd.f32 0.0, %v2903
        %v2905 = vpop.f32.mrb[0].mxu0
        %2906 = vmatprep.mubr.bf16.mxu0 0
        %2907 = vmatmul.mubr.bf16.gmra.mrb[0].mxu0 %v2804
        %v2908 = vpop.f32.mrb[0].mxu0
        %v2909 = vadd.f32 0.0, %v2908
        %v2910 = vpop.f32.mrb[0].mxu0
        %v2911 = vpop.f32.mrb[0].mxu0
        %v2912 = vadd.f32 0.0, %v2911
        %v2913 = vpop.f32.mrb[0].mxu0
        %2914 = vmatprep.mubr.bf16.mxu0 0
        %2915 = vmatmul.mubr.bf16.gmra.mrb[0].mxu0 %v2807
        %v2916 = vpop.f32.mrb[0].mxu0
        %v2917 = vadd.f32 0.0, %v2916
        %v2918 = vpop.f32.mrb[0].mxu0
        %v2919 = vpop.f32.mrb[0].mxu0
        %v2920 = vadd.f32 0.0, %v2919
        %v2921 = vpop.f32.mrb[0].mxu0
        %2922 = vmatprep.mubr.bf16.mxu0 0
        %2923 = vmatmul.mubr.bf16.gmra.mrb[0].mxu0 %v2810
        %v2924 = vpop.f32.mrb[0].mxu0
        %v2925 = vadd.f32 0.0, %v2924
        %v2926 = vpop.f32.mrb[0].mxu0
        %v2927 = vpop.f32.mrb[0].mxu0
        %v2928 = vadd.f32 0.0, %v2927
        %v2929 = vpop.f32.mrb[0].mxu0
        %2930 = vmatprep.mubr.bf16.mxu0 0
        %2931 = vmatmul.mubr.bf16.gmra.mrb[0].mxu0 %v2813
        %v2932 = vpop.f32.mrb[0].mxu0
        %v2933 = vadd.f32 0.0, %v2932
        %v2934 = vpop.f32.mrb[0].mxu0
        %v2935 = vpop.f32.mrb[0].mxu0
        %v2936 = vadd.f32 0.0, %v2935
        %v2937 = vpop.f32.mrb[0].mxu0
        %2938 = vmatprep.mubr.bf16.mxu0 0
        %2939 = vmatmul.mubr.bf16.gmra.mrb[0].mxu0 %v2816
        %v2940 = vpop.f32.mrb[0].mxu0
        %v2941 = vadd.f32 0.0, %v2940
        %v2942 = vpop.f32.mrb[0].mxu0
        %v2943 = vpop.f32.mrb[0].mxu0
        %v2944 = vadd.f32 0.0, %v2943
        %v2945 = vpop.f32.mrb[0].mxu0
        %2946 = vmatprep.mubr.bf16.mxu0 0
        %2947 = vmatmul.mubr.bf16.gmra.mrb[0].mxu0 %v2819
        %v2948 = vpop.f32.mrb[0].mxu0
        %v2949 = vadd.f32 0.0, %v2948
        %v2950 = vpop.f32.mrb[0].mxu0
        %v2951 = vpop.f32.mrb[0].mxu0
        %v2952 = vadd.f32 0.0, %v2951
        %v2953 = vpop.f32.mrb[0].mxu0
        %2954 = vmatprep.mubr.bf16.mxu0 0
        %2955 = vmatmul.mubr.bf16.gmra.mrb[0].mxu0 %v2822
        %v2956 = vpop.f32.mrb[0].mxu0
        %v2957 = vadd.f32 0.0, %v2956
        %v2958 = vpop.f32.mrb[0].mxu0
        %v2959 = vpop.f32.mrb[0].mxu0
        %v2960 = vadd.f32 0.0, %v2959
        %v2961 = vpop.f32.mrb[0].mxu0
        %2962 = vmatprep.mubr.bf16.mxu0 0
        %2963 = vmatmul.mubr.bf16.gmra.mrb[0].mxu0 %v2825
        %v2964 = vpop.f32.mrb[0].mxu0
        %v2965 = vadd.f32 0.0, %v2964
        %v2966 = vpop.f32.mrb[0].mxu0
        %v2967 = vpop.f32.mrb[0].mxu0
        %v2968 = vadd.f32 0.0, %v2967
        %v2969 = vpop.f32.mrb[0].mxu0
        %2970 = vmatprep.mubr.bf16.mxu0 0
        %2971 = vmatmul.mubr.bf16.gmra.mrb[0].mxu0 %v2828
        %v2972 = vpop.f32.mrb[0].mxu0
        %v2973 = vadd.f32 0.0, %v2972
        %v2974 = vpop.f32.mrb[0].mxu0
        %v2975 = vpop.f32.mrb[0].mxu0
        %v2976 = vadd.f32 0.0, %v2975
        %v2977 = vpop.f32.mrb[0].mxu0
        %2978 = vmatprep.mubr.bf16.mxu0 0
        %2979 = vmatmul.mubr.bf16.gmra.mrb[0].mxu0 %v2831
        %v2980 = vpop.f32.mrb[0].mxu0
        %v2981 = vadd.f32 0.0, %v2980
        %v2982 = vpop.f32.mrb[0].mxu0
        %v2983 = vpop.f32.mrb[0].mxu0
        %v2984 = vadd.f32 0.0, %v2983
        %v2985 = vpop.f32.mrb[0].mxu0
        %2986 = vmatprep.mubr.bf16.mxu0 0
        %2987 = vmatmul.mubr.bf16.gmra.mrb[0].mxu0 %v2834
        %v2988 = vpop.f32.mrb[0].mxu0
        %v2989 = vadd.f32 0.0, %v2988
        %v2990 = vpop.f32.mrb[0].mxu0
        %v2991 = vpop.f32.mrb[0].mxu0
        %v2992 = vadd.f32 0.0, %v2991
        %v2993 = vpop.f32.mrb[0].mxu0
        %2994 = vmatprep.mubr.bf16.mxu0 0
        %2995 = vmatmul.mubr.bf16.gmra.mrb[0].mxu0 %v2837
        %v2996 = vpop.f32.mrb[0].mxu0
        %v2997 = vadd.f32 0.0, %v2996
        %v2998 = vpop.f32.mrb[0].mxu0
        %v2999 = vpop.f32.mrb[0].mxu0
        %v3000 = vadd.f32 0.0, %v2999
        %v3001 = vpop.f32.mrb[0].mxu0
        %3002 = vdwg.mxu0
        %v3003 = vadd.f32 %v2581, %v2877
        %v3004 = vadd.f32 %v2582, %v2880
        %v3005 = vadd.f32 %v2583, %v2885
        %v3006 = vadd.f32 %v2584, %v2888
        %v3007 = vadd.f32 %v2585, %v2893
        %v3008 = vadd.f32 %v2586, %v2896
        %v3009 = vadd.f32 %v2587, %v2901
        %v3010 = vadd.f32 %v2588, %v2904
        %v3011 = vadd.f32 %v2589, %v2909
        %v3012 = vadd.f32 %v2590, %v2912
        %v3013 = vadd.f32 %v2591, %v2917
        %v3014 = vadd.f32 %v2592, %v2920
        %v3015 = vadd.f32 %v2593, %v2925
        %v3016 = vadd.f32 %v2594, %v2928
        %v3017 = vadd.f32 %v2595, %v2933
        %v3018 = vadd.f32 %v2596, %v2936
        %v3019 = vadd.f32 %v2597, %v2941
        %v3020 = vadd.f32 %v2598, %v2944
        %v3021 = vadd.f32 %v2599, %v2949
        %v3022 = vadd.f32 %v2600, %v2952
        %v3023 = vadd.f32 %v2601, %v2957
        %v3024 = vadd.f32 %v2602, %v2960
        %v3025 = vadd.f32 %v2603, %v2965
        %v3026 = vadd.f32 %v2604, %v2968
        %v3027 = vadd.f32 %v2605, %v2973
        %v3028 = vadd.f32 %v2606, %v2976
        %v3029 = vadd.f32 %v2607, %v2981
        %v3030 = vadd.f32 %v2608, %v2984
        %v3031 = vadd.f32 %v2609, %v2989
        %v3032 = vadd.f32 %v2610, %v2992
        %v3033 = vadd.f32 %v2611, %v2997
        %v3034 = vadd.f32 %v2612, %v3000
        %s3035 = scalar_lea.vmem %s141, 24
        %v3036 = vld [vmem:[%s3035] sm:$0xf]
        %v3037 = vld [vmem:[%s3035 + $0x4] sm:$0xf]
        %v3038 = vld [vmem:[%s3035 + $0x8] sm:$0x1]
        %v3039 = vld [vmem:[%s3035 + $0xc] sm:$0xf]
        %v3040 = vld [vmem:[%s3035 + $0x10] sm:$0xf]
        %v3041 = vld [vmem:[%s3035 + $0x14] sm:$0x1]
        %v3042 = vld [vmem:[%s3035 + $0x18] sm:$0xf]
        %v3043 = vld [vmem:[%s3035 + $0x1c] sm:$0xf]
        %v3044 = vld [vmem:[%s3035 + $0x20] sm:$0x1]
        %v3045 = vld [vmem:[%s3035 + $0x24] sm:$0xf]
        %v3046 = vld [vmem:[%s3035 + $0x28] sm:$0xf]
        %v3047 = vld [vmem:[%s3035 + $0x2c] sm:$0x1]
        %v3048 = vld [vmem:[%s3035 + $0x30] sm:$0xf]
        %v3049 = vld [vmem:[%s3035 + $0x34] sm:$0xf]
        %v3050 = vld [vmem:[%s3035 + $0x38] sm:$0x1]
        %v3051 = vld [vmem:[%s3035 + $0x3c] sm:$0xf]
        %v3052 = vld [vmem:[%s3035 + $0x40] sm:$0xf]
        %v3053 = vld [vmem:[%s3035 + $0x44] sm:$0x1]
        %v3054 = vld [vmem:[%s3035 + $0x48] sm:$0xf]
        %v3055 = vld [vmem:[%s3035 + $0x4c] sm:$0xf]
        %v3056 = vld [vmem:[%s3035 + $0x50] sm:$0x1]
        %v3057 = vld [vmem:[%s3035 + $0x54] sm:$0xf]
        %v3058 = vld [vmem:[%s3035 + $0x58] sm:$0xf]
        %v3059 = vld [vmem:[%s3035 + $0x5c] sm:$0x1]
        %v3060 = vld [vmem:[%s3035 + $0x60] sm:$0xf]
        %v3061 = vld [vmem:[%s3035 + $0x64] sm:$0xf]
        %v3062 = vld [vmem:[%s3035 + $0x68] sm:$0x1]
        %v3063 = vld [vmem:[%s3035 + $0x6c] sm:$0xf]
        %v3064 = vld [vmem:[%s3035 + $0x70] sm:$0xf]
        %v3065 = vld [vmem:[%s3035 + $0x74] sm:$0x1]
        %v3066 = vld [vmem:[%s3035 + $0x78] sm:$0xf]
        %v3067 = vld [vmem:[%s3035 + $0x7c] sm:$0xf]
        %v3068 = vld [vmem:[%s3035 + $0x80] sm:$0x1]
        %v3069 = vld [vmem:[%s3035 + $0x84] sm:$0xf]
        %v3070 = vld [vmem:[%s3035 + $0x88] sm:$0xf]
        %v3071 = vld [vmem:[%s3035 + $0x8c] sm:$0x1]
        %v3072 = vld [vmem:[%s3035 + $0x90] sm:$0xf]
        %v3073 = vld [vmem:[%s3035 + $0x94] sm:$0xf]
        %v3074 = vld [vmem:[%s3035 + $0x98] sm:$0x1]
        %v3075 = vld [vmem:[%s3035 + $0x9c] sm:$0xf]
        %v3076 = vld [vmem:[%s3035 + $0xa0] sm:$0xf]
        %v3077 = vld [vmem:[%s3035 + $0xa4] sm:$0x1]
        %v3078 = vld [vmem:[%s3035 + $0xa8] sm:$0xf]
        %v3079 = vld [vmem:[%s3035 + $0xac] sm:$0xf]
        %v3080 = vld [vmem:[%s3035 + $0xb0] sm:$0x1]
        %v3081 = vld [vmem:[%s3035 + $0xb4] sm:$0xf]
        %v3082 = vld [vmem:[%s3035 + $0xb8] sm:$0xf]
        %v3083 = vld [vmem:[%s3035 + $0xbc] sm:$0x1]
        %s3084 = scalar_lea.vmem %s1, 12
        %v3085 = vld [vmem:[%s3084] sm:$0x3]
        %v3118 = vunpack.c.l.b16 %v3036
        %v3119 = vunpack.c.l.b16 %v3037
        %v3120 = vunpack.c.l.b16 %v3039
        %v3121 = vunpack.c.l.b16 %v3040
        %v3122 = vunpack.c.l.b16 %v3042
        %v3123 = vunpack.c.l.b16 %v3043
        %v3124 = vunpack.c.l.b16 %v3045
        %v3125 = vunpack.c.l.b16 %v3046
        %v3126 = vunpack.c.l.b16 %v3048
        %v3127 = vunpack.c.l.b16 %v3049
        %v3128 = vunpack.c.l.b16 %v3051
        %v3129 = vunpack.c.l.b16 %v3052
        %v3130 = vunpack.c.l.b16 %v3054
        %v3131 = vunpack.c.l.b16 %v3055
        %v3132 = vunpack.c.l.b16 %v3057
        %v3133 = vunpack.c.l.b16 %v3058
        %v3134 = vunpack.c.l.b16 %v3060
        %v3135 = vunpack.c.l.b16 %v3061
        %v3136 = vunpack.c.l.b16 %v3063
        %v3137 = vunpack.c.l.b16 %v3064
        %v3138 = vunpack.c.l.b16 %v3066
        %v3139 = vunpack.c.l.b16 %v3067
        %v3140 = vunpack.c.l.b16 %v3069
        %v3141 = vunpack.c.l.b16 %v3070
        %v3142 = vunpack.c.l.b16 %v3072
        %v3143 = vunpack.c.l.b16 %v3073
        %v3144 = vunpack.c.l.b16 %v3075
        %v3145 = vunpack.c.l.b16 %v3076
        %v3146 = vunpack.c.l.b16 %v3078
        %v3147 = vunpack.c.l.b16 %v3079
        %v3148 = vunpack.c.l.b16 %v3081
        %v3149 = vunpack.c.l.b16 %v3082
        %v3150 = vpack.c.b16 %v3119, %v3118
        %v3151 = vpack.c.b16 %v3121, %v3120
        %v3152 = vpack.c.b16 %v3123, %v3122
        %v3153 = vpack.c.b16 %v3125, %v3124
        %v3154 = vpack.c.b16 %v3127, %v3126
        %v3155 = vpack.c.b16 %v3129, %v3128
        %v3156 = vpack.c.b16 %v3131, %v3130
        %v3157 = vpack.c.b16 %v3133, %v3132
        %v3158 = vpack.c.b16 %v3135, %v3134
        %v3159 = vpack.c.b16 %v3137, %v3136
        %v3160 = vpack.c.b16 %v3139, %v3138
        %v3161 = vpack.c.b16 %v3141, %v3140
        %v3162 = vpack.c.b16 %v3143, %v3142
        %v3163 = vpack.c.b16 %v3145, %v3144
        %v3164 = vpack.c.b16 %v3147, %v3146
        %v3165 = vpack.c.b16 %v3149, %v3148
        %v3167 = vsel %vm629, %v3150, 0
        %v3170 = vsel %vm629, %v3151, 0
        %v3173 = vsel %vm629, %v3152, 0
        %v3176 = vsel %vm629, %v3153, 0
        %v3179 = vsel %vm629, %v3154, 0
        %v3182 = vsel %vm629, %v3155, 0
        %v3185 = vsel %vm629, %v3156, 0
        %v3188 = vsel %vm629, %v3157, 0
        %v3191 = vsel %vm629, %v3158, 0
        %v3194 = vsel %vm629, %v3159, 0
        %v3197 = vsel %vm629, %v3160, 0
        %v3200 = vsel %vm629, %v3161, 0
        %v3203 = vsel %vm629, %v3162, 0
        %v3206 = vsel %vm629, %v3163, 0
        %v3209 = vsel %vm629, %v3164, 0
        %v3212 = vsel %vm629, %v3165, 0
        %v3215 = vsel %vm678, %v3085, 0
        %3217 = vmatprep.subr.bf16.mxu0 0
        %3218 = vmatpush1.bf16.msra.mxu0 %v3215
        %3219 = vmatprep.subr.bf16.mxu0 0
        %3220 = vmatpush1.bf16.msra.mxu0 0
        %3221 = vmatprep.subr.bf16.mxu0 0
        %3222 = vmatpush1.bf16.msra.mxu0 0
        %3223 = vmatprep.subr.bf16.mxu0 0
        %3224 = vmatpush1.bf16.msra.mxu0 0
        %3225 = vmatprep.subr.bf16.mxu0 0
        %3226 = vmatpush1.bf16.msra.mxu0 0
        %3227 = vmatprep.subr.bf16.mxu0 0
        %3228 = vmatpush1.bf16.msra.mxu0 0
        %3229 = vmatprep.subr.bf16.mxu0 0
        %3230 = vmatpush1.bf16.msra.mxu0 0
        %3231 = vmatprep.subr.bf16.mxu0 0
        %3232 = vmatpush1.bf16.msra.mxu0 0
        %3233 = vmatprep.subr.bf16.mxu0 0
        %3234 = vmatpush1.bf16.msra.mxu0 0
        %3235 = vmatprep.subr.bf16.mxu0 0
        %3236 = vmatpush1.bf16.msra.mxu0 0
        %3237 = vmatprep.subr.bf16.mxu0 0
        %3238 = vmatpush1.bf16.msra.mxu0 0
        %3239 = vmatprep.subr.bf16.mxu0 0
        %3240 = vmatpush1.bf16.msra.mxu0 0
        %3241 = vmatprep.subr.bf16.mxu0 0
        %3242 = vmatpush1.bf16.msra.mxu0 0
        %3243 = vmatprep.subr.bf16.mxu0 0
        %3244 = vmatpush1.bf16.msra.mxu0 0
        %3245 = vmatprep.subr.bf16.mxu0 0
        %3246 = vmatpush1.bf16.msra.mxu0 0
        %3247 = vmatprep.subr.bf16.mxu0 0
        %3248 = vmatpush1.bf16.msra.mxu0 0
        %3249 = vmatprep.mubr.bf16.mxu0 0
        %3250 = vmatmul.mubr.bf16.gmra.mrb[0].mxu0 %v3167
        %v3251 = vpop.f32.mrb[0].mxu0
        %v3252 = vadd.f32 0.0, %v3251
        %v3253 = vpop.f32.mrb[0].mxu0
        %v3254 = vpop.f32.mrb[0].mxu0
        %v3255 = vadd.f32 0.0, %v3254
        %v3256 = vpop.f32.mrb[0].mxu0
        %3257 = vmatprep.mubr.bf16.mxu0 0
        %3258 = vmatmul.mubr.bf16.gmra.mrb[0].mxu0 %v3170
        %v3259 = vpop.f32.mrb[0].mxu0
        %v3260 = vadd.f32 0.0, %v3259
        %v3261 = vpop.f32.mrb[0].mxu0
        %v3262 = vpop.f32.mrb[0].mxu0
        %v3263 = vadd.f32 0.0, %v3262
        %v3264 = vpop.f32.mrb[0].mxu0
        %3265 = vmatprep.mubr.bf16.mxu0 0
        %3266 = vmatmul.mubr.bf16.gmra.mrb[0].mxu0 %v3173
        %v3267 = vpop.f32.mrb[0].mxu0
        %v3268 = vadd.f32 0.0, %v3267
        %v3269 = vpop.f32.mrb[0].mxu0
        %v3270 = vpop.f32.mrb[0].mxu0
        %v3271 = vadd.f32 0.0, %v3270
        %v3272 = vpop.f32.mrb[0].mxu0
        %3273 = vmatprep.mubr.bf16.mxu0 0
        %3274 = vmatmul.mubr.bf16.gmra.mrb[0].mxu0 %v3176
        %v3275 = vpop.f32.mrb[0].mxu0
        %v3276 = vadd.f32 0.0, %v3275
        %v3277 = vpop.f32.mrb[0].mxu0
        %v3278 = vpop.f32.mrb[0].mxu0
        %v3279 = vadd.f32 0.0, %v3278
        %v3280 = vpop.f32.mrb[0].mxu0
        %3281 = vmatprep.mubr.bf16.mxu0 0
        %3282 = vmatmul.mubr.bf16.gmra.mrb[0].mxu0 %v3179
        %v3283 = vpop.f32.mrb[0].mxu0
        %v3284 = vadd.f32 0.0, %v3283
        %v3285 = vpop.f32.mrb[0].mxu0
        %v3286 = vpop.f32.mrb[0].mxu0
        %v3287 = vadd.f32 0.0, %v3286
        %v3288 = vpop.f32.mrb[0].mxu0
        %3289 = vmatprep.mubr.bf16.mxu0 0
        %3290 = vmatmul.mubr.bf16.gmra.mrb[0].mxu0 %v3182
        %v3291 = vpop.f32.mrb[0].mxu0
        %v3292 = vadd.f32 0.0, %v3291
        %v3293 = vpop.f32.mrb[0].mxu0
        %v3294 = vpop.f32.mrb[0].mxu0
        %v3295 = vadd.f32 0.0, %v3294
        %v3296 = vpop.f32.mrb[0].mxu0
        %3297 = vmatprep.mubr.bf16.mxu0 0
        %3298 = vmatmul.mubr.bf16.gmra.mrb[0].mxu0 %v3185
        %v3299 = vpop.f32.mrb[0].mxu0
        %v3300 = vadd.f32 0.0, %v3299
        %v3301 = vpop.f32.mrb[0].mxu0
        %v3302 = vpop.f32.mrb[0].mxu0
        %v3303 = vadd.f32 0.0, %v3302
        %v3304 = vpop.f32.mrb[0].mxu0
        %3305 = vmatprep.mubr.bf16.mxu0 0
        %3306 = vmatmul.mubr.bf16.gmra.mrb[0].mxu0 %v3188
        %v3307 = vpop.f32.mrb[0].mxu0
        %v3308 = vadd.f32 0.0, %v3307
        %v3309 = vpop.f32.mrb[0].mxu0
        %v3310 = vpop.f32.mrb[0].mxu0
        %v3311 = vadd.f32 0.0, %v3310
        %v3312 = vpop.f32.mrb[0].mxu0
        %3313 = vmatprep.mubr.bf16.mxu0 0
        %3314 = vmatmul.mubr.bf16.gmra.mrb[0].mxu0 %v3191
        %v3315 = vpop.f32.mrb[0].mxu0
        %v3316 = vadd.f32 0.0, %v3315
        %v3317 = vpop.f32.mrb[0].mxu0
        %v3318 = vpop.f32.mrb[0].mxu0
        %v3319 = vadd.f32 0.0, %v3318
        %v3320 = vpop.f32.mrb[0].mxu0
        %3321 = vmatprep.mubr.bf16.mxu0 0
        %3322 = vmatmul.mubr.bf16.gmra.mrb[0].mxu0 %v3194
        %v3323 = vpop.f32.mrb[0].mxu0
        %v3324 = vadd.f32 0.0, %v3323
        %v3325 = vpop.f32.mrb[0].mxu0
        %v3326 = vpop.f32.mrb[0].mxu0
        %v3327 = vadd.f32 0.0, %v3326
        %v3328 = vpop.f32.mrb[0].mxu0
        %3329 = vmatprep.mubr.bf16.mxu0 0
        %3330 = vmatmul.mubr.bf16.gmra.mrb[0].mxu0 %v3197
        %v3331 = vpop.f32.mrb[0].mxu0
        %v3332 = vadd.f32 0.0, %v3331
        %v3333 = vpop.f32.mrb[0].mxu0
        %v3334 = vpop.f32.mrb[0].mxu0
        %v3335 = vadd.f32 0.0, %v3334
        %v3336 = vpop.f32.mrb[0].mxu0
        %3337 = vmatprep.mubr.bf16.mxu0 0
        %3338 = vmatmul.mubr.bf16.gmra.mrb[0].mxu0 %v3200
        %v3339 = vpop.f32.mrb[0].mxu0
        %v3340 = vadd.f32 0.0, %v3339
        %v3341 = vpop.f32.mrb[0].mxu0
        %v3342 = vpop.f32.mrb[0].mxu0
        %v3343 = vadd.f32 0.0, %v3342
        %v3344 = vpop.f32.mrb[0].mxu0
        %3345 = vmatprep.mubr.bf16.mxu0 0
        %3346 = vmatmul.mubr.bf16.gmra.mrb[0].mxu0 %v3203
        %v3347 = vpop.f32.mrb[0].mxu0
        %v3348 = vadd.f32 0.0, %v3347
        %v3349 = vpop.f32.mrb[0].mxu0
        %v3350 = vpop.f32.mrb[0].mxu0
        %v3351 = vadd.f32 0.0, %v3350
        %v3352 = vpop.f32.mrb[0].mxu0
        %3353 = vmatprep.mubr.bf16.mxu0 0
        %3354 = vmatmul.mubr.bf16.gmra.mrb[0].mxu0 %v3206
        %v3355 = vpop.f32.mrb[0].mxu0
        %v3356 = vadd.f32 0.0, %v3355
        %v3357 = vpop.f32.mrb[0].mxu0
        %v3358 = vpop.f32.mrb[0].mxu0
        %v3359 = vadd.f32 0.0, %v3358
        %v3360 = vpop.f32.mrb[0].mxu0
        %3361 = vmatprep.mubr.bf16.mxu0 0
        %3362 = vmatmul.mubr.bf16.gmra.mrb[0].mxu0 %v3209
        %v3363 = vpop.f32.mrb[0].mxu0
        %v3364 = vadd.f32 0.0, %v3363
        %v3365 = vpop.f32.mrb[0].mxu0
        %v3366 = vpop.f32.mrb[0].mxu0
        %v3367 = vadd.f32 0.0, %v3366
        %v3368 = vpop.f32.mrb[0].mxu0
        %3369 = vmatprep.mubr.bf16.mxu0 0
        %3370 = vmatmul.mubr.bf16.gmra.mrb[0].mxu0 %v3212
        %v3371 = vpop.f32.mrb[0].mxu0
        %v3372 = vadd.f32 0.0, %v3371
        %v3373 = vpop.f32.mrb[0].mxu0
        %v3374 = vpop.f32.mrb[0].mxu0
        %v3375 = vadd.f32 0.0, %v3374
        %v3376 = vpop.f32.mrb[0].mxu0
        %3377 = vdwg.mxu0
        %v3378 = vadd.f32 %v3003, %v3252
        %v3379 = vadd.f32 %v3004, %v3255
        %v3380 = vadd.f32 %v3005, %v3260
        %v3381 = vadd.f32 %v3006, %v3263
        %v3382 = vadd.f32 %v3007, %v3268
        %v3383 = vadd.f32 %v3008, %v3271
        %v3384 = vadd.f32 %v3009, %v3276
        %v3385 = vadd.f32 %v3010, %v3279
        %v3386 = vadd.f32 %v3011, %v3284
        %v3387 = vadd.f32 %v3012, %v3287
        %v3388 = vadd.f32 %v3013, %v3292
        %v3389 = vadd.f32 %v3014, %v3295
        %v3390 = vadd.f32 %v3015, %v3300
        %v3391 = vadd.f32 %v3016, %v3303
        %v3392 = vadd.f32 %v3017, %v3308
        %v3393 = vadd.f32 %v3018, %v3311
        %v3394 = vadd.f32 %v3019, %v3316
        %v3395 = vadd.f32 %v3020, %v3319
        %v3396 = vadd.f32 %v3021, %v3324
        %v3397 = vadd.f32 %v3022, %v3327
        %v3398 = vadd.f32 %v3023, %v3332
        %v3399 = vadd.f32 %v3024, %v3335
        %v3400 = vadd.f32 %v3025, %v3340
        %v3401 = vadd.f32 %v3026, %v3343
        %v3402 = vadd.f32 %v3027, %v3348
        %v3403 = vadd.f32 %v3028, %v3351
        %v3404 = vadd.f32 %v3029, %v3356
        %v3405 = vadd.f32 %v3030, %v3359
        %v3406 = vadd.f32 %v3031, %v3364
        %v3407 = vadd.f32 %v3032, %v3367
        %v3408 = vadd.f32 %v3033, %v3372
        %v3409 = vadd.f32 %v3034, %v3375
        %v3411 = vshrl.u32 %v3036, 16
        %v3413 = vrot.slane %v3411, 4
        %v3414 = vshll.u32 %v3036, 16
        %v3416 = vrot.slane %v3414, 5
        %v3417 = vor.u32 %v3413, %v3416
        %v3418 = vrot.slane %v3417, 4
        %v3420 = vshll.u32 %v3037, 16
        %v3422 = vrot.slane %v3420, 5
        %v3423 = vsel %vm194, %v3418, %v3422
        %v3424 = vshrl.u32 %v3037, 16
        %v3426 = vrot.slane %v3424, 4
        %v3427 = vor.u32 %v3426, %v3422
        %v3428 = vrot.slane %v3427, 4
        %v3430 = vshll.u32 %v3038, 16
        %v3432 = vrot.slane %v3430, 5
        %v3433 = vsel %vm194, %v3428, %v3432
        %v3435 = vshrl.u32 %v3039, 16
        %v3437 = vrot.slane %v3435, 4
        %v3438 = vshll.u32 %v3039, 16
        %v3440 = vrot.slane %v3438, 5
        %v3441 = vor.u32 %v3437, %v3440
        %v3442 = vrot.slane %v3441, 4
        %v3444 = vshll.u32 %v3040, 16
        %v3446 = vrot.slane %v3444, 5
        %v3447 = vsel %vm194, %v3442, %v3446
        %v3448 = vshrl.u32 %v3040, 16
        %v3450 = vrot.slane %v3448, 4
        %v3451 = vor.u32 %v3450, %v3446
        %v3452 = vrot.slane %v3451, 4
        %v3454 = vshll.u32 %v3041, 16
        %v3456 = vrot.slane %v3454, 5
        %v3457 = vsel %vm194, %v3452, %v3456
        %v3459 = vshrl.u32 %v3042, 16
        %v3461 = vrot.slane %v3459, 4
        %v3462 = vshll.u32 %v3042, 16
        %v3464 = vrot.slane %v3462, 5
        %v3465 = vor.u32 %v3461, %v3464
        %v3466 = vrot.slane %v3465, 4
        %v3468 = vshll.u32 %v3043, 16
        %v3470 = vrot.slane %v3468, 5
        %v3471 = vsel %vm194, %v3466, %v3470
        %v3472 = vshrl.u32 %v3043, 16
        %v3474 = vrot.slane %v3472, 4
        %v3475 = vor.u32 %v3474, %v3470
        %v3476 = vrot.slane %v3475, 4
        %v3478 = vshll.u32 %v3044, 16
        %v3480 = vrot.slane %v3478, 5
        %v3481 = vsel %vm194, %v3476, %v3480
        %v3483 = vshrl.u32 %v3045, 16
        %v3485 = vrot.slane %v3483, 4
        %v3486 = vshll.u32 %v3045, 16
        %v3488 = vrot.slane %v3486, 5
        %v3489 = vor.u32 %v3485, %v3488
        %v3490 = vrot.slane %v3489, 4
        %v3492 = vshll.u32 %v3046, 16
        %v3494 = vrot.slane %v3492, 5
        %v3495 = vsel %vm194, %v3490, %v3494
        %v3496 = vshrl.u32 %v3046, 16
        %v3498 = vrot.slane %v3496, 4
        %v3499 = vor.u32 %v3498, %v3494
        %v3500 = vrot.slane %v3499, 4
        %v3502 = vshll.u32 %v3047, 16
        %v3504 = vrot.slane %v3502, 5
        %v3505 = vsel %vm194, %v3500, %v3504
        %v3507 = vshrl.u32 %v3048, 16
        %v3509 = vrot.slane %v3507, 4
        %v3510 = vshll.u32 %v3048, 16
        %v3512 = vrot.slane %v3510, 5
        %v3513 = vor.u32 %v3509, %v3512
        %v3514 = vrot.slane %v3513, 4
        %v3516 = vshll.u32 %v3049, 16
        %v3518 = vrot.slane %v3516, 5
        %v3519 = vsel %vm194, %v3514, %v3518
        %v3520 = vshrl.u32 %v3049, 16
        %v3522 = vrot.slane %v3520, 4
        %v3523 = vor.u32 %v3522, %v3518
        %v3524 = vrot.slane %v3523, 4
        %v3526 = vshll.u32 %v3050, 16
        %v3528 = vrot.slane %v3526, 5
        %v3529 = vsel %vm194, %v3524, %v3528
        %v3531 = vshrl.u32 %v3051, 16
        %v3533 = vrot.slane %v3531, 4
        %v3534 = vshll.u32 %v3051, 16
        %v3536 = vrot.slane %v3534, 5
        %v3537 = vor.u32 %v3533, %v3536
        %v3538 = vrot.slane %v3537, 4
        %v3540 = vshll.u32 %v3052, 16
        %v3542 = vrot.slane %v3540, 5
        %v3543 = vsel %vm194, %v3538, %v3542
        %v3544 = vshrl.u32 %v3052, 16
        %v3546 = vrot.slane %v3544, 4
        %v3547 = vor.u32 %v3546, %v3542
        %v3548 = vrot.slane %v3547, 4
        %v3550 = vshll.u32 %v3053, 16
        %v3552 = vrot.slane %v3550, 5
        %v3553 = vsel %vm194, %v3548, %v3552
        %v3555 = vshrl.u32 %v3054, 16
        %v3557 = vrot.slane %v3555, 4
        %v3558 = vshll.u32 %v3054, 16
        %v3560 = vrot.slane %v3558, 5
        %v3561 = vor.u32 %v3557, %v3560
        %v3562 = vrot.slane %v3561, 4
        %v3564 = vshll.u32 %v3055, 16
        %v3566 = vrot.slane %v3564, 5
        %v3567 = vsel %vm194, %v3562, %v3566
        %v3568 = vshrl.u32 %v3055, 16
        %v3570 = vrot.slane %v3568, 4
        %v3571 = vor.u32 %v3570, %v3566
        %v3572 = vrot.slane %v3571, 4
        %v3574 = vshll.u32 %v3056, 16
        %v3576 = vrot.slane %v3574, 5
        %v3577 = vsel %vm194, %v3572, %v3576
        %v3579 = vshrl.u32 %v3057, 16
        %v3581 = vrot.slane %v3579, 4
        %v3582 = vshll.u32 %v3057, 16
        %v3584 = vrot.slane %v3582, 5
        %v3585 = vor.u32 %v3581, %v3584
        %v3586 = vrot.slane %v3585, 4
        %v3588 = vshll.u32 %v3058, 16
        %v3590 = vrot.slane %v3588, 5
        %v3591 = vsel %vm194, %v3586, %v3590
        %v3592 = vshrl.u32 %v3058, 16
        %v3594 = vrot.slane %v3592, 4
        %v3595 = vor.u32 %v3594, %v3590
        %v3596 = vrot.slane %v3595, 4
        %v3598 = vshll.u32 %v3059, 16
        %v3600 = vrot.slane %v3598, 5
        %v3601 = vsel %vm194, %v3596, %v3600
        %v3603 = vshrl.u32 %v3060, 16
        %v3605 = vrot.slane %v3603, 4
        %v3606 = vshll.u32 %v3060, 16
        %v3608 = vrot.slane %v3606, 5
        %v3609 = vor.u32 %v3605, %v3608
        %v3610 = vrot.slane %v3609, 4
        %v3612 = vshll.u32 %v3061, 16
        %v3614 = vrot.slane %v3612, 5
        %v3615 = vsel %vm194, %v3610, %v3614
        %v3616 = vshrl.u32 %v3061, 16
        %v3618 = vrot.slane %v3616, 4
        %v3619 = vor.u32 %v3618, %v3614
        %v3620 = vrot.slane %v3619, 4
        %v3622 = vshll.u32 %v3062, 16
        %v3624 = vrot.slane %v3622, 5
        %v3625 = vsel %vm194, %v3620, %v3624
        %v3627 = vshrl.u32 %v3063, 16
        %v3629 = vrot.slane %v3627, 4
        %v3630 = vshll.u32 %v3063, 16
        %v3632 = vrot.slane %v3630, 5
        %v3633 = vor.u32 %v3629, %v3632
        %v3634 = vrot.slane %v3633, 4
        %v3636 = vshll.u32 %v3064, 16
        %v3638 = vrot.slane %v3636, 5
        %v3639 = vsel %vm194, %v3634, %v3638
        %v3640 = vshrl.u32 %v3064, 16
        %v3642 = vrot.slane %v3640, 4
        %v3643 = vor.u32 %v3642, %v3638
        %v3644 = vrot.slane %v3643, 4
        %v3646 = vshll.u32 %v3065, 16
        %v3648 = vrot.slane %v3646, 5
        %v3649 = vsel %vm194, %v3644, %v3648
        %v3651 = vshrl.u32 %v3066, 16
        %v3653 = vrot.slane %v3651, 4
        %v3654 = vshll.u32 %v3066, 16
        %v3656 = vrot.slane %v3654, 5
        %v3657 = vor.u32 %v3653, %v3656
        %v3658 = vrot.slane %v3657, 4
        %v3660 = vshll.u32 %v3067, 16
        %v3662 = vrot.slane %v3660, 5
        %v3663 = vsel %vm194, %v3658, %v3662
        %v3664 = vshrl.u32 %v3067, 16
        %v3666 = vrot.slane %v3664, 4
        %v3667 = vor.u32 %v3666, %v3662
        %v3668 = vrot.slane %v3667, 4
        %v3670 = vshll.u32 %v3068, 16
        %v3672 = vrot.slane %v3670, 5
        %v3673 = vsel %vm194, %v3668, %v3672
        %v3675 = vshrl.u32 %v3069, 16
        %v3677 = vrot.slane %v3675, 4
        %v3678 = vshll.u32 %v3069, 16
        %v3680 = vrot.slane %v3678, 5
        %v3681 = vor.u32 %v3677, %v3680
        %v3682 = vrot.slane %v3681, 4
        %v3684 = vshll.u32 %v3070, 16
        %v3686 = vrot.slane %v3684, 5
        %v3687 = vsel %vm194, %v3682, %v3686
        %v3688 = vshrl.u32 %v3070, 16
        %v3690 = vrot.slane %v3688, 4
        %v3691 = vor.u32 %v3690, %v3686
        %v3692 = vrot.slane %v3691, 4
        %v3694 = vshll.u32 %v3071, 16
        %v3696 = vrot.slane %v3694, 5
        %v3697 = vsel %vm194, %v3692, %v3696
        %v3699 = vshrl.u32 %v3072, 16
        %v3701 = vrot.slane %v3699, 4
        %v3702 = vshll.u32 %v3072, 16
        %v3704 = vrot.slane %v3702, 5
        %v3705 = vor.u32 %v3701, %v3704
        %v3706 = vrot.slane %v3705, 4
        %v3708 = vshll.u32 %v3073, 16
        %v3710 = vrot.slane %v3708, 5
        %v3711 = vsel %vm194, %v3706, %v3710
        %v3712 = vshrl.u32 %v3073, 16
        %v3714 = vrot.slane %v3712, 4
        %v3715 = vor.u32 %v3714, %v3710
        %v3716 = vrot.slane %v3715, 4
        %v3718 = vshll.u32 %v3074, 16
        %v3720 = vrot.slane %v3718, 5
        %v3721 = vsel %vm194, %v3716, %v3720
        %v3723 = vshrl.u32 %v3075, 16
        %v3725 = vrot.slane %v3723, 4
        %v3726 = vshll.u32 %v3075, 16
        %v3728 = vrot.slane %v3726, 5
        %v3729 = vor.u32 %v3725, %v3728
        %v3730 = vrot.slane %v3729, 4
        %v3732 = vshll.u32 %v3076, 16
        %v3734 = vrot.slane %v3732, 5
        %v3735 = vsel %vm194, %v3730, %v3734
        %v3736 = vshrl.u32 %v3076, 16
        %v3738 = vrot.slane %v3736, 4
        %v3739 = vor.u32 %v3738, %v3734
        %v3740 = vrot.slane %v3739, 4
        %v3742 = vshll.u32 %v3077, 16
        %v3744 = vrot.slane %v3742, 5
        %v3745 = vsel %vm194, %v3740, %v3744
        %v3747 = vshrl.u32 %v3078, 16
        %v3749 = vrot.slane %v3747, 4
        %v3750 = vshll.u32 %v3078, 16
        %v3752 = vrot.slane %v3750, 5
        %v3753 = vor.u32 %v3749, %v3752
        %v3754 = vrot.slane %v3753, 4
        %v3756 = vshll.u32 %v3079, 16
        %v3758 = vrot.slane %v3756, 5
        %v3759 = vsel %vm194, %v3754, %v3758
        %v3760 = vshrl.u32 %v3079, 16
        %v3762 = vrot.slane %v3760, 4
        %v3763 = vor.u32 %v3762, %v3758
        %v3764 = vrot.slane %v3763, 4
        %v3766 = vshll.u32 %v3080, 16
        %v3768 = vrot.slane %v3766, 5
        %v3769 = vsel %vm194, %v3764, %v3768
        %v3771 = vshrl.u32 %v3081, 16
        %v3773 = vrot.slane %v3771, 4
        %v3774 = vshll.u32 %v3081, 16
        %v3776 = vrot.slane %v3774, 5
        %v3777 = vor.u32 %v3773, %v3776
        %v3778 = vrot.slane %v3777, 4
        %v3780 = vshll.u32 %v3082, 16
        %v3782 = vrot.slane %v3780, 5
        %v3783 = vsel %vm194, %v3778, %v3782
        %v3784 = vshrl.u32 %v3082, 16
        %v3786 = vrot.slane %v3784, 4
        %v3787 = vor.u32 %v3786, %v3782
        %v3788 = vrot.slane %v3787, 4
        %v3790 = vshll.u32 %v3083, 16
        %v3792 = vrot.slane %v3790, 5
        %v3793 = vsel %vm194, %v3788, %v3792
        %s3794 = scalar_lea.vmem %s1, 14
        %v3795 = vld [vmem:[%s3794] sm:$0x3]
        %v3796 = vunpack.c.l.b16 %v3423
        %v3797 = vunpack.c.l.b16 %v3433
        %v3798 = vunpack.c.l.b16 %v3447
        %v3799 = vunpack.c.l.b16 %v3457
        %v3800 = vunpack.c.l.b16 %v3471
        %v3801 = vunpack.c.l.b16 %v3481
        %v3802 = vunpack.c.l.b16 %v3495
        %v3803 = vunpack.c.l.b16 %v3505
        %v3804 = vunpack.c.l.b16 %v3519
        %v3805 = vunpack.c.l.b16 %v3529
        %v3806 = vunpack.c.l.b16 %v3543
        %v3807 = vunpack.c.l.b16 %v3553
        %v3808 = vunpack.c.l.b16 %v3567
        %v3809 = vunpack.c.l.b16 %v3577
        %v3810 = vunpack.c.l.b16 %v3591
        %v3811 = vunpack.c.l.b16 %v3601
        %v3812 = vunpack.c.l.b16 %v3615
        %v3813 = vunpack.c.l.b16 %v3625
        %v3814 = vunpack.c.l.b16 %v3639
        %v3815 = vunpack.c.l.b16 %v3649
        %v3816 = vunpack.c.l.b16 %v3663
        %v3817 = vunpack.c.l.b16 %v3673
        %v3818 = vunpack.c.l.b16 %v3687
        %v3819 = vunpack.c.l.b16 %v3697
        %v3820 = vunpack.c.l.b16 %v3711
        %v3821 = vunpack.c.l.b16 %v3721
        %v3822 = vunpack.c.l.b16 %v3735
        %v3823 = vunpack.c.l.b16 %v3745
        %v3824 = vunpack.c.l.b16 %v3759
        %v3825 = vunpack.c.l.b16 %v3769
        %v3826 = vunpack.c.l.b16 %v3783
        %v3827 = vunpack.c.l.b16 %v3793
        %v3828 = vpack.c.b16 %v3797, %v3796
        %v3829 = vpack.c.b16 %v3799, %v3798
        %v3830 = vpack.c.b16 %v3801, %v3800
        %v3831 = vpack.c.b16 %v3803, %v3802
        %v3832 = vpack.c.b16 %v3805, %v3804
        %v3833 = vpack.c.b16 %v3807, %v3806
        %v3834 = vpack.c.b16 %v3809, %v3808
        %v3835 = vpack.c.b16 %v3811, %v3810
        %v3836 = vpack.c.b16 %v3813, %v3812
        %v3837 = vpack.c.b16 %v3815, %v3814
        %v3838 = vpack.c.b16 %v3817, %v3816
        %v3839 = vpack.c.b16 %v3819, %v3818
        %v3840 = vpack.c.b16 %v3821, %v3820
        %v3841 = vpack.c.b16 %v3823, %v3822
        %v3842 = vpack.c.b16 %v3825, %v3824
        %v3843 = vpack.c.b16 %v3827, %v3826
        %v3845 = vsel %vm629, %v3828, 0
        %v3848 = vsel %vm629, %v3829, 0
        %v3851 = vsel %vm629, %v3830, 0
        %v3854 = vsel %vm629, %v3831, 0
        %v3857 = vsel %vm629, %v3832, 0
        %v3860 = vsel %vm629, %v3833, 0
        %v3863 = vsel %vm629, %v3834, 0
        %v3866 = vsel %vm629, %v3835, 0
        %v3869 = vsel %vm629, %v3836, 0
        %v3872 = vsel %vm629, %v3837, 0
        %v3875 = vsel %vm629, %v3838, 0
        %v3878 = vsel %vm629, %v3839, 0
        %v3881 = vsel %vm629, %v3840, 0
        %v3884 = vsel %vm629, %v3841, 0
        %v3887 = vsel %vm629, %v3842, 0
        %v3890 = vsel %vm629, %v3843, 0
        %v3893 = vsel %vm678, %v3795, 0
        %3895 = vmatprep.subr.bf16.mxu0 0
        %3896 = vmatpush1.bf16.msra.mxu0 %v3893
        %3897 = vmatprep.subr.bf16.mxu0 0
        %3898 = vmatpush1.bf16.msra.mxu0 0
        %3899 = vmatprep.subr.bf16.mxu0 0
        %3900 = vmatpush1.bf16.msra.mxu0 0
        %3901 = vmatprep.subr.bf16.mxu0 0
        %3902 = vmatpush1.bf16.msra.mxu0 0
        %3903 = vmatprep.subr.bf16.mxu0 0
        %3904 = vmatpush1.bf16.msra.mxu0 0
        %3905 = vmatprep.subr.bf16.mxu0 0
        %3906 = vmatpush1.bf16.msra.mxu0 0
        %3907 = vmatprep.subr.bf16.mxu0 0
        %3908 = vmatpush1.bf16.msra.mxu0 0
        %3909 = vmatprep.subr.bf16.mxu0 0
        %3910 = vmatpush1.bf16.msra.mxu0 0
        %3911 = vmatprep.subr.bf16.mxu0 0
        %3912 = vmatpush1.bf16.msra.mxu0 0
        %3913 = vmatprep.subr.bf16.mxu0 0
        %3914 = vmatpush1.bf16.msra.mxu0 0
        %3915 = vmatprep.subr.bf16.mxu0 0
        %3916 = vmatpush1.bf16.msra.mxu0 0
        %3917 = vmatprep.subr.bf16.mxu0 0
        %3918 = vmatpush1.bf16.msra.mxu0 0
        %3919 = vmatprep.subr.bf16.mxu0 0
        %3920 = vmatpush1.bf16.msra.mxu0 0
        %3921 = vmatprep.subr.bf16.mxu0 0
        %3922 = vmatpush1.bf16.msra.mxu0 0
        %3923 = vmatprep.subr.bf16.mxu0 0
        %3924 = vmatpush1.bf16.msra.mxu0 0
        %3925 = vmatprep.subr.bf16.mxu0 0
        %3926 = vmatpush1.bf16.msra.mxu0 0
        %3927 = vmatprep.mubr.bf16.mxu0 0
        %3928 = vmatmul.mubr.bf16.gmra.mrb[0].mxu0 %v3845
        %v3929 = vpop.f32.mrb[0].mxu0
        %v3930 = vadd.f32 0.0, %v3929
        %v3931 = vpop.f32.mrb[0].mxu0
        %v3932 = vpop.f32.mrb[0].mxu0
        %v3933 = vadd.f32 0.0, %v3932
        %v3934 = vpop.f32.mrb[0].mxu0
        %3935 = vmatprep.mubr.bf16.mxu0 0
        %3936 = vmatmul.mubr.bf16.gmra.mrb[0].mxu0 %v3848
        %v3937 = vpop.f32.mrb[0].mxu0
        %v3938 = vadd.f32 0.0, %v3937
        %v3939 = vpop.f32.mrb[0].mxu0
        %v3940 = vpop.f32.mrb[0].mxu0
        %v3941 = vadd.f32 0.0, %v3940
        %v3942 = vpop.f32.mrb[0].mxu0
        %3943 = vmatprep.mubr.bf16.mxu0 0
        %3944 = vmatmul.mubr.bf16.gmra.mrb[0].mxu0 %v3851
        %v3945 = vpop.f32.mrb[0].mxu0
        %v3946 = vadd.f32 0.0, %v3945
        %v3947 = vpop.f32.mrb[0].mxu0
        %v3948 = vpop.f32.mrb[0].mxu0
        %v3949 = vadd.f32 0.0, %v3948
        %v3950 = vpop.f32.mrb[0].mxu0
        %3951 = vmatprep.mubr.bf16.mxu0 0
        %3952 = vmatmul.mubr.bf16.gmra.mrb[0].mxu0 %v3854
        %v3953 = vpop.f32.mrb[0].mxu0
        %v3954 = vadd.f32 0.0, %v3953
        %v3955 = vpop.f32.mrb[0].mxu0
        %v3956 = vpop.f32.mrb[0].mxu0
        %v3957 = vadd.f32 0.0, %v3956
        %v3958 = vpop.f32.mrb[0].mxu0
        %3959 = vmatprep.mubr.bf16.mxu0 0
        %3960 = vmatmul.mubr.bf16.gmra.mrb[0].mxu0 %v3857
        %v3961 = vpop.f32.mrb[0].mxu0
        %v3962 = vadd.f32 0.0, %v3961
        %v3963 = vpop.f32.mrb[0].mxu0
        %v3964 = vpop.f32.mrb[0].mxu0
        %v3965 = vadd.f32 0.0, %v3964
        %v3966 = vpop.f32.mrb[0].mxu0
        %3967 = vmatprep.mubr.bf16.mxu0 0
        %3968 = vmatmul.mubr.bf16.gmra.mrb[0].mxu0 %v3860
        %v3969 = vpop.f32.mrb[0].mxu0
        %v3970 = vadd.f32 0.0, %v3969
        %v3971 = vpop.f32.mrb[0].mxu0
        %v3972 = vpop.f32.mrb[0].mxu0
        %v3973 = vadd.f32 0.0, %v3972
        %v3974 = vpop.f32.mrb[0].mxu0
        %3975 = vmatprep.mubr.bf16.mxu0 0
        %3976 = vmatmul.mubr.bf16.gmra.mrb[0].mxu0 %v3863
        %v3977 = vpop.f32.mrb[0].mxu0
        %v3978 = vadd.f32 0.0, %v3977
        %v3979 = vpop.f32.mrb[0].mxu0
        %v3980 = vpop.f32.mrb[0].mxu0
        %v3981 = vadd.f32 0.0, %v3980
        %v3982 = vpop.f32.mrb[0].mxu0
        %3983 = vmatprep.mubr.bf16.mxu0 0
        %3984 = vmatmul.mubr.bf16.gmra.mrb[0].mxu0 %v3866
        %v3985 = vpop.f32.mrb[0].mxu0
        %v3986 = vadd.f32 0.0, %v3985
        %v3987 = vpop.f32.mrb[0].mxu0
        %v3988 = vpop.f32.mrb[0].mxu0
        %v3989 = vadd.f32 0.0, %v3988
        %v3990 = vpop.f32.mrb[0].mxu0
        %3991 = vmatprep.mubr.bf16.mxu0 0
        %3992 = vmatmul.mubr.bf16.gmra.mrb[0].mxu0 %v3869
        %v3993 = vpop.f32.mrb[0].mxu0
        %v3994 = vadd.f32 0.0, %v3993
        %v3995 = vpop.f32.mrb[0].mxu0
        %v3996 = vpop.f32.mrb[0].mxu0
        %v3997 = vadd.f32 0.0, %v3996
        %v3998 = vpop.f32.mrb[0].mxu0
        %3999 = vmatprep.mubr.bf16.mxu0 0
        %4000 = vmatmul.mubr.bf16.gmra.mrb[0].mxu0 %v3872
        %v4001 = vpop.f32.mrb[0].mxu0
        %v4002 = vadd.f32 0.0, %v4001
        %v4003 = vpop.f32.mrb[0].mxu0
        %v4004 = vpop.f32.mrb[0].mxu0
        %v4005 = vadd.f32 0.0, %v4004
        %v4006 = vpop.f32.mrb[0].mxu0
        %4007 = vmatprep.mubr.bf16.mxu0 0
        %4008 = vmatmul.mubr.bf16.gmra.mrb[0].mxu0 %v3875
        %v4009 = vpop.f32.mrb[0].mxu0
        %v4010 = vadd.f32 0.0, %v4009
        %v4011 = vpop.f32.mrb[0].mxu0
        %v4012 = vpop.f32.mrb[0].mxu0
        %v4013 = vadd.f32 0.0, %v4012
        %v4014 = vpop.f32.mrb[0].mxu0
        %4015 = vmatprep.mubr.bf16.mxu0 0
        %4016 = vmatmul.mubr.bf16.gmra.mrb[0].mxu0 %v3878
        %v4017 = vpop.f32.mrb[0].mxu0
        %v4018 = vadd.f32 0.0, %v4017
        %v4019 = vpop.f32.mrb[0].mxu0
        %v4020 = vpop.f32.mrb[0].mxu0
        %v4021 = vadd.f32 0.0, %v4020
        %v4022 = vpop.f32.mrb[0].mxu0
        %4023 = vmatprep.mubr.bf16.mxu0 0
        %4024 = vmatmul.mubr.bf16.gmra.mrb[0].mxu0 %v3881
        %v4025 = vpop.f32.mrb[0].mxu0
        %v4026 = vadd.f32 0.0, %v4025
        %v4027 = vpop.f32.mrb[0].mxu0
        %v4028 = vpop.f32.mrb[0].mxu0
        %v4029 = vadd.f32 0.0, %v4028
        %v4030 = vpop.f32.mrb[0].mxu0
        %4031 = vmatprep.mubr.bf16.mxu0 0
        %4032 = vmatmul.mubr.bf16.gmra.mrb[0].mxu0 %v3884
        %v4033 = vpop.f32.mrb[0].mxu0
        %v4034 = vadd.f32 0.0, %v4033
        %v4035 = vpop.f32.mrb[0].mxu0
        %v4036 = vpop.f32.mrb[0].mxu0
        %v4037 = vadd.f32 0.0, %v4036
        %v4038 = vpop.f32.mrb[0].mxu0
        %4039 = vmatprep.mubr.bf16.mxu0 0
        %4040 = vmatmul.mubr.bf16.gmra.mrb[0].mxu0 %v3887
        %v4041 = vpop.f32.mrb[0].mxu0
        %v4042 = vadd.f32 0.0, %v4041
        %v4043 = vpop.f32.mrb[0].mxu0
        %v4044 = vpop.f32.mrb[0].mxu0
        %v4045 = vadd.f32 0.0, %v4044
        %v4046 = vpop.f32.mrb[0].mxu0
        %4047 = vmatprep.mubr.bf16.mxu0 0
        %4048 = vmatmul.mubr.bf16.gmra.mrb[0].mxu0 %v3890
        %v4049 = vpop.f32.mrb[0].mxu0
        %v4050 = vadd.f32 0.0, %v4049
        %v4051 = vpop.f32.mrb[0].mxu0
        %v4052 = vpop.f32.mrb[0].mxu0
        %v4053 = vadd.f32 0.0, %v4052
        %v4054 = vpop.f32.mrb[0].mxu0
        %4055 = vdwg.mxu0
        %v4056 = vadd.f32 %v3378, %v3930
        %v4057 = vadd.f32 %v3379, %v3933
        %v4058 = vadd.f32 %v3380, %v3938
        %v4059 = vadd.f32 %v3381, %v3941
        %v4060 = vadd.f32 %v3382, %v3946
        %v4061 = vadd.f32 %v3383, %v3949
        %v4062 = vadd.f32 %v3384, %v3954
        %v4063 = vadd.f32 %v3385, %v3957
        %v4064 = vadd.f32 %v3386, %v3962
        %v4065 = vadd.f32 %v3387, %v3965
        %v4066 = vadd.f32 %v3388, %v3970
        %v4067 = vadd.f32 %v3389, %v3973
        %v4068 = vadd.f32 %v3390, %v3978
        %v4069 = vadd.f32 %v3391, %v3981
        %v4070 = vadd.f32 %v3392, %v3986
        %v4071 = vadd.f32 %v3393, %v3989
        %v4072 = vadd.f32 %v3394, %v3994
        %v4073 = vadd.f32 %v3395, %v3997
        %v4074 = vadd.f32 %v3396, %v4002
        %v4075 = vadd.f32 %v3397, %v4005
        %v4076 = vadd.f32 %v3398, %v4010
        %v4077 = vadd.f32 %v3399, %v4013
        %v4078 = vadd.f32 %v3400, %v4018
        %v4079 = vadd.f32 %v3401, %v4021
        %v4080 = vadd.f32 %v3402, %v4026
        %v4081 = vadd.f32 %v3403, %v4029
        %v4082 = vadd.f32 %v3404, %v4034
        %v4083 = vadd.f32 %v3405, %v4037
        %v4084 = vadd.f32 %v3406, %v4042
        %v4085 = vadd.f32 %v3407, %v4045
        %v4086 = vadd.f32 %v3408, %v4050
        %v4087 = vadd.f32 %v3409, %v4053
        %v4104 = vrot.slane %v3036, 5
        %v4105 = vrot.slane %v4104, 4
        %v4106 = vrot.slane %v3037, 5
        %v4107 = vsel %vm1153, %v4105, %v4106
        %v4108 = vrot.slane %v4106, 4
        %v4109 = vrot.slane %v3038, 5
        %v4110 = vsel %vm1153, %v4108, %v4109
        %v4111 = vrot.slane %v3039, 5
        %v4112 = vrot.slane %v4111, 4
        %v4113 = vrot.slane %v3040, 5
        %v4114 = vsel %vm1153, %v4112, %v4113
        %v4115 = vrot.slane %v4113, 4
        %v4116 = vrot.slane %v3041, 5
        %v4117 = vsel %vm1153, %v4115, %v4116
        %v4118 = vrot.slane %v3042, 5
        %v4119 = vrot.slane %v4118, 4
        %v4120 = vrot.slane %v3043, 5
        %v4121 = vsel %vm1153, %v4119, %v4120
        %v4122 = vrot.slane %v4120, 4
        %v4123 = vrot.slane %v3044, 5
        %v4124 = vsel %vm1153, %v4122, %v4123
        %v4125 = vrot.slane %v3045, 5
        %v4126 = vrot.slane %v4125, 4
        %v4127 = vrot.slane %v3046, 5
        %v4128 = vsel %vm1153, %v4126, %v4127
        %v4129 = vrot.slane %v4127, 4
        %v4130 = vrot.slane %v3047, 5
        %v4131 = vsel %vm1153, %v4129, %v4130
        %v4132 = vrot.slane %v3048, 5
        %v4133 = vrot.slane %v4132, 4
        %v4134 = vrot.slane %v3049, 5
        %v4135 = vsel %vm1153, %v4133, %v4134
        %v4136 = vrot.slane %v4134, 4
        %v4137 = vrot.slane %v3050, 5
        %v4138 = vsel %vm1153, %v4136, %v4137
        %v4139 = vrot.slane %v3051, 5
        %v4140 = vrot.slane %v4139, 4
        %v4141 = vrot.slane %v3052, 5
        %v4142 = vsel %vm1153, %v4140, %v4141
        %v4143 = vrot.slane %v4141, 4
        %v4144 = vrot.slane %v3053, 5
        %v4145 = vsel %vm1153, %v4143, %v4144
        %v4146 = vrot.slane %v3054, 5
        %v4147 = vrot.slane %v4146, 4
        %v4148 = vrot.slane %v3055, 5
        %v4149 = vsel %vm1153, %v4147, %v4148
        %v4150 = vrot.slane %v4148, 4
        %v4151 = vrot.slane %v3056, 5
        %v4152 = vsel %vm1153, %v4150, %v4151
        %v4153 = vrot.slane %v3057, 5
        %v4154 = vrot.slane %v4153, 4
        %v4155 = vrot.slane %v3058, 5
        %v4156 = vsel %vm1153, %v4154, %v4155
        %v4157 = vrot.slane %v4155, 4
        %v4158 = vrot.slane %v3059, 5
        %v4159 = vsel %vm1153, %v4157, %v4158
        %v4160 = vrot.slane %v3060, 5
        %v4161 = vrot.slane %v4160, 4
        %v4162 = vrot.slane %v3061, 5
        %v4163 = vsel %vm1153, %v4161, %v4162
        %v4164 = vrot.slane %v4162, 4
        %v4165 = vrot.slane %v3062, 5
        %v4166 = vsel %vm1153, %v4164, %v4165
        %v4167 = vrot.slane %v3063, 5
        %v4168 = vrot.slane %v4167, 4
        %v4169 = vrot.slane %v3064, 5
        %v4170 = vsel %vm1153, %v4168, %v4169
        %v4171 = vrot.slane %v4169, 4
        %v4172 = vrot.slane %v3065, 5
        %v4173 = vsel %vm1153, %v4171, %v4172
        %v4174 = vrot.slane %v3066, 5
        %v4175 = vrot.slane %v4174, 4
        %v4176 = vrot.slane %v3067, 5
        %v4177 = vsel %vm1153, %v4175, %v4176
        %v4178 = vrot.slane %v4176, 4
        %v4179 = vrot.slane %v3068, 5
        %v4180 = vsel %vm1153, %v4178, %v4179
        %v4181 = vrot.slane %v3069, 5
        %v4182 = vrot.slane %v4181, 4
        %v4183 = vrot.slane %v3070, 5
        %v4184 = vsel %vm1153, %v4182, %v4183
        %v4185 = vrot.slane %v4183, 4
        %v4186 = vrot.slane %v3071, 5
        %v4187 = vsel %vm1153, %v4185, %v4186
        %v4188 = vrot.slane %v3072, 5
        %v4189 = vrot.slane %v4188, 4
        %v4190 = vrot.slane %v3073, 5
        %v4191 = vsel %vm1153, %v4189, %v4190
        %v4192 = vrot.slane %v4190, 4
        %v4193 = vrot.slane %v3074, 5
        %v4194 = vsel %vm1153, %v4192, %v4193
        %v4195 = vrot.slane %v3075, 5
        %v4196 = vrot.slane %v4195, 4
        %v4197 = vrot.slane %v3076, 5
        %v4198 = vsel %vm1153, %v4196, %v4197
        %v4199 = vrot.slane %v4197, 4
        %v4200 = vrot.slane %v3077, 5
        %v4201 = vsel %vm1153, %v4199, %v4200
        %v4202 = vrot.slane %v3078, 5
        %v4203 = vrot.slane %v4202, 4
        %v4204 = vrot.slane %v3079, 5
        %v4205 = vsel %vm1153, %v4203, %v4204
        %v4206 = vrot.slane %v4204, 4
        %v4207 = vrot.slane %v3080, 5
        %v4208 = vsel %vm1153, %v4206, %v4207
        %v4209 = vrot.slane %v3081, 5
        %v4210 = vrot.slane %v4209, 4
        %v4211 = vrot.slane %v3082, 5
        %v4212 = vsel %vm1153, %v4210, %v4211
        %v4213 = vrot.slane %v4211, 4
        %v4214 = vrot.slane %v3083, 5
        %v4215 = vsel %vm1153, %v4213, %v4214
        %s4216 = scalar_lea.vmem %s1, 16
        %v4217 = vld [vmem:[%s4216] sm:$0x3]
        %v4218 = vunpack.c.l.b16 %v4107
        %v4219 = vunpack.c.l.b16 %v4110
        %v4220 = vunpack.c.l.b16 %v4114
        %v4221 = vunpack.c.l.b16 %v4117
        %v4222 = vunpack.c.l.b16 %v4121
        %v4223 = vunpack.c.l.b16 %v4124
        %v4224 = vunpack.c.l.b16 %v4128
        %v4225 = vunpack.c.l.b16 %v4131
        %v4226 = vunpack.c.l.b16 %v4135
        %v4227 = vunpack.c.l.b16 %v4138
        %v4228 = vunpack.c.l.b16 %v4142
        %v4229 = vunpack.c.l.b16 %v4145
        %v4230 = vunpack.c.l.b16 %v4149
        %v4231 = vunpack.c.l.b16 %v4152
        %v4232 = vunpack.c.l.b16 %v4156
        %v4233 = vunpack.c.l.b16 %v4159
        %v4234 = vunpack.c.l.b16 %v4163
        %v4235 = vunpack.c.l.b16 %v4166
        %v4236 = vunpack.c.l.b16 %v4170
        %v4237 = vunpack.c.l.b16 %v4173
        %v4238 = vunpack.c.l.b16 %v4177
        %v4239 = vunpack.c.l.b16 %v4180
        %v4240 = vunpack.c.l.b16 %v4184
        %v4241 = vunpack.c.l.b16 %v4187
        %v4242 = vunpack.c.l.b16 %v4191
        %v4243 = vunpack.c.l.b16 %v4194
        %v4244 = vunpack.c.l.b16 %v4198
        %v4245 = vunpack.c.l.b16 %v4201
        %v4246 = vunpack.c.l.b16 %v4205
        %v4247 = vunpack.c.l.b16 %v4208
        %v4248 = vunpack.c.l.b16 %v4212
        %v4249 = vunpack.c.l.b16 %v4215
        %v4250 = vpack.c.b16 %v4219, %v4218
        %v4251 = vpack.c.b16 %v4221, %v4220
        %v4252 = vpack.c.b16 %v4223, %v4222
        %v4253 = vpack.c.b16 %v4225, %v4224
        %v4254 = vpack.c.b16 %v4227, %v4226
        %v4255 = vpack.c.b16 %v4229, %v4228
        %v4256 = vpack.c.b16 %v4231, %v4230
        %v4257 = vpack.c.b16 %v4233, %v4232
        %v4258 = vpack.c.b16 %v4235, %v4234
        %v4259 = vpack.c.b16 %v4237, %v4236
        %v4260 = vpack.c.b16 %v4239, %v4238
        %v4261 = vpack.c.b16 %v4241, %v4240
        %v4262 = vpack.c.b16 %v4243, %v4242
        %v4263 = vpack.c.b16 %v4245, %v4244
        %v4264 = vpack.c.b16 %v4247, %v4246
        %v4265 = vpack.c.b16 %v4249, %v4248
        %v4267 = vsel %vm629, %v4250, 0
        %v4270 = vsel %vm629, %v4251, 0
        %v4273 = vsel %vm629, %v4252, 0
        %v4276 = vsel %vm629, %v4253, 0
        %v4279 = vsel %vm629, %v4254, 0
        %v4282 = vsel %vm629, %v4255, 0
        %v4285 = vsel %vm629, %v4256, 0
        %v4288 = vsel %vm629, %v4257, 0
        %v4291 = vsel %vm629, %v4258, 0
        %v4294 = vsel %vm629, %v4259, 0
        %v4297 = vsel %vm629, %v4260, 0
        %v4300 = vsel %vm629, %v4261, 0
        %v4303 = vsel %vm629, %v4262, 0
        %v4306 = vsel %vm629, %v4263, 0
        %v4309 = vsel %vm629, %v4264, 0
        %v4312 = vsel %vm629, %v4265, 0
        %v4315 = vsel %vm678, %v4217, 0
        %4317 = vmatprep.subr.bf16.mxu0 0
        %4318 = vmatpush1.bf16.msra.mxu0 %v4315
        %4319 = vmatprep.subr.bf16.mxu0 0
        %4320 = vmatpush1.bf16.msra.mxu0 0
        %4321 = vmatprep.subr.bf16.mxu0 0
        %4322 = vmatpush1.bf16.msra.mxu0 0
        %4323 = vmatprep.subr.bf16.mxu0 0
        %4324 = vmatpush1.bf16.msra.mxu0 0
        %4325 = vmatprep.subr.bf16.mxu0 0
        %4326 = vmatpush1.bf16.msra.mxu0 0
        %4327 = vmatprep.subr.bf16.mxu0 0
        %4328 = vmatpush1.bf16.msra.mxu0 0
        %4329 = vmatprep.subr.bf16.mxu0 0
        %4330 = vmatpush1.bf16.msra.mxu0 0
        %4331 = vmatprep.subr.bf16.mxu0 0
        %4332 = vmatpush1.bf16.msra.mxu0 0
        %4333 = vmatprep.subr.bf16.mxu0 0
        %4334 = vmatpush1.bf16.msra.mxu0 0
        %4335 = vmatprep.subr.bf16.mxu0 0
        %4336 = vmatpush1.bf16.msra.mxu0 0
        %4337 = vmatprep.subr.bf16.mxu0 0
        %4338 = vmatpush1.bf16.msra.mxu0 0
        %4339 = vmatprep.subr.bf16.mxu0 0
        %4340 = vmatpush1.bf16.msra.mxu0 0
        %4341 = vmatprep.subr.bf16.mxu0 0
        %4342 = vmatpush1.bf16.msra.mxu0 0
        %4343 = vmatprep.subr.bf16.mxu0 0
        %4344 = vmatpush1.bf16.msra.mxu0 0
        %4345 = vmatprep.subr.bf16.mxu0 0
        %4346 = vmatpush1.bf16.msra.mxu0 0
        %4347 = vmatprep.subr.bf16.mxu0 0
        %4348 = vmatpush1.bf16.msra.mxu0 0
        %4349 = vmatprep.mubr.bf16.mxu0 0
        %4350 = vmatmul.mubr.bf16.gmra.mrb[0].mxu0 %v4267
        %v4351 = vpop.f32.mrb[0].mxu0
        %v4352 = vadd.f32 0.0, %v4351
        %v4353 = vpop.f32.mrb[0].mxu0
        %v4354 = vpop.f32.mrb[0].mxu0
        %v4355 = vadd.f32 0.0, %v4354
        %v4356 = vpop.f32.mrb[0].mxu0
        %4357 = vmatprep.mubr.bf16.mxu0 0
        %4358 = vmatmul.mubr.bf16.gmra.mrb[0].mxu0 %v4270
        %v4359 = vpop.f32.mrb[0].mxu0
        %v4360 = vadd.f32 0.0, %v4359
        %v4361 = vpop.f32.mrb[0].mxu0
        %v4362 = vpop.f32.mrb[0].mxu0
        %v4363 = vadd.f32 0.0, %v4362
        %v4364 = vpop.f32.mrb[0].mxu0
        %4365 = vmatprep.mubr.bf16.mxu0 0
        %4366 = vmatmul.mubr.bf16.gmra.mrb[0].mxu0 %v4273
        %v4367 = vpop.f32.mrb[0].mxu0
        %v4368 = vadd.f32 0.0, %v4367
        %v4369 = vpop.f32.mrb[0].mxu0
        %v4370 = vpop.f32.mrb[0].mxu0
        %v4371 = vadd.f32 0.0, %v4370
        %v4372 = vpop.f32.mrb[0].mxu0
        %4373 = vmatprep.mubr.bf16.mxu0 0
        %4374 = vmatmul.mubr.bf16.gmra.mrb[0].mxu0 %v4276
        %v4375 = vpop.f32.mrb[0].mxu0
        %v4376 = vadd.f32 0.0, %v4375
        %v4377 = vpop.f32.mrb[0].mxu0
        %v4378 = vpop.f32.mrb[0].mxu0
        %v4379 = vadd.f32 0.0, %v4378
        %v4380 = vpop.f32.mrb[0].mxu0
        %4381 = vmatprep.mubr.bf16.mxu0 0
        %4382 = vmatmul.mubr.bf16.gmra.mrb[0].mxu0 %v4279
        %v4383 = vpop.f32.mrb[0].mxu0
        %v4384 = vadd.f32 0.0, %v4383
        %v4385 = vpop.f32.mrb[0].mxu0
        %v4386 = vpop.f32.mrb[0].mxu0
        %v4387 = vadd.f32 0.0, %v4386
        %v4388 = vpop.f32.mrb[0].mxu0
        %4389 = vmatprep.mubr.bf16.mxu0 0
        %4390 = vmatmul.mubr.bf16.gmra.mrb[0].mxu0 %v4282
        %v4391 = vpop.f32.mrb[0].mxu0
        %v4392 = vadd.f32 0.0, %v4391
        %v4393 = vpop.f32.mrb[0].mxu0
        %v4394 = vpop.f32.mrb[0].mxu0
        %v4395 = vadd.f32 0.0, %v4394
        %v4396 = vpop.f32.mrb[0].mxu0
        %4397 = vmatprep.mubr.bf16.mxu0 0
        %4398 = vmatmul.mubr.bf16.gmra.mrb[0].mxu0 %v4285
        %v4399 = vpop.f32.mrb[0].mxu0
        %v4400 = vadd.f32 0.0, %v4399
        %v4401 = vpop.f32.mrb[0].mxu0
        %v4402 = vpop.f32.mrb[0].mxu0
        %v4403 = vadd.f32 0.0, %v4402
        %v4404 = vpop.f32.mrb[0].mxu0
        %4405 = vmatprep.mubr.bf16.mxu0 0
        %4406 = vmatmul.mubr.bf16.gmra.mrb[0].mxu0 %v4288
        %v4407 = vpop.f32.mrb[0].mxu0
        %v4408 = vadd.f32 0.0, %v4407
        %v4409 = vpop.f32.mrb[0].mxu0
        %v4410 = vpop.f32.mrb[0].mxu0
        %v4411 = vadd.f32 0.0, %v4410
        %v4412 = vpop.f32.mrb[0].mxu0
        %4413 = vmatprep.mubr.bf16.mxu0 0
        %4414 = vmatmul.mubr.bf16.gmra.mrb[0].mxu0 %v4291
        %v4415 = vpop.f32.mrb[0].mxu0
        %v4416 = vadd.f32 0.0, %v4415
        %v4417 = vpop.f32.mrb[0].mxu0
        %v4418 = vpop.f32.mrb[0].mxu0
        %v4419 = vadd.f32 0.0, %v4418
        %v4420 = vpop.f32.mrb[0].mxu0
        %4421 = vmatprep.mubr.bf16.mxu0 0
        %4422 = vmatmul.mubr.bf16.gmra.mrb[0].mxu0 %v4294
        %v4423 = vpop.f32.mrb[0].mxu0
        %v4424 = vadd.f32 0.0, %v4423
        %v4425 = vpop.f32.mrb[0].mxu0
        %v4426 = vpop.f32.mrb[0].mxu0
        %v4427 = vadd.f32 0.0, %v4426
        %v4428 = vpop.f32.mrb[0].mxu0
        %4429 = vmatprep.mubr.bf16.mxu0 0
        %4430 = vmatmul.mubr.bf16.gmra.mrb[0].mxu0 %v4297
        %v4431 = vpop.f32.mrb[0].mxu0
        %v4432 = vadd.f32 0.0, %v4431
        %v4433 = vpop.f32.mrb[0].mxu0
        %v4434 = vpop.f32.mrb[0].mxu0
        %v4435 = vadd.f32 0.0, %v4434
        %v4436 = vpop.f32.mrb[0].mxu0
        %4437 = vmatprep.mubr.bf16.mxu0 0
        %4438 = vmatmul.mubr.bf16.gmra.mrb[0].mxu0 %v4300
        %v4439 = vpop.f32.mrb[0].mxu0
        %v4440 = vadd.f32 0.0, %v4439
        %v4441 = vpop.f32.mrb[0].mxu0
        %v4442 = vpop.f32.mrb[0].mxu0
        %v4443 = vadd.f32 0.0, %v4442
        %v4444 = vpop.f32.mrb[0].mxu0
        %4445 = vmatprep.mubr.bf16.mxu0 0
        %4446 = vmatmul.mubr.bf16.gmra.mrb[0].mxu0 %v4303
        %v4447 = vpop.f32.mrb[0].mxu0
        %v4448 = vadd.f32 0.0, %v4447
        %v4449 = vpop.f32.mrb[0].mxu0
        %v4450 = vpop.f32.mrb[0].mxu0
        %v4451 = vadd.f32 0.0, %v4450
        %v4452 = vpop.f32.mrb[0].mxu0
        %4453 = vmatprep.mubr.bf16.mxu0 0
        %4454 = vmatmul.mubr.bf16.gmra.mrb[0].mxu0 %v4306
        %v4455 = vpop.f32.mrb[0].mxu0
        %v4456 = vadd.f32 0.0, %v4455
        %v4457 = vpop.f32.mrb[0].mxu0
        %v4458 = vpop.f32.mrb[0].mxu0
        %v4459 = vadd.f32 0.0, %v4458
        %v4460 = vpop.f32.mrb[0].mxu0
        %4461 = vmatprep.mubr.bf16.mxu0 0
        %4462 = vmatmul.mubr.bf16.gmra.mrb[0].mxu0 %v4309
        %v4463 = vpop.f32.mrb[0].mxu0
        %v4464 = vadd.f32 0.0, %v4463
        %v4465 = vpop.f32.mrb[0].mxu0
        %v4466 = vpop.f32.mrb[0].mxu0
        %v4467 = vadd.f32 0.0, %v4466
        %v4468 = vpop.f32.mrb[0].mxu0
        %4469 = vmatprep.mubr.bf16.mxu0 0
        %4470 = vmatmul.mubr.bf16.gmra.mrb[0].mxu0 %v4312
        %v4471 = vpop.f32.mrb[0].mxu0
        %v4472 = vadd.f32 0.0, %v4471
        %v4473 = vpop.f32.mrb[0].mxu0
        %v4474 = vpop.f32.mrb[0].mxu0
        %v4475 = vadd.f32 0.0, %v4474
        %v4476 = vpop.f32.mrb[0].mxu0
        %4477 = vdwg.mxu0
        %v4478 = vadd.f32 %v4056, %v4352
        %v4479 = vadd.f32 %v4057, %v4355
        %v4480 = vadd.f32 %v4058, %v4360
        %v4481 = vadd.f32 %v4059, %v4363
        %v4482 = vadd.f32 %v4060, %v4368
        %v4483 = vadd.f32 %v4061, %v4371
        %v4484 = vadd.f32 %v4062, %v4376
        %v4485 = vadd.f32 %v4063, %v4379
        %v4486 = vadd.f32 %v4064, %v4384
        %v4487 = vadd.f32 %v4065, %v4387
        %v4488 = vadd.f32 %v4066, %v4392
        %v4489 = vadd.f32 %v4067, %v4395
        %v4490 = vadd.f32 %v4068, %v4400
        %v4491 = vadd.f32 %v4069, %v4403
        %v4492 = vadd.f32 %v4070, %v4408
        %v4493 = vadd.f32 %v4071, %v4411
        %v4494 = vadd.f32 %v4072, %v4416
        %v4495 = vadd.f32 %v4073, %v4419
        %v4496 = vadd.f32 %v4074, %v4424
        %v4497 = vadd.f32 %v4075, %v4427
        %v4498 = vadd.f32 %v4076, %v4432
        %v4499 = vadd.f32 %v4077, %v4435
        %v4500 = vadd.f32 %v4078, %v4440
        %v4501 = vadd.f32 %v4079, %v4443
        %v4502 = vadd.f32 %v4080, %v4448
        %v4503 = vadd.f32 %v4081, %v4451
        %v4504 = vadd.f32 %v4082, %v4456
        %v4505 = vadd.f32 %v4083, %v4459
        %v4506 = vadd.f32 %v4084, %v4464
        %v4507 = vadd.f32 %v4085, %v4467
        %v4508 = vadd.f32 %v4086, %v4472
        %v4509 = vadd.f32 %v4087, %v4475
        %v4510 = vadd.f32 %v4478, %v4479
        %v4511 = vadd.f32 %v4510, %v4480
        %v4512 = vadd.f32 %v4511, %v4481
        %v4513 = vadd.f32 %v4512, %v4482
        %v4514 = vadd.f32 %v4513, %v4483
        %v4515 = vadd.f32 %v4514, %v4484
        %v4516 = vadd.f32 %v4515, %v4485
        %v4517 = vadd.f32 %v4516, %v4486
        %v4518 = vadd.f32 %v4517, %v4487
        %v4519 = vadd.f32 %v4518, %v4488
        %v4520 = vadd.f32 %v4519, %v4489
        %v4521 = vadd.f32 %v4520, %v4490
        %v4522 = vadd.f32 %v4521, %v4491
        %v4523 = vadd.f32 %v4522, %v4492
        %v4524 = vadd.f32 %v4523, %v4493
        %v4525 = vadd.f32 %v4524, %v4494
        %v4526 = vadd.f32 %v4525, %v4495
        %v4527 = vadd.f32 %v4526, %v4496
        %v4528 = vadd.f32 %v4527, %v4497
        %v4529 = vadd.f32 %v4528, %v4498
        %v4530 = vadd.f32 %v4529, %v4499
        %v4531 = vadd.f32 %v4530, %v4500
        %v4532 = vadd.f32 %v4531, %v4501
        %v4533 = vadd.f32 %v4532, %v4502
        %v4534 = vadd.f32 %v4533, %v4503
        %v4535 = vadd.f32 %v4534, %v4504
        %v4536 = vadd.f32 %v4535, %v4505
        %v4537 = vadd.f32 %v4536, %v4506
        %v4538 = vadd.f32 %v4537, %v4507
        %v4539 = vadd.f32 %v4538, %v4508
        %v4540 = vadd.f32 %v4539, %v4509
        %v4541 = vrot.slane %v4540, 4
        %v4542 = vadd.f32 %v4540, %v4541
        %v4543 = vrot.slane %v4542, 2
        %v4544 = vadd.f32 %v4542, %v4543
        %v4545 = vrot.slane %v4544, 1
        %v4546 = vadd.f32 %v4544, %v4545
        %v4547 = vadd.f32 %v4546, 0.0
        %v4548 = vmul.f32 %v4478, %v4478
        %v4549 = vmul.f32 %v4479, %v4479
        %v4550 = vmul.f32 %v4480, %v4480
        %v4551 = vmul.f32 %v4481, %v4481
        %v4552 = vmul.f32 %v4482, %v4482
        %v4553 = vmul.f32 %v4483, %v4483
        %v4554 = vmul.f32 %v4484, %v4484
        %v4555 = vmul.f32 %v4485, %v4485
        %v4556 = vmul.f32 %v4486, %v4486
        %v4557 = vmul.f32 %v4487, %v4487
        %v4558 = vmul.f32 %v4488, %v4488
        %v4559 = vmul.f32 %v4489, %v4489
        %v4560 = vmul.f32 %v4490, %v4490
        %v4561 = vmul.f32 %v4491, %v4491
        %v4562 = vmul.f32 %v4492, %v4492
        %v4563 = vmul.f32 %v4493, %v4493
        %v4564 = vmul.f32 %v4494, %v4494
        %v4565 = vmul.f32 %v4495, %v4495
        %v4566 = vmul.f32 %v4496, %v4496
        %v4567 = vmul.f32 %v4497, %v4497
        %v4568 = vmul.f32 %v4498, %v4498
        %v4569 = vmul.f32 %v4499, %v4499
        %v4570 = vmul.f32 %v4500, %v4500
        %v4571 = vmul.f32 %v4501, %v4501
        %v4572 = vmul.f32 %v4502, %v4502
        %v4573 = vmul.f32 %v4503, %v4503
        %v4574 = vmul.f32 %v4504, %v4504
        %v4575 = vmul.f32 %v4505, %v4505
        %v4576 = vmul.f32 %v4506, %v4506
        %v4577 = vmul.f32 %v4507, %v4507
        %v4578 = vmul.f32 %v4508, %v4508
        %v4579 = vmul.f32 %v4509, %v4509
        %v4580 = vadd.f32 %v4548, %v4549
        %v4581 = vadd.f32 %v4580, %v4550
        %v4582 = vadd.f32 %v4581, %v4551
        %v4583 = vadd.f32 %v4582, %v4552
        %v4584 = vadd.f32 %v4583, %v4553
        %v4585 = vadd.f32 %v4584, %v4554
        %v4586 = vadd.f32 %v4585, %v4555
        %v4587 = vadd.f32 %v4586, %v4556
        %v4588 = vadd.f32 %v4587, %v4557
        %v4589 = vadd.f32 %v4588, %v4558
        %v4590 = vadd.f32 %v4589, %v4559
        %v4591 = vadd.f32 %v4590, %v4560
        %v4592 = vadd.f32 %v4591, %v4561
        %v4593 = vadd.f32 %v4592, %v4562
        %v4594 = vadd.f32 %v4593, %v4563
        %v4595 = vadd.f32 %v4594, %v4564
        %v4596 = vadd.f32 %v4595, %v4565
        %v4597 = vadd.f32 %v4596, %v4566
        %v4598 = vadd.f32 %v4597, %v4567
        %v4599 = vadd.f32 %v4598, %v4568
        %v4600 = vadd.f32 %v4599, %v4569
        %v4601 = vadd.f32 %v4600, %v4570
        %v4602 = vadd.f32 %v4601, %v4571
        %v4603 = vadd.f32 %v4602, %v4572
        %v4604 = vadd.f32 %v4603, %v4573
        %v4605 = vadd.f32 %v4604, %v4574
        %v4606 = vadd.f32 %v4605, %v4575
        %v4607 = vadd.f32 %v4606, %v4576
        %v4608 = vadd.f32 %v4607, %v4577
        %v4609 = vadd.f32 %v4608, %v4578
        %v4610 = vadd.f32 %v4609, %v4579
        %v4611 = vrot.slane %v4610, 4
        %v4612 = vadd.f32 %v4610, %v4611
        %v4613 = vrot.slane %v4612, 2
        %v4614 = vadd.f32 %v4612, %v4613
        %v4615 = vrot.slane %v4614, 1
        %v4616 = vadd.f32 %v4614, %v4615
        %v4617 = vadd.f32 %v4616, 0.0
        %v4618 = vpack.c.bf16 %v4479, %v4478
        %v4619 = vpack.c.bf16 %v4481, %v4480
        %v4620 = vpack.c.bf16 %v4483, %v4482
        %v4621 = vpack.c.bf16 %v4485, %v4484
        %v4622 = vpack.c.bf16 %v4487, %v4486
        %v4623 = vpack.c.bf16 %v4489, %v4488
        %v4624 = vpack.c.bf16 %v4491, %v4490
        %v4625 = vpack.c.bf16 %v4493, %v4492
        %v4626 = vpack.c.bf16 %v4495, %v4494
        %v4627 = vpack.c.bf16 %v4497, %v4496
        %v4628 = vpack.c.bf16 %v4499, %v4498
        %v4629 = vpack.c.bf16 %v4501, %v4500
        %v4630 = vpack.c.bf16 %v4503, %v4502
        %v4631 = vpack.c.bf16 %v4505, %v4504
        %v4632 = vpack.c.bf16 %v4507, %v4506
        %v4633 = vpack.c.bf16 %v4509, %v4508
        %v4650 = vunpack.c.l.b16 %v4618
        %v4651 = vunpack.c.h.b16 %v4618
        %v4652 = vunpack.c.l.b16 %v4619
        %v4653 = vunpack.c.h.b16 %v4619
        %v4654 = vunpack.c.l.b16 %v4620
        %v4655 = vunpack.c.h.b16 %v4620
        %v4656 = vunpack.c.l.b16 %v4621
        %v4657 = vunpack.c.h.b16 %v4621
        %v4658 = vunpack.c.l.b16 %v4622
        %v4659 = vunpack.c.h.b16 %v4622
        %v4660 = vunpack.c.l.b16 %v4623
        %v4661 = vunpack.c.h.b16 %v4623
        %v4662 = vunpack.c.l.b16 %v4624
        %v4663 = vunpack.c.h.b16 %v4624
        %v4664 = vunpack.c.l.b16 %v4625
        %v4665 = vunpack.c.h.b16 %v4625
        %v4666 = vunpack.c.l.b16 %v4626
        %v4667 = vunpack.c.h.b16 %v4626
        %v4668 = vunpack.c.l.b16 %v4627
        %v4669 = vunpack.c.h.b16 %v4627
        %v4670 = vunpack.c.l.b16 %v4628
        %v4671 = vunpack.c.h.b16 %v4628
        %v4672 = vunpack.c.l.b16 %v4629
        %v4673 = vunpack.c.h.b16 %v4629
        %v4674 = vunpack.c.l.b16 %v4630
        %v4675 = vunpack.c.h.b16 %v4630
        %v4676 = vunpack.c.l.b16 %v4631
        %v4677 = vunpack.c.h.b16 %v4631
        %v4678 = vunpack.c.l.b16 %v4632
        %v4679 = vunpack.c.h.b16 %v4632
        %v4680 = vunpack.c.l.b16 %v4633
        %v4681 = vunpack.c.h.b16 %v4633
        %v4682 = vpack.c.b16 %v4650, %v4650
        %v4683 = vpack.c.b16 %v4651, %v4651
        %v4684 = vpack.c.b16 %v4652, %v4652
        %v4685 = vpack.c.b16 %v4653, %v4653
        %v4686 = vpack.c.b16 %v4654, %v4654
        %v4687 = vpack.c.b16 %v4655, %v4655
        %v4688 = vpack.c.b16 %v4656, %v4656
        %v4689 = vpack.c.b16 %v4657, %v4657
        %v4690 = vpack.c.b16 %v4658, %v4658
        %v4691 = vpack.c.b16 %v4659, %v4659
        %v4692 = vpack.c.b16 %v4660, %v4660
        %v4693 = vpack.c.b16 %v4661, %v4661
        %v4694 = vpack.c.b16 %v4662, %v4662
        %v4695 = vpack.c.b16 %v4663, %v4663
        %v4696 = vpack.c.b16 %v4664, %v4664
        %v4697 = vpack.c.b16 %v4665, %v4665
        %v4698 = vpack.c.b16 %v4666, %v4666
        %v4699 = vpack.c.b16 %v4667, %v4667
        %v4700 = vpack.c.b16 %v4668, %v4668
        %v4701 = vpack.c.b16 %v4669, %v4669
        %v4702 = vpack.c.b16 %v4670, %v4670
        %v4703 = vpack.c.b16 %v4671, %v4671
        %v4704 = vpack.c.b16 %v4672, %v4672
        %v4705 = vpack.c.b16 %v4673, %v4673
        %v4706 = vpack.c.b16 %v4674, %v4674
        %v4707 = vpack.c.b16 %v4675, %v4675
        %v4708 = vpack.c.b16 %v4676, %v4676
        %v4709 = vpack.c.b16 %v4677, %v4677
        %v4710 = vpack.c.b16 %v4678, %v4678
        %v4711 = vpack.c.b16 %v4679, %v4679
        %v4712 = vpack.c.b16 %v4680, %v4680
        %v4713 = vpack.c.b16 %v4681, %v4681
        %4746 = vst [vmem:[%s136] sm:$0xf] %v4682
        %4747 = vst [vmem:[%s136 + $0x4] sm:$0xf] %v4683
        %4748 = vst [vmem:[%s136 + $0x8] sm:$0xf] %v4684
        %4749 = vst [vmem:[%s136 + $0xc] sm:$0xf] %v4685
        %4750 = vst [vmem:[%s136 + $0x10] sm:$0xf] %v4686
        %4751 = vst [vmem:[%s136 + $0x14] sm:$0xf] %v4687
        %4752 = vst [vmem:[%s136 + $0x18] sm:$0xf] %v4688
        %4753 = vst [vmem:[%s136 + $0x1c] sm:$0xf] %v4689
        %4754 = vst [vmem:[%s136 + $0x20] sm:$0xf] %v4690
        %4755 = vst [vmem:[%s136 + $0x24] sm:$0xf] %v4691
        %4756 = vst [vmem:[%s136 + $0x28] sm:$0xf] %v4692
        %4757 = vst [vmem:[%s136 + $0x2c] sm:$0xf] %v4693
        %4758 = vst [vmem:[%s136 + $0x30] sm:$0xf] %v4694
        %4759 = vst [vmem:[%s136 + $0x34] sm:$0xf] %v4695
        %4760 = vst [vmem:[%s136 + $0x38] sm:$0xf] %v4696
        %4761 = vst [vmem:[%s136 + $0x3c] sm:$0xf] %v4697
        %4762 = vst [vmem:[%s136 + $0x40] sm:$0xf] %v4698
        %4763 = vst [vmem:[%s136 + $0x44] sm:$0xf] %v4699
        %4764 = vst [vmem:[%s136 + $0x48] sm:$0xf] %v4700
        %4765 = vst [vmem:[%s136 + $0x4c] sm:$0xf] %v4701
        %4766 = vst [vmem:[%s136 + $0x50] sm:$0xf] %v4702
        %4767 = vst [vmem:[%s136 + $0x54] sm:$0xf] %v4703
        %4768 = vst [vmem:[%s136 + $0x58] sm:$0xf] %v4704
        %4769 = vst [vmem:[%s136 + $0x5c] sm:$0xf] %v4705
        %4770 = vst [vmem:[%s136 + $0x60] sm:$0xf] %v4706
        %4771 = vst [vmem:[%s136 + $0x64] sm:$0xf] %v4707
        %4772 = vst [vmem:[%s136 + $0x68] sm:$0xf] %v4708
        %4773 = vst [vmem:[%s136 + $0x6c] sm:$0xf] %v4709
        %4774 = vst [vmem:[%s136 + $0x70] sm:$0xf] %v4710
        %4775 = vst [vmem:[%s136 + $0x74] sm:$0xf] %v4711
        %4776 = vst [vmem:[%s136 + $0x78] sm:$0xf] %v4712
        %4777 = vst [vmem:[%s136 + $0x7c] sm:$0xf] %v4713
        %v4778 = vmul.f32 %v4547, 0.00390625
        %v4779 = vmul.f32 %v4617, 0.00390625
        %v4780 = vmul.f32 %v4778, %v4778
        %v4781 = vsub.f32 %v4779, %v4780
        %v4782 = vmax.f32 %v4781, 0.0
        %v4783 = vadd.f32 %v4782, 1e-05
        %v4784 = vrsqrt.pop %v4783
        %v4785 = vmul.f32 %v4778, %v4784
        %v4786 = vld [vmem:[%s136] sm:$0xf]
        %v4787 = vld [vmem:[%s136 + $0x4] sm:$0xf]
        %v4788 = vld [vmem:[%s136 + $0x8] sm:$0xf]
        %v4789 = vld [vmem:[%s136 + $0xc] sm:$0xf]
        %v4790 = vld [vmem:[%s136 + $0x10] sm:$0xf]
        %v4791 = vld [vmem:[%s136 + $0x14] sm:$0xf]
        %v4792 = vld [vmem:[%s136 + $0x18] sm:$0xf]
        %v4793 = vld [vmem:[%s136 + $0x1c] sm:$0xf]
        %v4794 = vld [vmem:[%s136 + $0x20] sm:$0xf]
        %v4795 = vld [vmem:[%s136 + $0x24] sm:$0xf]
        %v4796 = vld [vmem:[%s136 + $0x28] sm:$0xf]
        %v4797 = vld [vmem:[%s136 + $0x2c] sm:$0xf]
        %v4798 = vld [vmem:[%s136 + $0x30] sm:$0xf]
        %v4799 = vld [vmem:[%s136 + $0x34] sm:$0xf]
        %v4800 = vld [vmem:[%s136 + $0x38] sm:$0xf]
        %v4801 = vld [vmem:[%s136 + $0x3c] sm:$0xf]
        %v4802 = vld [vmem:[%s136 + $0x40] sm:$0xf]
        %v4803 = vld [vmem:[%s136 + $0x44] sm:$0xf]
        %v4804 = vld [vmem:[%s136 + $0x48] sm:$0xf]
        %v4805 = vld [vmem:[%s136 + $0x4c] sm:$0xf]
        %v4806 = vld [vmem:[%s136 + $0x50] sm:$0xf]
        %v4807 = vld [vmem:[%s136 + $0x54] sm:$0xf]
        %v4808 = vld [vmem:[%s136 + $0x58] sm:$0xf]
        %v4809 = vld [vmem:[%s136 + $0x5c] sm:$0xf]
        %v4810 = vld [vmem:[%s136 + $0x60] sm:$0xf]
        %v4811 = vld [vmem:[%s136 + $0x64] sm:$0xf]
        %v4812 = vld [vmem:[%s136 + $0x68] sm:$0xf]
        %v4813 = vld [vmem:[%s136 + $0x6c] sm:$0xf]
        %v4814 = vld [vmem:[%s136 + $0x70] sm:$0xf]
        %v4815 = vld [vmem:[%s136 + $0x74] sm:$0xf]
        %v4816 = vld [vmem:[%s136 + $0x78] sm:$0xf]
        %v4817 = vld [vmem:[%s136 + $0x7c] sm:$0xf]
        %v4818 = vunpack.c.l.bf16 %v4786
        %v4819 = vunpack.c.l.bf16 %v4787
        %v4820 = vunpack.c.l.bf16 %v4788
        %v4821 = vunpack.c.l.bf16 %v4789
        %v4822 = vunpack.c.l.bf16 %v4790
        %v4823 = vunpack.c.l.bf16 %v4791
        %v4824 = vunpack.c.l.bf16 %v4792
        %v4825 = vunpack.c.l.bf16 %v4793
        %v4826 = vunpack.c.l.bf16 %v4794
        %v4827 = vunpack.c.l.bf16 %v4795
        %v4828 = vunpack.c.l.bf16 %v4796
        %v4829 = vunpack.c.l.bf16 %v4797
        %v4830 = vunpack.c.l.bf16 %v4798
        %v4831 = vunpack.c.l.bf16 %v4799
        %v4832 = vunpack.c.l.bf16 %v4800
        %v4833 = vunpack.c.l.bf16 %v4801
        %v4834 = vunpack.c.l.bf16 %v4802
        %v4835 = vunpack.c.l.bf16 %v4803
        %v4836 = vunpack.c.l.bf16 %v4804
        %v4837 = vunpack.c.l.bf16 %v4805
        %v4838 = vunpack.c.l.bf16 %v4806
        %v4839 = vunpack.c.l.bf16 %v4807
        %v4840 = vunpack.c.l.bf16 %v4808
        %v4841 = vunpack.c.l.bf16 %v4809
        %v4842 = vunpack.c.l.bf16 %v4810
        %v4843 = vunpack.c.l.bf16 %v4811
        %v4844 = vunpack.c.l.bf16 %v4812
        %v4845 = vunpack.c.l.bf16 %v4813
        %v4846 = vunpack.c.l.bf16 %v4814
        %v4847 = vunpack.c.l.bf16 %v4815
        %v4848 = vunpack.c.l.bf16 %v4816
        %v4849 = vunpack.c.l.bf16 %v4817
        %v4850 = vmul.f32 %v4818, %v4784
        %v4851 = vmul.f32 %v4819, %v4784
        %v4852 = vmul.f32 %v4820, %v4784
        %v4853 = vmul.f32 %v4821, %v4784
        %v4854 = vmul.f32 %v4822, %v4784
        %v4855 = vmul.f32 %v4823, %v4784
        %v4856 = vmul.f32 %v4824, %v4784
        %v4857 = vmul.f32 %v4825, %v4784
        %v4858 = vmul.f32 %v4826, %v4784
        %v4859 = vmul.f32 %v4827, %v4784
        %v4860 = vmul.f32 %v4828, %v4784
        %v4861 = vmul.f32 %v4829, %v4784
        %v4862 = vmul.f32 %v4830, %v4784
        %v4863 = vmul.f32 %v4831, %v4784
        %v4864 = vmul.f32 %v4832, %v4784
        %v4865 = vmul.f32 %v4833, %v4784
        %v4866 = vmul.f32 %v4834, %v4784
        %v4867 = vmul.f32 %v4835, %v4784
        %v4868 = vmul.f32 %v4836, %v4784
        %v4869 = vmul.f32 %v4837, %v4784
        %v4870 = vmul.f32 %v4838, %v4784
        %v4871 = vmul.f32 %v4839, %v4784
        %v4872 = vmul.f32 %v4840, %v4784
        %v4873 = vmul.f32 %v4841, %v4784
        %v4874 = vmul.f32 %v4842, %v4784
        %v4875 = vmul.f32 %v4843, %v4784
        %v4876 = vmul.f32 %v4844, %v4784
        %v4877 = vmul.f32 %v4845, %v4784
        %v4878 = vmul.f32 %v4846, %v4784
        %v4879 = vmul.f32 %v4847, %v4784
        %v4880 = vmul.f32 %v4848, %v4784
        %v4881 = vmul.f32 %v4849, %v4784
        %v4882 = vsub.f32 %v4850, %v4785
        %v4883 = vsub.f32 %v4851, %v4785
        %v4884 = vsub.f32 %v4852, %v4785
        %v4885 = vsub.f32 %v4853, %v4785
        %v4886 = vsub.f32 %v4854, %v4785
        %v4887 = vsub.f32 %v4855, %v4785
        %v4888 = vsub.f32 %v4856, %v4785
        %v4889 = vsub.f32 %v4857, %v4785
        %v4890 = vsub.f32 %v4858, %v4785
        %v4891 = vsub.f32 %v4859, %v4785
        %v4892 = vsub.f32 %v4860, %v4785
        %v4893 = vsub.f32 %v4861, %v4785
        %v4894 = vsub.f32 %v4862, %v4785
        %v4895 = vsub.f32 %v4863, %v4785
        %v4896 = vsub.f32 %v4864, %v4785
        %v4897 = vsub.f32 %v4865, %v4785
        %v4898 = vsub.f32 %v4866, %v4785
        %v4899 = vsub.f32 %v4867, %v4785
        %v4900 = vsub.f32 %v4868, %v4785
        %v4901 = vsub.f32 %v4869, %v4785
        %v4902 = vsub.f32 %v4870, %v4785
        %v4903 = vsub.f32 %v4871, %v4785
        %v4904 = vsub.f32 %v4872, %v4785
        %v4905 = vsub.f32 %v4873, %v4785
        %v4906 = vsub.f32 %v4874, %v4785
        %v4907 = vsub.f32 %v4875, %v4785
        %v4908 = vsub.f32 %v4876, %v4785
        %v4909 = vsub.f32 %v4877, %v4785
        %v4910 = vsub.f32 %v4878, %v4785
        %v4911 = vsub.f32 %v4879, %v4785
        %v4912 = vsub.f32 %v4880, %v4785
        %v4913 = vsub.f32 %v4881, %v4785
        %v4914 = vmax.f32 %v4882, 0.0
        %v4915 = vmax.f32 %v4883, 0.0
        %v4916 = vmax.f32 %v4884, 0.0
        %v4917 = vmax.f32 %v4885, 0.0
        %v4918 = vmax.f32 %v4886, 0.0
        %v4919 = vmax.f32 %v4887, 0.0
        %v4920 = vmax.f32 %v4888, 0.0
        %v4921 = vmax.f32 %v4889, 0.0
        %v4922 = vmax.f32 %v4890, 0.0
        %v4923 = vmax.f32 %v4891, 0.0
        %v4924 = vmax.f32 %v4892, 0.0
        %v4925 = vmax.f32 %v4893, 0.0
        %v4926 = vmax.f32 %v4894, 0.0
        %v4927 = vmax.f32 %v4895, 0.0
        %v4928 = vmax.f32 %v4896, 0.0
        %v4929 = vmax.f32 %v4897, 0.0
        %v4930 = vmax.f32 %v4898, 0.0
        %v4931 = vmax.f32 %v4899, 0.0
        %v4932 = vmax.f32 %v4900, 0.0
        %v4933 = vmax.f32 %v4901, 0.0
        %v4934 = vmax.f32 %v4902, 0.0
        %v4935 = vmax.f32 %v4903, 0.0
        %v4936 = vmax.f32 %v4904, 0.0
        %v4937 = vmax.f32 %v4905, 0.0
        %v4938 = vmax.f32 %v4906, 0.0
        %v4939 = vmax.f32 %v4907, 0.0
        %v4940 = vmax.f32 %v4908, 0.0
        %v4941 = vmax.f32 %v4909, 0.0
        %v4942 = vmax.f32 %v4910, 0.0
        %v4943 = vmax.f32 %v4911, 0.0
        %v4944 = vmax.f32 %v4912, 0.0
        %v4945 = vmax.f32 %v4913, 0.0
        %v4946 = vpack.c.bf16 %v4915, %v4914
        %v4947 = vpack.c.bf16 %v4917, %v4916
        %v4948 = vpack.c.bf16 %v4919, %v4918
        %v4949 = vpack.c.bf16 %v4921, %v4920
        %v4950 = vpack.c.bf16 %v4923, %v4922
        %v4951 = vpack.c.bf16 %v4925, %v4924
        %v4952 = vpack.c.bf16 %v4927, %v4926
        %v4953 = vpack.c.bf16 %v4929, %v4928
        %v4954 = vpack.c.bf16 %v4931, %v4930
        %v4955 = vpack.c.bf16 %v4933, %v4932
        %v4956 = vpack.c.bf16 %v4935, %v4934
        %v4957 = vpack.c.bf16 %v4937, %v4936
        %v4958 = vpack.c.bf16 %v4939, %v4938
        %v4959 = vpack.c.bf16 %v4941, %v4940
        %v4960 = vpack.c.bf16 %v4943, %v4942
        %v4961 = vpack.c.bf16 %v4945, %v4944
        %v4978 = vunpack.c.l.b16 %v4946
        %v4979 = vunpack.c.h.b16 %v4946
        %v4980 = vunpack.c.l.b16 %v4947
        %v4981 = vunpack.c.h.b16 %v4947
        %v4982 = vunpack.c.l.b16 %v4948
        %v4983 = vunpack.c.h.b16 %v4948
        %v4984 = vunpack.c.l.b16 %v4949
        %v4985 = vunpack.c.h.b16 %v4949
        %v4986 = vunpack.c.l.b16 %v4950
        %v4987 = vunpack.c.h.b16 %v4950
        %v4988 = vunpack.c.l.b16 %v4951
        %v4989 = vunpack.c.h.b16 %v4951
        %v4990 = vunpack.c.l.b16 %v4952
        %v4991 = vunpack.c.h.b16 %v4952
        %v4992 = vunpack.c.l.b16 %v4953
        %v4993 = vunpack.c.h.b16 %v4953
        %v4994 = vunpack.c.l.b16 %v4954
        %v4995 = vunpack.c.h.b16 %v4954
        %v4996 = vunpack.c.l.b16 %v4955
        %v4997 = vunpack.c.h.b16 %v4955
        %v4998 = vunpack.c.l.b16 %v4956
        %v4999 = vunpack.c.h.b16 %v4956
        %v5000 = vunpack.c.l.b16 %v4957
        %v5001 = vunpack.c.h.b16 %v4957
        %v5002 = vunpack.c.l.b16 %v4958
        %v5003 = vunpack.c.h.b16 %v4958
        %v5004 = vunpack.c.l.b16 %v4959
        %v5005 = vunpack.c.h.b16 %v4959
        %v5006 = vunpack.c.l.b16 %v4960
        %v5007 = vunpack.c.h.b16 %v4960
        %v5008 = vunpack.c.l.b16 %v4961
        %v5009 = vunpack.c.h.b16 %v4961
        %v5010 = vpack.c.b16 %v4978, %v4978
        %v5011 = vpack.c.b16 %v4979, %v4979
        %v5012 = vpack.c.b16 %v4980, %v4980
        %v5013 = vpack.c.b16 %v4981, %v4981
        %v5014 = vpack.c.b16 %v4982, %v4982
        %v5015 = vpack.c.b16 %v4983, %v4983
        %v5016 = vpack.c.b16 %v4984, %v4984
        %v5017 = vpack.c.b16 %v4985, %v4985
        %v5018 = vpack.c.b16 %v4986, %v4986
        %v5019 = vpack.c.b16 %v4987, %v4987
        %v5020 = vpack.c.b16 %v4988, %v4988
        %v5021 = vpack.c.b16 %v4989, %v4989
        %v5022 = vpack.c.b16 %v4990, %v4990
        %v5023 = vpack.c.b16 %v4991, %v4991
        %v5024 = vpack.c.b16 %v4992, %v4992
        %v5025 = vpack.c.b16 %v4993, %v4993
        %v5026 = vpack.c.b16 %v4994, %v4994
        %v5027 = vpack.c.b16 %v4995, %v4995
        %v5028 = vpack.c.b16 %v4996, %v4996
        %v5029 = vpack.c.b16 %v4997, %v4997
        %v5030 = vpack.c.b16 %v4998, %v4998
        %v5031 = vpack.c.b16 %v4999, %v4999
        %v5032 = vpack.c.b16 %v5000, %v5000
        %v5033 = vpack.c.b16 %v5001, %v5001
        %v5034 = vpack.c.b16 %v5002, %v5002
        %v5035 = vpack.c.b16 %v5003, %v5003
        %v5036 = vpack.c.b16 %v5004, %v5004
        %v5037 = vpack.c.b16 %v5005, %v5005
        %v5038 = vpack.c.b16 %v5006, %v5006
        %v5039 = vpack.c.b16 %v5007, %v5007
        %v5040 = vpack.c.b16 %v5008, %v5008
        %v5041 = vpack.c.b16 %v5009, %v5009
        %5074 = vst [vmem:[%s136] sm:$0xf] %v5010
        %5075 = vst [vmem:[%s136 + $0x4] sm:$0xf] %v5011
        %5076 = vst [vmem:[%s136 + $0x8] sm:$0xf] %v5012
        %5077 = vst [vmem:[%s136 + $0xc] sm:$0xf] %v5013
        %5078 = vst [vmem:[%s136 + $0x10] sm:$0xf] %v5014
        %5079 = vst [vmem:[%s136 + $0x14] sm:$0xf] %v5015
        %5080 = vst [vmem:[%s136 + $0x18] sm:$0xf] %v5016
        %5081 = vst [vmem:[%s136 + $0x1c] sm:$0xf] %v5017
        %5082 = vst [vmem:[%s136 + $0x20] sm:$0xf] %v5018
        %5083 = vst [vmem:[%s136 + $0x24] sm:$0xf] %v5019
        %5084 = vst [vmem:[%s136 + $0x28] sm:$0xf] %v5020
        %5085 = vst [vmem:[%s136 + $0x2c] sm:$0xf] %v5021
        %5086 = vst [vmem:[%s136 + $0x30] sm:$0xf] %v5022
        %5087 = vst [vmem:[%s136 + $0x34] sm:$0xf] %v5023
        %5088 = vst [vmem:[%s136 + $0x38] sm:$0xf] %v5024
        %5089 = vst [vmem:[%s136 + $0x3c] sm:$0xf] %v5025
        %5090 = vst [vmem:[%s136 + $0x40] sm:$0xf] %v5026
        %5091 = vst [vmem:[%s136 + $0x44] sm:$0xf] %v5027
        %5092 = vst [vmem:[%s136 + $0x48] sm:$0xf] %v5028
        %5093 = vst [vmem:[%s136 + $0x4c] sm:$0xf] %v5029
        %5094 = vst [vmem:[%s136 + $0x50] sm:$0xf] %v5030
        %5095 = vst [vmem:[%s136 + $0x54] sm:$0xf] %v5031
        %5096 = vst [vmem:[%s136 + $0x58] sm:$0xf] %v5032
        %5097 = vst [vmem:[%s136 + $0x5c] sm:$0xf] %v5033
        %5098 = vst [vmem:[%s136 + $0x60] sm:$0xf] %v5034
        %5099 = vst [vmem:[%s136 + $0x64] sm:$0xf] %v5035
        %5100 = vst [vmem:[%s136 + $0x68] sm:$0xf] %v5036
        %5101 = vst [vmem:[%s136 + $0x6c] sm:$0xf] %v5037
        %5102 = vst [vmem:[%s136 + $0x70] sm:$0xf] %v5038
        %5103 = vst [vmem:[%s136 + $0x74] sm:$0xf] %v5039
        %5104 = vst [vmem:[%s136 + $0x78] sm:$0xf] %v5040
        %5105 = vst [vmem:[%s136 + $0x7c] sm:$0xf] %v5041
        %s5106 = sand.u32 %s71, 1
        %s5107 = scalar_lea.sflag [#allocation3], %s5106
        %s5108 = sand.u32 %s71, 1
        %s5109 = smul.addr %s5108, 128
        %s5110 = scalar_lea.vmem [#allocation2], %s5109
        // Predicated region
        $region29: #{tpu_custom_call.1} parent=27 // pred_check
          %p5111 = pneg %p81
        $region30: #{tpu_custom_call.1} parent=27 // pred_check_branch
          %5113 = sbr.rel (%p5111) target = $region32
        $region31: #{tpu_custom_call.1} parent=27 // pred_region
          %s5115 = ssub.s32 2048, 2048
          %5116 = vsyncadd %s5107, %s5115
          %s5117 = smul.addr %s16, 32
          %s5118 = smul.addr %s5117, 64
          %s5119 = scalar_lea.hbm %s2, %s5118
          %s5120 = sshll.u32 %s5110, 4
          %s5121 = int_to_ptr.vmem [resolvable:$true] %s5120
          %5126 = dma.vmem_to_hbm [thread:$0]  %s5121, 2048, %s5119, %s5107, 64, 64, 4
        $region32: #{tpu_custom_call.1} parent=27 // pred_fallthru
          _
      $region28: #{tpu_custom_call.1} parent=5 // pred_fallthru
        _
      %p5127 = scmp.le.s32.totalorder 2, %s11
      // Predicated region
      $region33: #{tpu_custom_call.1} parent=5 // pred_check
        %p5128 = pneg %p5127
      $region34: #{tpu_custom_call.1} parent=5 // pred_check_branch
        %5130 = sbr.rel (%p5128) target = $region36
      $region35: #{tpu_custom_call.1} parent=5 // pred_region
        %s5131 = ssub.s32 %s11, 2
        // Predicated region
        $region37: #{tpu_custom_call.1} parent=35 // pred_check
          %p5132 = pneg %p87
        $region38: #{tpu_custom_call.1} parent=35 // pred_check_branch
          %5134 = sbr.rel (%p5132) target = $region40
        $region39: #{tpu_custom_call.1} parent=35 // pred_region
          %s5135 = sand.u32 %s72, 1
          %s5136 = scalar_lea.sflag [#allocation3], %s5135
          %s5137 = sand.u32 %s72, 1
          %s5138 = smul.addr %s5137, 128
          %s5139 = scalar_lea.vmem [#allocation2], %s5138
          %5140 = dma.done %s5136, 2048
        $region40: #{tpu_custom_call.1} parent=35 // pred_fallthru
          _
      $region36: #{tpu_custom_call.1} parent=5 // pred_fallthru
        _
    $region6: #{tpu_custom_call.1} parent=1 // loop_footer
      %s15 = sadd.s32 1, %s11
    $region7: #{tpu_custom_call.1} parent=1 // loop_footer_branch
      %10 = sbr.rel target = $region3
    $region8: #{tpu_custom_call.1} parent=1 // loop_exit
      _
    %5141 = vsyncpa [#allocation3], 1
    %s5142 = scalar_lea.sflag [#allocation3], 1
    %5143 = vsyncpa %s5142, 1

</llo_original>
